<compile_context>
chip_gen: v5e
topology: v5e:2x2
jax: 0.10.0
libtpu: 0.0.40
codegen_flags: <defaults>
</compile_context>

<pallas_src>
import numpy as np

import jax
import jax.numpy as jnp
from jax.experimental import pallas as pl
from jax.experimental.pallas import tpu as pltpu


def _round_up(x, m):
    return ((x + m - 1) // m) * m


# ----------------------------------------------------------------------------- kernel
def _attention_stream_kernel(seq_ref,                      # SMEM: [N] valid seq lens
                             hid_ref, enc_ref, wh_ref, we_ref, ba_ref, v_ref,
                             ctx_ref, attn_ref,
                             proj_h_ref, m_ref, l_ref):
    """grid = (stream n, S-tile s).  enc_ref: [B, tS, E_max] bf16 tile.

    ctx_ref  [B, E_max]  : resident accumulator across s (flash-style rescale).
    attn_ref [B, S_pad]  : resident across s; raw scores staged per tile, then
                           normalized to softmax at the last S step.
    """
    n = pl.program_id(0)
    s = pl.program_id(1)
    n_s = pl.num_programs(1)
    B, tS, E = enc_ref.shape
    Hd = wh_ref.shape[1]

    @pl.when(s == 0)
    def _init():
        # Hidden projection with the attention bias folded in; bf16 x bf16 MXU,
        # f32 accumulation.  Computed once per stream.
        proj_h_ref[...] = (
            jnp.dot(hid_ref[...].astype(jnp.bfloat16), wh_ref[...],
                    preferred_element_type=jnp.float32)
            + ba_ref[...])                                    # [B, Hd]
        m_ref[...] = jnp.full_like(m_ref, -jnp.inf)
        l_ref[...] = jnp.zeros_like(l_ref)
        ctx_ref[...] = jnp.zeros_like(ctx_ref)

    enc = enc_ref[...]                                        # [B, tS, E] bf16
    proj_e = jnp.dot(enc.reshape(B * tS, E), we_ref[...],
                     preferred_element_type=jnp.float32).reshape(B, tS, Hd)
    energy = jnp.tanh(proj_e + proj_h_ref[...][:, None, :])   # [B, tS, Hd] f32

    # scores = energy @ v^T   (single row v -> VPU mul + lane reduce).
    # The v-Linear bias bv is dropped: softmax is shift invariant (exact).
    scores = jnp.sum(energy * v_ref[...][None, :, :], axis=-1)        # [B, tS]

    # Mask positions beyond this stream's true sequence length (streams are
    # zero-padded to a common S_pad in the wrapper).
    pos = s * tS + jax.lax.broadcasted_iota(jnp.int32, (B, tS), 1)
    scores = jnp.where(pos < seq_ref[n], scores, -jnp.inf)

    # Stage raw scores into the resident attention output block.
    col0 = pl.multiple_of(s * tS, tS)
    attn_ref[:, pl.ds(col0, tS)] = scores

    # Online-softmax update of the context accumulator.
    m_prev = m_ref[...]                                               # [B, 1]
    m_new = jnp.maximum(m_prev, jnp.max(scores, axis=-1, keepdims=True))
    corr = jnp.exp(m_prev - m_new)
    p = jnp.exp(scores - m_new)                                       # [B, tS]
    l_ref[...] = corr * l_ref[...] + jnp.sum(p, axis=-1, keepdims=True)
    ctx_ref[...] = corr * ctx_ref[...] + jnp.einsum(
        "bqs,bse->bqe", p[:, None, :].astype(jnp.bfloat16), enc,
        preferred_element_type=jnp.float32)[:, 0, :]                  # [B, E]
    m_ref[...] = m_new

    @pl.when(s == n_s - 1)
    def _finalize():
        inv_l = pl.reciprocal(l_ref[...], approx=True)                # [B, 1]
        ctx_ref[...] = ctx_ref[...] * inv_l
        attn_ref[...] = jnp.exp(attn_ref[...] - m_ref[...]) * inv_l


# ----------------------------------------------------------------------------- wrapper
def multiple_attention(hidden, encoder_outputs, params, *, t_s=128):
    num_enc = len(encoder_outputs)
    B, Hd = hidden.shape
    e_sizes = [int(e.shape[-1]) for e in encoder_outputs]
    s_sizes = [int(e.shape[1]) for e in encoder_outputs]

    E_max = int(max(_round_up(e, 128) for e in e_sizes))
    S_max = int(max(s_sizes))
    t_s = int(min(t_s, _round_up(S_max, 128)))
    S_pad = int(_round_up(S_max, t_s))
    n_s = S_pad // t_s

    f32, bf16 = jnp.float32, jnp.bfloat16

    # Stack / zero-pad the per-stream operands to a common shape.  Encoder
    # activations go to bf16 once here (review item).  Zero padding is exact:
    # padded E columns contribute 0 to both matmuls; padded S rows are masked
    # inside the kernel via seq_lens.
    enc_all = jnp.stack([
        jnp.pad(e.astype(bf16), ((0, 0), (0, S_pad - s), (0, E_max - ec)))
        for e, s, ec in zip(encoder_outputs, s_sizes, e_sizes)])   # [N,B,S_pad,E_max]
    wh_all = jnp.stack([w.astype(bf16) for w in params["wh"]])      # [N,Hd,Hd]
    we_all = jnp.stack([
        jnp.pad(w.astype(bf16), ((0, E_max - ec), (0, 0)))
        for w, ec in zip(params["we"], e_sizes)])                   # [N,E_max,Hd]
    ba_all = jnp.stack([b.astype(f32) for b in params["ba"]])       # [N,1,Hd]
    v_all = jnp.stack([v.astype(f32) for v in params["v"]])         # [N,1,Hd]
    seq_lens = jnp.asarray(s_sizes, dtype=jnp.int32)                # [N]
    hidden_f32 = hidden.astype(f32)

    grid = (num_enc, n_s)

    in_specs = [
        pl.BlockSpec((B, Hd), lambda n, s, sl: (0, 0)),                     # hidden
        pl.BlockSpec((None, B, t_s, E_max), lambda n, s, sl: (n, 0, s, 0)),  # enc tile
        pl.BlockSpec((None, Hd, Hd), lambda n, s, sl: (n, 0, 0)),           # wh
        pl.BlockSpec((None, E_max, Hd), lambda n, s, sl: (n, 0, 0)),        # we
        pl.BlockSpec((None, 1, Hd), lambda n, s, sl: (n, 0, 0)),            # ba
        pl.BlockSpec((None, 1, Hd), lambda n, s, sl: (n, 0, 0)),            # v row
    ]
    out_specs = [
        pl.BlockSpec((None, B, E_max), lambda n, s, sl: (n, 0, 0)),   # ctx (resident acc)
        pl.BlockSpec((None, B, S_pad), lambda n, s, sl: (n, 0, 0)),   # attn (resident)
    ]
    out_shape = [
        jax.ShapeDtypeStruct((num_enc, B, E_max), f32),
        jax.ShapeDtypeStruct((num_enc, B, S_pad), f32),
    ]
    scratch_shapes = [
        pltpu.VMEM((B, Hd), f32),   # proj_h (hidden projection + attn bias)
        pltpu.VMEM((B, 1), f32),    # running max
        pltpu.VMEM((B, 1), f32),    # running softmax denominator
    ]

    # Generation-aware scoped-VMEM budget (<= half of physical capacity).
    try:
        vmem_cap = int(getattr(pltpu.get_tpu_info(), "vmem_capacity_bytes",
                               64 << 20))
    except Exception:
        vmem_cap = 64 << 20
    resident = (
        2 * (B * t_s * E_max * 2 + B * Hd * 4 + Hd * Hd * 2
             + E_max * Hd * 2 + 2 * Hd * 4)          # double-buffered inputs
        + 2 * (B * E_max * 4 + B * S_pad * 4)        # resident outputs
        + B * Hd * 4 + 2 * B * 4                     # scratch
        + 4 * B * t_s * Hd * 4)                      # in-kernel intermediates
    vmem_limit = int(min(vmem_cap // 2, max(resident + (4 << 20), 16 << 20)))

    ctx_pad, attn_pad = pl.pallas_call(
        _attention_stream_kernel,
        out_shape=out_shape,
        grid_spec=pltpu.PrefetchScalarGridSpec(
            num_scalar_prefetch=1,
            grid=grid,
            in_specs=in_specs,
            out_specs=out_specs,
            scratch_shapes=scratch_shapes),
        compiler_params=pltpu.CompilerParams(
            dimension_semantics=("parallel", "arbitrary"),
            vmem_limit_bytes=vmem_limit),
    )(seq_lens, hidden_f32, enc_all, wh_all, we_all, ba_all, v_all)

    # Un-pad / assemble in the wrapper (keeps in-kernel stores unmasked).
    ctx = jnp.concatenate(
        [ctx_pad[i, :, :e] for i, e in enumerate(e_sizes)], axis=1)
    attns = [attn_pad[i, :, :s] for i, s in enumerate(s_sizes)]
    return ctx, attns


# ----------------------------------------------------------------------------- params
def init_params(key, enc_hid_sizes, dec_hid):
    """One (attn Linear, v Linear) pair per encoder stream.

    nn.Linear(e_hid + dec_hid, dec_hid) is stored transposed [in, out] and split
    into the hidden part `wh` [dec_hid, dec_hid] and encoder part `we`
    [e_hid, dec_hid]; both are bf16 (weights bf16, f32 MXU accumulation).
    """
    params = {"wh": [], "we": [], "ba": [], "v": [], "bv": []}
    for e_hid in enc_hid_sizes:
        key, k1, k2, k3, k4, k5 = jax.random.split(key, 6)
        s_attn = 1.0 / np.sqrt(e_hid + dec_hid)
        s_v = 1.0 / np.sqrt(dec_hid)
        params["wh"].append(
            (s_attn * jax.random.normal(k1, (dec_hid, dec_hid))).astype(jnp.bfloat16))
        params["we"].append(
            (s_attn * jax.random.normal(k2, (e_hid, dec_hid))).astype(jnp.bfloat16))
        params["ba"].append(
            (s_attn * jax.random.normal(k3, (1, dec_hid))).astype(jnp.float32))
        # nn.Linear(dec_hid, 1): weight row + scalar bias.  bv cancels exactly
        # under the softmax, so the kernel drops it; kept here for faithfulness.
        params["v"].append(
            (s_v * jax.random.normal(k4, (1, dec_hid))).astype(jnp.float32))
        params["bv"].append(
            (s_v * jax.random.normal(k5, (1, 1))).astype(jnp.float32))
    return params


# ----------------------------------------------------------------------------- pure-JAX reference
def reference_multiple_attention(hidden, encoder_outputs, params):
    ctxs, attns = [], []
    for i, enc in enumerate(encoder_outputs):
        wh = params["wh"][i].astype(jnp.float32)
        we = params["we"][i].astype(jnp.float32)
        ba, v, bv = params["ba"][i], params["v"][i], params["bv"][i]
        # torch: tanh(Linear(concat([hidden_rep, enc])))  ==  tanh(h@Wh + enc@We + b)
        energy = jnp.tanh((hidden @ wh)[:, None, :]
                          + jnp.einsum("bse,eh->bsh", enc, we) + ba)
        scores = jnp.einsum("bsh,h->bs", energy, v[0]) + bv[0, 0]
        alpha = jax.nn.softmax(scores, axis=1)
        attns.append(alpha)
        ctxs.append(jnp.einsum("bs,bse->be", alpha, enc))
    return jnp.concatenate(ctxs, axis=1), attns


# ----------------------------------------------------------------------------- main
if __name__ == "__main__":
    # B = 8 sublanes, dec_hid / enc widths multiples of 128 (lane-dense).
    # Two encoder streams with different widths / sequence lengths to exercise
    # the ModuleList semantics; stream 0 has S=96 to exercise the in-kernel
    # sequence-length masking of the padded S axis.
    B, DEC_HID = 8, 128
    ENC_HID_SIZES = (128, 256)
    SEQ_LENS = (96, 256)

    key = jax.random.PRNGKey(0)
    keys = jax.random.split(key, 2 + len(ENC_HID_SIZES))
    kp, kh, kenc = keys[0], keys[1], keys[2:]

    params = init_params(kp, ENC_HID_SIZES, DEC_HID)
    hidden = (0.1 * jax.random.normal(kh, (B, DEC_HID))).astype(jnp.float32)
    encoder_outputs = tuple(
        (0.1 * jax.random.normal(k, (B, S, E))).astype(jnp.float32)
        for k, S, E in zip(kenc, SEQ_LENS, ENC_HID_SIZES))

    ctx, attns = multiple_attention(hidden, encoder_outputs, params)
    jax.block_until_ready((ctx, attns))

    r_ctx, r_attns = reference_multiple_attention(hidden, encoder_outputs, params)
    np.testing.assert_allclose(np.asarray(ctx), np.asarray(r_ctx),
                               rtol=2e-3, atol=2e-3)
    for a, ra in zip(attns, r_attns):
        np.testing.assert_allclose(np.asarray(a), np.asarray(ra),
                                   rtol=2e-3, atol=2e-3)

    print("KERNEL_OK")
</pallas_src>

<mosaic_0001>
module attributes {stable_mosaic.version = 11 : i64} {
  func.func @_attention_stream_kernel(%arg0: i32, %arg1: i32, %arg2: memref<2xi32, #tpu.memory_space<smem>>, %arg3: memref<8x128xf32, #tpu.memory_space<vmem>>, %arg4: memref<1x8x128x256xbf16, #tpu.memory_space<vmem>>, %arg5: memref<1x128x128xbf16, #tpu.memory_space<vmem>>, %arg6: memref<1x256x128xbf16, #tpu.memory_space<vmem>>, %arg7: memref<1x1x128xf32, #tpu.memory_space<vmem>>, %arg8: memref<1x1x128xf32, #tpu.memory_space<vmem>>, %arg9: memref<1x8x256xf32, #tpu.memory_space<vmem>>, %arg10: memref<1x8x256xf32, #tpu.memory_space<vmem>>, %arg11: memref<8x128xf32, #tpu.memory_space<vmem>>, %arg12: memref<8x1xf32, #tpu.memory_space<vmem>>, %arg13: memref<8x1xf32, #tpu.memory_space<vmem>>) attributes {dimension_semantics = [#tpu.dimension_semantics<parallel>, #tpu.dimension_semantics<arbitrary>], iteration_bounds = array<i64: 2, 2>, scalar_prefetch = 1 : i64, scratch_operands = 3 : i64, tpu.core_type = #tpu.core_type<tc>, window_params = [{pipeline_mode = #tpu.pipeline_mode<synchronous>, transform_indices = @transform_0, window_bounds = array<i64: 8, 128>}, {transform_indices = @transform_1, window_bounds = array<i64: 1, 8, 128, 256>}, {transform_indices = @transform_2, window_bounds = array<i64: 1, 128, 128>}, {transform_indices = @transform_3, window_bounds = array<i64: 1, 256, 128>}, {transform_indices = @transform_4, window_bounds = array<i64: 1, 1, 128>}, {transform_indices = @transform_5, window_bounds = array<i64: 1, 1, 128>}, {transform_indices = @transform_6, window_bounds = array<i64: 1, 8, 256>}, {transform_indices = @transform_7, window_bounds = array<i64: 1, 8, 256>}]} {
    %c0_i32 = arith.constant 0 : i32
    %0 = arith.cmpi eq, %arg1, %c0_i32 : i32
    %1 = arith.extui %0 : i1 to i32
    %c0_i32_0 = arith.constant 0 : i32
    %2 = arith.cmpi ne, %1, %c0_i32_0 : i32
    scf.if %2 {
      %c0_35 = arith.constant 0 : index
      %c0_36 = arith.constant 0 : index
      %68 = vector.load %arg3[%c0_35, %c0_36] : memref<8x128xf32, #tpu.memory_space<vmem>>, vector<8x128xf32>
      %69 = arith.truncf %68 : vector<8x128xf32> to vector<8x128xbf16>
      %c0_37 = arith.constant 0 : index
      %c0_38 = arith.constant 0 : index
      %c0_39 = arith.constant 0 : index
      %70 = vector.load %arg5[%c0_37, %c0_38, %c0_39] : memref<1x128x128xbf16, #tpu.memory_space<vmem>>, vector<1x128x128xbf16>
      %71 = vector.shape_cast %70 : vector<1x128x128xbf16> to vector<128x128xbf16>
      %cst_40 = arith.constant dense<0.000000e+00> : vector<8x128xf32>
      %72 = tpu.matmul %69, %71, %cst_40 {dimension_numbers = #tpu.dot_dimension_numbers<[1], [0], [0], [1], [0, 0, 1, 1], [], []>} : vector<8x128xbf16>, vector<128x128xbf16>, vector<8x128xf32> -> vector<8x128xf32>
      %c0_41 = arith.constant 0 : index
      %c0_42 = arith.constant 0 : index
      %c0_43 = arith.constant 0 : index
      %73 = vector.load %arg7[%c0_41, %c0_42, %c0_43] : memref<1x1x128xf32, #tpu.memory_space<vmem>>, vector<1x1x128xf32>
      %74 = vector.shape_cast %73 : vector<1x1x128xf32> to vector<1x128xf32>
      %75 = vector.broadcast %74 : vector<1x128xf32> to vector<8x128xf32>
      %76 = arith.addf %72, %75 : vector<8x128xf32>
      %c0_44 = arith.constant 0 : index
      %c0_45 = arith.constant 0 : index
      %77 = vector.load %arg11[%c0_44, %c0_45] : memref<8x128xf32, #tpu.memory_space<vmem>>, vector<8x128xf32>
      tpu.vector_store %arg11[%c0_44, %c0_45], %76 {strides = array<i32>} : memref<8x128xf32, #tpu.memory_space<vmem>>, vector<8x128xf32>,
      %cst_46 = arith.constant 0xFF800000 : f32
      %78 = vector.broadcast %cst_46 : f32 to vector<8x1xf32>
      %c0_47 = arith.constant 0 : index
      %c0_48 = arith.constant 0 : index
      %79 = vector.load %arg12[%c0_47, %c0_48] : memref<8x1xf32, #tpu.memory_space<vmem>>, vector<8x1xf32>
      tpu.vector_store %arg12[%c0_47, %c0_48], %78 {strides = array<i32>} : memref<8x1xf32, #tpu.memory_space<vmem>>, vector<8x1xf32>,
      %cst_49 = arith.constant 0.000000e+00 : f32
      %80 = vector.broadcast %cst_49 : f32 to vector<8x1xf32>
      %c0_50 = arith.constant 0 : index
      %c0_51 = arith.constant 0 : index
      %81 = vector.load %arg13[%c0_50, %c0_51] : memref<8x1xf32, #tpu.memory_space<vmem>>, vector<8x1xf32>
      tpu.vector_store %arg13[%c0_50, %c0_51], %80 {strides = array<i32>} : memref<8x1xf32, #tpu.memory_space<vmem>>, vector<8x1xf32>,
      %cst_52 = arith.constant 0.000000e+00 : f32
      %82 = vector.broadcast %cst_52 : f32 to vector<8x256xf32>
      %c0_53 = arith.constant 0 : index
      %c0_54 = arith.constant 0 : index
      %c0_55 = arith.constant 0 : index
      %83 = vector.load %arg9[%c0_53, %c0_54, %c0_55] : memref<1x8x256xf32, #tpu.memory_space<vmem>>, vector<1x8x256xf32>
      %84 = vector.shape_cast %83 : vector<1x8x256xf32> to vector<8x256xf32>
      %85 = vector.shape_cast %82 : vector<8x256xf32> to vector<1x8x256xf32>
      tpu.vector_store %arg9[%c0_53, %c0_54, %c0_55], %85 {strides = array<i32>} : memref<1x8x256xf32, #tpu.memory_space<vmem>>, vector<1x8x256xf32>,
    } else {
    }
    %c0 = arith.constant 0 : index
    %c0_1 = arith.constant 0 : index
    %c0_2 = arith.constant 0 : index
    %c0_3 = arith.constant 0 : index
    %3 = vector.load %arg4[%c0, %c0_1, %c0_2, %c0_3] : memref<1x8x128x256xbf16, #tpu.memory_space<vmem>>, vector<1x8x128x256xbf16>
    %4 = vector.shape_cast %3 : vector<1x8x128x256xbf16> to vector<8x128x256xbf16>
    %5 = vector.shape_cast %4 : vector<8x128x256xbf16> to vector<1024x256xbf16>
    %c0_4 = arith.constant 0 : index
    %c0_5 = arith.constant 0 : index
    %c0_6 = arith.constant 0 : index
    %6 = vector.load %arg6[%c0_4, %c0_5, %c0_6] : memref<1x256x128xbf16, #tpu.memory_space<vmem>>, vector<1x256x128xbf16>
    %7 = vector.shape_cast %6 : vector<1x256x128xbf16> to vector<256x128xbf16>
    %cst = arith.constant dense<0.000000e+00> : vector<1024x128xf32>
    %8 = tpu.matmul %5, %7, %cst {dimension_numbers = #tpu.dot_dimension_numbers<[1], [0], [0], [1], [0, 0, 1, 1], [], []>} : vector<1024x256xbf16>, vector<256x128xbf16>, vector<1024x128xf32> -> vector<1024x128xf32>
    %9 = vector.shape_cast %8 : vector<1024x128xf32> to vector<8x128x128xf32>
    %c0_7 = arith.constant 0 : index
    %c0_8 = arith.constant 0 : index
    %10 = vector.load %arg11[%c0_7, %c0_8] : memref<8x128xf32, #tpu.memory_space<vmem>>, vector<8x128xf32>
    %11 = vector.shape_cast %10 : vector<8x128xf32> to vector<8x1x128xf32>
    %12 = vector.broadcast %11 : vector<8x1x128xf32> to vector<8x128x128xf32>
    %13 = arith.addf %9, %12 : vector<8x128x128xf32>
    %14 = math.tanh %13 : vector<8x128x128xf32>
    %c0_9 = arith.constant 0 : index
    %c0_10 = arith.constant 0 : index
    %c0_11 = arith.constant 0 : index
    %15 = vector.load %arg8[%c0_9, %c0_10, %c0_11] : memref<1x1x128xf32, #tpu.memory_space<vmem>>, vector<1x1x128xf32>
    %16 = vector.shape_cast %15 : vector<1x1x128xf32> to vector<1x128xf32>
    %17 = vector.shape_cast %16 : vector<1x128xf32> to vector<1x1x128xf32>
    %18 = vector.broadcast %17 : vector<1x1x128xf32> to vector<8x128x128xf32>
    %19 = arith.mulf %14, %18 : vector<8x128x128xf32>
    %cst_12 = arith.constant dense<0.000000e+00> : vector<8x128xf32>
    %20 = vector.multi_reduction <add>, %19, %cst_12 [2] : vector<8x128x128xf32> to vector<8x128xf32>
    %c128_i32 = arith.constant 128 : i32
    %21 = arith.muli %arg1, %c128_i32 : i32
    %22 = tpu.iota {dimensions = array<i32: 1>} : vector<8x128xi32>
    %23 = vector.broadcast %21 : i32 to vector<8x128xi32>
    %24 = arith.addi %23, %22 : vector<8x128xi32>
    %25 = arith.index_cast %arg0 : i32 to index
    %26 = memref.load %arg2[%25] : memref<2xi32, #tpu.memory_space<smem>>
    %27 = vector.broadcast %26 : i32 to vector<8x128xi32>
    %28 = arith.cmpi slt, %24, %27 : vector<8x128xi32>
    %cst_13 = arith.constant 0xFF800000 : f32
    %29 = vector.broadcast %cst_13 : f32 to vector<8x128xf32>
    %30 = arith.select %28, %20, %29 : vector<8x128xi1>, vector<8x128xf32>
    %c128_i32_14 = arith.constant 128 : i32
    %31 = arith.muli %arg1, %c128_i32_14 : i32
    %32 = tpu.assume_multiple %31, 128 : i32
    %c0_15 = arith.constant 0 : index
    %c0_16 = arith.constant 0 : index
    %33 = arith.index_cast %32 : i32 to index
    %34 = vector.load %arg10[%c0_15, %c0_16, %33] : memref<1x8x256xf32, #tpu.memory_space<vmem>>, vector<1x8x128xf32>
    %35 = vector.shape_cast %34 : vector<1x8x128xf32> to vector<8x128xf32>
    %36 = vector.shape_cast %30 : vector<8x128xf32> to vector<1x8x128xf32>
    tpu.vector_store %arg10[%c0_15, %c0_16, %33], %36 {strides = array<i32>} : memref<1x8x256xf32, #tpu.memory_space<vmem>>, vector<1x8x128xf32>,
    %c0_17 = arith.constant 0 : index
    %c0_18 = arith.constant 0 : index
    %37 = vector.load %arg12[%c0_17, %c0_18] : memref<8x1xf32, #tpu.memory_space<vmem>>, vector<8x1xf32>
    %cst_19 = arith.constant dense<0xFF800000> : vector<8xf32>
    %38 = vector.multi_reduction <maximumf>, %30, %cst_19 [1] : vector<8x128xf32> to vector<8xf32>
    %39 = vector.shape_cast %38 : vector<8xf32> to vector<8x1xf32>
    %40 = arith.maximumf %37, %39 : vector<8x1xf32>
    %41 = arith.subf %37, %40 : vector<8x1xf32>
    %42 = math.exp %41 : vector<8x1xf32>
    %43 = vector.broadcast %40 : vector<8x1xf32> to vector<8x128xf32>
    %44 = arith.subf %30, %43 : vector<8x128xf32>
    %45 = math.exp %44 : vector<8x128xf32>
    %c0_20 = arith.constant 0 : index
    %c0_21 = arith.constant 0 : index
    %46 = vector.load %arg13[%c0_20, %c0_21] : memref<8x1xf32, #tpu.memory_space<vmem>>, vector<8x1xf32>
    %47 = arith.mulf %42, %46 : vector<8x1xf32>
    %cst_22 = arith.constant dense<0.000000e+00> : vector<8xf32>
    %48 = vector.multi_reduction <add>, %45, %cst_22 [1] : vector<8x128xf32> to vector<8xf32>
    %49 = vector.shape_cast %48 : vector<8xf32> to vector<8x1xf32>
    %50 = arith.addf %47, %49 : vector<8x1xf32>
    %c0_23 = arith.constant 0 : index
    %c0_24 = arith.constant 0 : index
    %51 = vector.load %arg13[%c0_23, %c0_24] : memref<8x1xf32, #tpu.memory_space<vmem>>, vector<8x1xf32>
    tpu.vector_store %arg13[%c0_23, %c0_24], %50 {strides = array<i32>} : memref<8x1xf32, #tpu.memory_space<vmem>>, vector<8x1xf32>,
    %c0_25 = arith.constant 0 : index
    %c0_26 = arith.constant 0 : index
    %c0_27 = arith.constant 0 : index
    %52 = vector.load %arg9[%c0_25, %c0_26, %c0_27] : memref<1x8x256xf32, #tpu.memory_space<vmem>>, vector<1x8x256xf32>
    %53 = vector.shape_cast %52 : vector<1x8x256xf32> to vector<8x256xf32>
    %54 = vector.broadcast %42 : vector<8x1xf32> to vector<8x256xf32>
    %55 = arith.mulf %54, %53 : vector<8x256xf32>
    %56 = vector.shape_cast %45 : vector<8x128xf32> to vector<8x1x128xf32>
    %57 = arith.truncf %56 : vector<8x1x128xf32> to vector<8x1x128xbf16>
    "tpu.trace_start"() <{level = 10 : i32, message = "bqs,bse->bqe"}> : () -> ()
    %cst_28 = arith.constant dense<0.000000e+00> : vector<8x1x256xf32>
    %58 = tpu.matmul %57, %4, %cst_28 {dimension_numbers = #tpu.dot_dimension_numbers<[2], [1], [1], [2], [0, 0, 0, 1, 1, 2], [0], [0]>} : vector<8x1x128xbf16>, vector<8x128x256xbf16>, vector<8x1x256xf32> -> vector<8x1x256xf32>
    "tpu.trace_stop"() : () -> ()
    %59 = vector.shape_cast %58 : vector<8x1x256xf32> to vector<8x256xf32>
    %60 = arith.addf %55, %59 : vector<8x256xf32>
    %c0_29 = arith.constant 0 : index
    %c0_30 = arith.constant 0 : index
    %c0_31 = arith.constant 0 : index
    %61 = vector.load %arg9[%c0_29, %c0_30, %c0_31] : memref<1x8x256xf32, #tpu.memory_space<vmem>>, vector<1x8x256xf32>
    %62 = vector.shape_cast %61 : vector<1x8x256xf32> to vector<8x256xf32>
    %63 = vector.shape_cast %60 : vector<8x256xf32> to vector<1x8x256xf32>
    tpu.vector_store %arg9[%c0_29, %c0_30, %c0_31], %63 {strides = array<i32>} : memref<1x8x256xf32, #tpu.memory_space<vmem>>, vector<1x8x256xf32>,
    %c0_32 = arith.constant 0 : index
    %c0_33 = arith.constant 0 : index
    %64 = vector.load %arg12[%c0_32, %c0_33] : memref<8x1xf32, #tpu.memory_space<vmem>>, vector<8x1xf32>
    tpu.vector_store %arg12[%c0_32, %c0_33], %40 {strides = array<i32>} : memref<8x1xf32, #tpu.memory_space<vmem>>, vector<8x1xf32>,
    %c1_i32 = arith.constant 1 : i32
    %65 = arith.cmpi eq, %arg1, %c1_i32 : i32
    %66 = arith.extui %65 : i1 to i32
    %c0_i32_34 = arith.constant 0 : i32
    %67 = arith.cmpi ne, %66, %c0_i32_34 : i32
    scf.if %67 {
      %c0_35 = arith.constant 0 : index
      %c0_36 = arith.constant 0 : index
      %68 = vector.load %arg13[%c0_35, %c0_36] : memref<8x1xf32, #tpu.memory_space<vmem>>, vector<8x1xf32>
      %69 = tpu.reciprocal %68 {approx = true} : vector<8x1xf32> -> vector<8x1xf32>
      %c0_37 = arith.constant 0 : index
      %c0_38 = arith.constant 0 : index
      %c0_39 = arith.constant 0 : index
      %70 = vector.load %arg9[%c0_37, %c0_38, %c0_39] : memref<1x8x256xf32, #tpu.memory_space<vmem>>, vector<1x8x256xf32>
      %71 = vector.shape_cast %70 : vector<1x8x256xf32> to vector<8x256xf32>
      %72 = vector.broadcast %69 : vector<8x1xf32> to vector<8x256xf32>
      %73 = arith.mulf %71, %72 : vector<8x256xf32>
      %c0_40 = arith.constant 0 : index
      %c0_41 = arith.constant 0 : index
      %c0_42 = arith.constant 0 : index
      %74 = vector.load %arg9[%c0_40, %c0_41, %c0_42] : memref<1x8x256xf32, #tpu.memory_space<vmem>>, vector<1x8x256xf32>
      %75 = vector.shape_cast %74 : vector<1x8x256xf32> to vector<8x256xf32>
      %76 = vector.shape_cast %73 : vector<8x256xf32> to vector<1x8x256xf32>
      tpu.vector_store %arg9[%c0_40, %c0_41, %c0_42], %76 {strides = array<i32>} : memref<1x8x256xf32, #tpu.memory_space<vmem>>, vector<1x8x256xf32>,
      %c0_43 = arith.constant 0 : index
      %c0_44 = arith.constant 0 : index
      %c0_45 = arith.constant 0 : index
      %77 = vector.load %arg10[%c0_43, %c0_44, %c0_45] : memref<1x8x256xf32, #tpu.memory_space<vmem>>, vector<1x8x256xf32>
      %78 = vector.shape_cast %77 : vector<1x8x256xf32> to vector<8x256xf32>
      %c0_46 = arith.constant 0 : index
      %c0_47 = arith.constant 0 : index
      %79 = vector.load %arg12[%c0_46, %c0_47] : memref<8x1xf32, #tpu.memory_space<vmem>>, vector<8x1xf32>
      %80 = vector.broadcast %79 : vector<8x1xf32> to vector<8x256xf32>
      %81 = arith.subf %78, %80 : vector<8x256xf32>
      %82 = math.exp %81 : vector<8x256xf32>
      %83 = vector.broadcast %69 : vector<8x1xf32> to vector<8x256xf32>
      %84 = arith.mulf %82, %83 : vector<8x256xf32>
      %c0_48 = arith.constant 0 : index
      %c0_49 = arith.constant 0 : index
      %c0_50 = arith.constant 0 : index
      %85 = vector.load %arg10[%c0_48, %c0_49, %c0_50] : memref<1x8x256xf32, #tpu.memory_space<vmem>>, vector<1x8x256xf32>
      %86 = vector.shape_cast %85 : vector<1x8x256xf32> to vector<8x256xf32>
      %87 = vector.shape_cast %84 : vector<8x256xf32> to vector<1x8x256xf32>
      tpu.vector_store %arg10[%c0_48, %c0_49, %c0_50], %87 {strides = array<i32>} : memref<1x8x256xf32, #tpu.memory_space<vmem>>, vector<1x8x256xf32>,
    } else {
    }
    return
  }
  func.func @transform_0(%arg0: i32, %arg1: i32, %arg2: memref<2xi32, #tpu.memory_space<smem>>) -> (i32, i32) {
    %c0_i32 = arith.constant 0 : i32
    %c0_i32_0 = arith.constant 0 : i32
    %c0_i32_1 = arith.constant 0 : i32
    return %c0_i32, %c0_i32_0 : i32, i32
  }
  func.func @transform_1(%arg0: i32, %arg1: i32, %arg2: memref<2xi32, #tpu.memory_space<smem>>) -> (i32, i32, i32, i32) {
    %c0_i32 = arith.constant 0 : i32
    %c0_i32_0 = arith.constant 0 : i32
    %c0_i32_1 = arith.constant 0 : i32
    return %arg0, %c0_i32, %arg1, %c0_i32_0 : i32, i32, i32, i32
  }
  func.func @transform_2(%arg0: i32, %arg1: i32, %arg2: memref<2xi32, #tpu.memory_space<smem>>) -> (i32, i32, i32) {
    %c0_i32 = arith.constant 0 : i32
    %c0_i32_0 = arith.constant 0 : i32
    %c0_i32_1 = arith.constant 0 : i32
    return %arg0, %c0_i32, %c0_i32_0 : i32, i32, i32
  }
  func.func @transform_3(%arg0: i32, %arg1: i32, %arg2: memref<2xi32, #tpu.memory_space<smem>>) -> (i32, i32, i32) {
    %c0_i32 = arith.constant 0 : i32
    %c0_i32_0 = arith.constant 0 : i32
    %c0_i32_1 = arith.constant 0 : i32
    return %arg0, %c0_i32, %c0_i32_0 : i32, i32, i32
  }
  func.func @transform_4(%arg0: i32, %arg1: i32, %arg2: memref<2xi32, #tpu.memory_space<smem>>) -> (i32, i32, i32) {
    %c0_i32 = arith.constant 0 : i32
    %c0_i32_0 = arith.constant 0 : i32
    %c0_i32_1 = arith.constant 0 : i32
    return %arg0, %c0_i32, %c0_i32_0 : i32, i32, i32
  }
  func.func @transform_5(%arg0: i32, %arg1: i32, %arg2: memref<2xi32, #tpu.memory_space<smem>>) -> (i32, i32, i32) {
    %c0_i32 = arith.constant 0 : i32
    %c0_i32_0 = arith.constant 0 : i32
    %c0_i32_1 = arith.constant 0 : i32
    return %arg0, %c0_i32, %c0_i32_0 : i32, i32, i32
  }
  func.func @transform_6(%arg0: i32, %arg1: i32, %arg2: memref<2xi32, #tpu.memory_space<smem>>) -> (i32, i32, i32) {
    %c0_i32 = arith.constant 0 : i32
    %c0_i32_0 = arith.constant 0 : i32
    %c0_i32_1 = arith.constant 0 : i32
    return %arg0, %c0_i32, %c0_i32_0 : i32, i32, i32
  }
  func.func @transform_7(%arg0: i32, %arg1: i32, %arg2: memref<2xi32, #tpu.memory_space<smem>>) -> (i32, i32, i32) {
    %c0_i32 = arith.constant 0 : i32
    %c0_i32_0 = arith.constant 0 : i32
    %c0_i32_1 = arith.constant 0 : i32
    return %arg0, %c0_i32, %c0_i32_0 : i32, i32, i32
  }
}

</mosaic_0001>

<llo_original>
// kernel: tpu_custom_call.1
$region0: #{tpu_custom_call.1}
  #allocation0 [shape = 'u32[]', space=smem, size = 0x4, offset = 0x4, fixed_abs, tag = 'smem constant byte address 0x4 - core index']
  #allocation1 [shape = 'u32[72,128]{1,0:T(1,128)}', space=vmem, size = 0x9000, scoped, tag = 'internal scratch']
  #allocation2 [shape = 'f32[8,128]{1,0:T(8,128)}', space=vmem, size = 0x1000, scoped, tag = 'scratch operand']
  #allocation3 [shape = 'f32[8,1]{1,0:T(8,128)}', space=vmem, size = 0x1000, scoped, tag = 'scratch operand']
  #allocation4 [shape = 'f32[8,1]{1,0:T(8,128)}', space=vmem, size = 0x1000, scoped, tag = 'scratch operand']
  #allocation5 [shape = 's32[1]{0}', space=sflag, size = 0x4, scoped, tag = 'scoped memory for tpu_custom_call.1']
  #allocation6 [shape = 'u8[512]{0}', space=smem, size = 0x200, scoped, tag = 'prefetched SMEM operand 0']
  #allocation21 [shape = 's32[]', space=sflag, size = 0x4, offset = 0, fixed_abs, tag = 'sflag constant byte address 0x0 - dummy sync flag']
  %s0 = inlined_call_operand.hbm [shape: s32[2], index: 0, kind: input, shape index: {}]
  %s1 = inlined_call_operand.hbm [shape: f32[8,128], index: 1, kind: input, shape index: {}]
  %s2 = inlined_call_operand.hbm [shape: bf16[2,8,256,256], index: 2, kind: input, shape index: {}]
  %s3 = inlined_call_operand.hbm [shape: bf16[2,128,128], index: 3, kind: input, shape index: {}]
  %s4 = inlined_call_operand.hbm [shape: bf16[2,256,128], index: 4, kind: input, shape index: {}]
  %s5 = inlined_call_operand.hbm [shape: f32[2,1,128], index: 5, kind: input, shape index: {}]
  %s6 = inlined_call_operand.hbm [shape: f32[2,1,128], index: 6, kind: input, shape index: {}]
  %s7 = inlined_call_operand.hbm [shape: f32[2,8,256], index: 7, kind: output, shape index: {0}]
  %s8 = inlined_call_operand.hbm [shape: f32[2,8,256], index: 8, kind: output, shape index: {1}]
  %9 = xla_tuple %s7, %s8
  %s10 = sld [smem:[#allocation0]]
  $region97: #{tpu_custom_call.1} parent=0
    _
  %s12 = ssub.s32 1, %s10
  %s13 = scalar_select 0, %s12, %s10
  %s15 = sshll.u32 %s0, 4
  %s16 = int_to_ptr.hbm [resolvable:$true] %s15
  %18 = dma.hbm_to_smem %s16, 16, [#allocation6], [#allocation5]
  %20 = dma.done [#allocation5], 16
  %21 = sfence
  $region1: #{tpu_custom_call.1} parent=0
    #allocation7 [shape = 'u8[4096]{0}', space=vmem, size = 0x1000, scoped, tag = 'input window, operand 1, single buffered']
    #allocation8 [shape = 's32[2]{0}', space=sflag, size = 0x8, scoped, tag = 'scoped memory for tpu_custom_call.1']
    #allocation9 [shape = 's32[2]{0}', space=sflag, size = 0x8, scoped, tag = 'scoped memory for tpu_custom_call.1']
    #allocation10 [shape = 'u8[1048576]{0}', space=vmem, size = 0x100000, scoped, tag = 'input window, operand 2']
    #allocation11 [shape = 's32[2]{0}', space=sflag, size = 0x8, scoped, tag = 'scoped memory for tpu_custom_call.1']
    #allocation12 [shape = 'u8[65536]{0}', space=vmem, size = 0x10000, scoped, tag = 'input window, operand 3']
    #allocation13 [shape = 'u8[131072]{0}', space=vmem, size = 0x20000, scoped, tag = 'input window, operand 4']
    #allocation14 [shape = 's32[2]{0}', space=sflag, size = 0x8, scoped, tag = 'scoped memory for tpu_custom_call.1']
    #allocation15 [shape = 'u8[1024]{0}', space=vmem, size = 0x400, scoped, tag = 'input window, operand 5']
    #allocation16 [shape = 'u8[1024]{0}', space=vmem, size = 0x400, scoped, tag = 'input window, operand 6']
    #allocation17 [shape = 's32[2]{0}', space=sflag, size = 0x8, scoped, tag = 'scoped memory for tpu_custom_call.1']
    #allocation18 [shape = 'u8[16384]{0}', space=vmem, size = 0x4000, scoped, tag = 'output window, operand 0']
    #allocation19 [shape = 'u8[16384]{0}', space=vmem, size = 0x4000, scoped, tag = 'output window, operand 1']
    #allocation20 [shape = 's32[2]{0}', space=sflag, size = 0x8, scoped, tag = 'scoped memory for tpu_custom_call.1']
    %22 = vsyncpa [#allocation8], 0
    %23 = vsyncpa [#allocation11], 0
    %s24 = scalar_lea.sflag [#allocation11], 1
    %25 = vsyncpa %s24, 0
    %26 = vsyncpa [#allocation14], 0
    %s27 = scalar_lea.sflag [#allocation14], 1
    %28 = vsyncpa %s27, 0
    %29 = vsyncpa [#allocation17], 0
    %s30 = scalar_lea.sflag [#allocation17], 1
    %31 = vsyncpa %s30, 0
    %32 = vsyncpa [#allocation9], 0
    %s33 = scalar_lea.sflag [#allocation9], 1
    %34 = vsyncpa %s33, 0
    %35 = vsyncpa [#allocation20], 0
    %s36 = scalar_lea.sflag [#allocation20], 1
    %37 = vsyncpa %s36, 0
    loop: start=0, step=1, limit=6
    $region2: #{tpu_custom_call.1} parent=1 // loop_pre_header
      _
    $region3: #{tpu_custom_call.1} parent=1 // loop_header
      %s39 = sphi 0, %s43
      %p40 = scmp.ge.s32.totalorder %s39, 6
      %s46 = sphi 0, %s58
      %s47 = sphi 0, %s54
      %s48 = sphi 0, %s46
      %s49 = sphi 0, %s47
      %s50 = sphi 0, %s48
      %s51 = sphi 0, %s49
      %s59 = sphi 0, %s59
      %s61 = sphi 0, %s59
      %s62 = sphi 0, %s61
      %s76 = sphi 0, %s62
      %s84 = sphi 0, %s86
      %s87 = sphi 0, %s84
      %s88 = sphi 0, %s87
      %s104 = sphi 0, %s88
      %s110 = sphi 0, %s112
      %s113 = sphi 0, %s110
      %s114 = sphi 0, %s113
      %s130 = sphi 0, %s114
      %s136 = sphi 0, %s138
      %s139 = sphi 0, %s136
      %s140 = sphi 0, %s139
      %s156 = sphi 0, %s140
      %s162 = sphi 0, %s164
      %s165 = sphi 0, %s162
      %s166 = sphi 0, %s165
      %s182 = sphi 0, %s166
      %s188 = sphi 0, %s190
      %s191 = sphi 0, %s188
      %s192 = sphi 0, %s191
      %s208 = sphi 0, %s192
      %s214 = sphi 0, %s216
      %s217 = sphi 0, %s214
      %s218 = sphi 0, %s217
      %s234 = sphi 0, %s218
      %s240 = sphi 0, %s242
      %s243 = sphi 0, %s240
      %s244 = sphi 0, %s243
      %s260 = sphi 0, %s244
    $region4: #{tpu_custom_call.1} parent=1 // loop_header_branch
      %42 = sbr.rel (%p40) target = $region8
    $region5: #{tpu_custom_call.1} parent=1 // loop_body
      %s44 = ssub.s32 %s39, 1
      %s45 = ssub.s32 %s39, 2
      %s52 = sadd.s32 1, %s47
      %p53 = scmp.ge.s32.totalorder %s52, 2
      %s54 = scalar_select %p53, 0, %s52
      %s55 = sadd.s32 1, %s46
      %s56 = scalar_select %p53, %s55, %s46
      %p57 = scmp.ge.s32.totalorder %s56, 2
      %s58 = scalar_select %p57, 0, %s56
      %s60 = sadd.s32 %s59, 1
      %p63 = scmp.eq.s32.totalorder %s39, 3
      %p64 = scmp.ne.s32.totalorder %s59, %s61
      %p65 = scmp.eq.s32.totalorder %s39, 0
      %p66 = por %p64, %p65
      %p67 = scmp.ne.s32.totalorder %s59, %s61
      %p68 = scmp.eq.s32.totalorder %s44, 3
      %p69 = por %p67, %p68
      %p70 = scmp.ne.s32.totalorder %s61, %s62
      %p71 = scmp.eq.s32.totalorder %s44, 0
      %p72 = por %p70, %p71
      %p73 = scmp.ne.s32.totalorder %s61, %s62
      %p74 = scmp.eq.s32.totalorder %s45, 3
      %p75 = por %p73, %p74
      %p77 = scmp.ne.s32.totalorder %s62, %s76
      %p78 = scmp.eq.s32.totalorder %s45, 0
      %p79 = por %p77, %p78
      %s80 = ssub.s32 %s46, %s58
      %s81 = ssub.s32 %s47, %s54
      %s82 = sor.u32 %s80, %s81
      %p83 = scmp.eq.s32.totalorder %s82, 0
      %s85 = sadd.s32 %s84, 1
      %s86 = scalar_select %p83, %s84, %s85
      %p89 = pneg %p83
      %p90 = scmp.eq.s32.totalorder %s39, 3
      %p91 = por %p89, %p90
      %p92 = scmp.ne.s32.totalorder %s84, %s87
      %p93 = scmp.eq.s32.totalorder %s39, 0
      %p94 = por %p92, %p93
      %p95 = scmp.ne.s32.totalorder %s84, %s87
      %p96 = scmp.eq.s32.totalorder %s44, 3
      %p97 = por %p95, %p96
      %p98 = scmp.ne.s32.totalorder %s87, %s88
      %p99 = scmp.eq.s32.totalorder %s44, 0
      %p100 = por %p98, %p99
      %p101 = scmp.ne.s32.totalorder %s87, %s88
      %p102 = scmp.eq.s32.totalorder %s45, 3
      %p103 = por %p101, %p102
      %p105 = scmp.ne.s32.totalorder %s88, %s104
      %p106 = scmp.eq.s32.totalorder %s45, 0
      %p107 = por %p105, %p106
      %s108 = ssub.s32 %s46, %s58
      %p109 = scmp.eq.s32.totalorder %s108, 0
      %s111 = sadd.s32 %s110, 1
      %s112 = scalar_select %p109, %s110, %s111
      %p115 = pneg %p109
      %p116 = scmp.eq.s32.totalorder %s39, 3
      %p117 = por %p115, %p116
      %p118 = scmp.ne.s32.totalorder %s110, %s113
      %p119 = scmp.eq.s32.totalorder %s39, 0
      %p120 = por %p118, %p119
      %p121 = scmp.ne.s32.totalorder %s110, %s113
      %p122 = scmp.eq.s32.totalorder %s44, 3
      %p123 = por %p121, %p122
      %p124 = scmp.ne.s32.totalorder %s113, %s114
      %p125 = scmp.eq.s32.totalorder %s44, 0
      %p126 = por %p124, %p125
      %p127 = scmp.ne.s32.totalorder %s113, %s114
      %p128 = scmp.eq.s32.totalorder %s45, 3
      %p129 = por %p127, %p128
      %p131 = scmp.ne.s32.totalorder %s114, %s130
      %p132 = scmp.eq.s32.totalorder %s45, 0
      %p133 = por %p131, %p132
      %s134 = ssub.s32 %s46, %s58
      %p135 = scmp.eq.s32.totalorder %s134, 0
      %s137 = sadd.s32 %s136, 1
      %s138 = scalar_select %p135, %s136, %s137
      %p141 = pneg %p135
      %p142 = scmp.eq.s32.totalorder %s39, 3
      %p143 = por %p141, %p142
      %p144 = scmp.ne.s32.totalorder %s136, %s139
      %p145 = scmp.eq.s32.totalorder %s39, 0
      %p146 = por %p144, %p145
      %p147 = scmp.ne.s32.totalorder %s136, %s139
      %p148 = scmp.eq.s32.totalorder %s44, 3
      %p149 = por %p147, %p148
      %p150 = scmp.ne.s32.totalorder %s139, %s140
      %p151 = scmp.eq.s32.totalorder %s44, 0
      %p152 = por %p150, %p151
      %p153 = scmp.ne.s32.totalorder %s139, %s140
      %p154 = scmp.eq.s32.totalorder %s45, 3
      %p155 = por %p153, %p154
      %p157 = scmp.ne.s32.totalorder %s140, %s156
      %p158 = scmp.eq.s32.totalorder %s45, 0
      %p159 = por %p157, %p158
      %s160 = ssub.s32 %s46, %s58
      %p161 = scmp.eq.s32.totalorder %s160, 0
      %s163 = sadd.s32 %s162, 1
      %s164 = scalar_select %p161, %s162, %s163
      %p167 = pneg %p161
      %p168 = scmp.eq.s32.totalorder %s39, 3
      %p169 = por %p167, %p168
      %p170 = scmp.ne.s32.totalorder %s162, %s165
      %p171 = scmp.eq.s32.totalorder %s39, 0
      %p172 = por %p170, %p171
      %p173 = scmp.ne.s32.totalorder %s162, %s165
      %p174 = scmp.eq.s32.totalorder %s44, 3
      %p175 = por %p173, %p174
      %p176 = scmp.ne.s32.totalorder %s165, %s166
      %p177 = scmp.eq.s32.totalorder %s44, 0
      %p178 = por %p176, %p177
      %p179 = scmp.ne.s32.totalorder %s165, %s166
      %p180 = scmp.eq.s32.totalorder %s45, 3
      %p181 = por %p179, %p180
      %p183 = scmp.ne.s32.totalorder %s166, %s182
      %p184 = scmp.eq.s32.totalorder %s45, 0
      %p185 = por %p183, %p184
      %s186 = ssub.s32 %s46, %s58
      %p187 = scmp.eq.s32.totalorder %s186, 0
      %s189 = sadd.s32 %s188, 1
      %s190 = scalar_select %p187, %s188, %s189
      %p193 = pneg %p187
      %p194 = scmp.eq.s32.totalorder %s39, 3
      %p195 = por %p193, %p194
      %p196 = scmp.ne.s32.totalorder %s188, %s191
      %p197 = scmp.eq.s32.totalorder %s39, 0
      %p198 = por %p196, %p197
      %p199 = scmp.ne.s32.totalorder %s188, %s191
      %p200 = scmp.eq.s32.totalorder %s44, 3
      %p201 = por %p199, %p200
      %p202 = scmp.ne.s32.totalorder %s191, %s192
      %p203 = scmp.eq.s32.totalorder %s44, 0
      %p204 = por %p202, %p203
      %p205 = scmp.ne.s32.totalorder %s191, %s192
      %p206 = scmp.eq.s32.totalorder %s45, 3
      %p207 = por %p205, %p206
      %p209 = scmp.ne.s32.totalorder %s192, %s208
      %p210 = scmp.eq.s32.totalorder %s45, 0
      %p211 = por %p209, %p210
      %s212 = ssub.s32 %s46, %s58
      %p213 = scmp.eq.s32.totalorder %s212, 0
      %s215 = sadd.s32 %s214, 1
      %s216 = scalar_select %p213, %s214, %s215
      %p219 = pneg %p213
      %p220 = scmp.eq.s32.totalorder %s39, 3
      %p221 = por %p219, %p220
      %p222 = scmp.ne.s32.totalorder %s214, %s217
      %p223 = scmp.eq.s32.totalorder %s39, 0
      %p224 = por %p222, %p223
      %p225 = scmp.ne.s32.totalorder %s214, %s217
      %p226 = scmp.eq.s32.totalorder %s44, 3
      %p227 = por %p225, %p226
      %p228 = scmp.ne.s32.totalorder %s217, %s218
      %p229 = scmp.eq.s32.totalorder %s44, 0
      %p230 = por %p228, %p229
      %p231 = scmp.ne.s32.totalorder %s217, %s218
      %p232 = scmp.eq.s32.totalorder %s45, 3
      %p233 = por %p231, %p232
      %p235 = scmp.ne.s32.totalorder %s218, %s234
      %p236 = scmp.eq.s32.totalorder %s45, 0
      %p237 = por %p235, %p236
      %s238 = ssub.s32 %s46, %s58
      %p239 = scmp.eq.s32.totalorder %s238, 0
      %s241 = sadd.s32 %s240, 1
      %s242 = scalar_select %p239, %s240, %s241
      %p245 = pneg %p239
      %p246 = scmp.eq.s32.totalorder %s39, 3
      %p247 = por %p245, %p246
      %p248 = scmp.ne.s32.totalorder %s240, %s243
      %p249 = scmp.eq.s32.totalorder %s39, 0
      %p250 = por %p248, %p249
      %p251 = scmp.ne.s32.totalorder %s240, %s243
      %p252 = scmp.eq.s32.totalorder %s44, 3
      %p253 = por %p251, %p252
      %p254 = scmp.ne.s32.totalorder %s243, %s244
      %p255 = scmp.eq.s32.totalorder %s44, 0
      %p256 = por %p254, %p255
      %p257 = scmp.ne.s32.totalorder %s243, %s244
      %p258 = scmp.eq.s32.totalorder %s45, 3
      %p259 = por %p257, %p258
      %p261 = scmp.ne.s32.totalorder %s244, %s260
      %p262 = scmp.eq.s32.totalorder %s45, 0
      %p263 = por %p261, %p262
      %p264 = scmp.le.s32.totalorder 1, %s39
      %p265 = scmp.lt.s32.totalorder %s39, 5
      %p266 = pnand %p264, %p265
      %p267 = pneg %p266
      // Predicated region
      $region9: #{tpu_custom_call.1} parent=5 // pred_check
        _
      $region10: #{tpu_custom_call.1} parent=5 // pred_check_branch
        %269 = sbr.rel (%p266) target = $region12
      $region11: #{tpu_custom_call.1} parent=5 // pred_region
        %s270 = ssub.s32 %s39, 1
        // Predicated region
        $region13: #{tpu_custom_call.1} parent=11 // pred_check
          %p271 = pneg %p72
        $region14: #{tpu_custom_call.1} parent=11 // pred_check_branch
          %273 = sbr.rel (%p271) target = $region16
        $region15: #{tpu_custom_call.1} parent=11 // pred_region
          %275 = vsyncadd [#allocation8], 0
          %s277 = sshll.u32 %s1, 4
          %s278 = int_to_ptr.hbm [resolvable:$true] %s277
          %s279 = sshll.u32 [#allocation7], 4
          %s280 = int_to_ptr.vmem [resolvable:$true] %s279
          %282 = dma.hbm_to_vmem [thread:$0]  %s278, 128, %s280, [#allocation8]
        $region16: #{tpu_custom_call.1} parent=11 // pred_fallthru
          _
      $region12: #{tpu_custom_call.1} parent=5 // pred_fallthru
        _
      %p283 = scmp.lt.s32.totalorder %s39, 4
      // Predicated region
      $region17: #{tpu_custom_call.1} parent=5 // pred_check
        %p284 = pneg %p283
      $region18: #{tpu_custom_call.1} parent=5 // pred_check_branch
        %286 = sbr.rel (%p284) target = $region20
      $region19: #{tpu_custom_call.1} parent=5 // pred_region
        // Predicated region
        $region21: #{tpu_custom_call.1} parent=19 // pred_check
          %p287 = pneg %p94
        $region22: #{tpu_custom_call.1} parent=19 // pred_check_branch
          %289 = sbr.rel (%p287) target = $region24
        $region23: #{tpu_custom_call.1} parent=19 // pred_region
          #allocation22 [shape = 'u32[6]{0}', space=smem, size = 0x18, scoped, tag = 'DMA stride descriptor']
          %s290 = sand.u32 %s39, 1
          %s291 = scalar_lea.sflag [#allocation11], %s290
          %s292 = sand.u32 %s84, 1
          %s293 = smul.addr %s292, 1024
          %s294 = scalar_lea.vmem [#allocation10], %s293
          %s295 = smul.u32 16, %s47
          %297 = vsyncadd %s291, 0
          %s298 = smul.addr %s295, 2
          %s299 = smul.addr %s46, 512
          %s300 = sadd.s32 %s298, %s299
          %s301 = smul.addr %s300, 4
          %s302 = scalar_lea.hbm %s2, %s301
          %s304 = sshll.u32 1, 14
          %s305 = sxor.u32 4294967295, %s304
          %s307 = sld [smem:[#allocation0]]
          %s308 = sadd.s32 2, %s307
          %s310 = sshll.u32 7, 26
          %s311 = sxor.u32 4294967295, %s310
          %s312 = sand.u32 0, %s311
          %s313 = sshll.u32 %s308, 26
          %s314 = sor.u32 %s312, %s313
          %s315 = sshll.u32 %s302, 4
          %s316 = int_to_ptr.hbm [resolvable:$true] %s315
          %s317 = sshll.u32 %s294, 4
          %s318 = int_to_ptr.vmem [resolvable:$true] %s317
          %324 = sst [smem:[#allocation22]] 4096
          %s325 = scalar_lea.smem [#allocation22], 1
          %326 = sst [smem:[%s325]] 2048
          %s327 = scalar_lea.smem [#allocation22], 2
          %328 = sst [smem:[%s327]] 16
          %s329 = scalar_lea.smem [#allocation22], 3
          %330 = sst [smem:[%s329]] 128
          %s331 = scalar_lea.smem [#allocation22], 4
          %332 = sst [smem:[%s331]] 128
          %s333 = scalar_lea.smem [#allocation22], 5
          %334 = sst [smem:[%s333]] 8
          %336 = dma.general %s316, 16384, %s318, %s291, [#allocation21], [#allocation22], %s314, 0
        $region24: #{tpu_custom_call.1} parent=19 // pred_fallthru
          _
        // Predicated region
        $region25: #{tpu_custom_call.1} parent=19 // pred_check
          %p337 = pneg %p120
        $region26: #{tpu_custom_call.1} parent=19 // pred_check_branch
          %339 = sbr.rel (%p337) target = $region28
        $region27: #{tpu_custom_call.1} parent=19 // pred_region
          %s340 = sand.u32 %s39, 1
          %s341 = scalar_lea.sflag [#allocation11], %s340
          %s342 = sand.u32 %s110, 1
          %s343 = smul.addr %s342, 64
          %s344 = scalar_lea.vmem [#allocation12], %s343
          %346 = vsyncadd %s341, 0
          %s347 = smul.addr %s46, 16
          %s348 = smul.addr %s347, 4
          %s349 = scalar_lea.hbm %s3, %s348
          %s350 = sshll.u32 %s349, 4
          %s351 = int_to_ptr.hbm [resolvable:$true] %s350
          %s352 = sshll.u32 %s344, 4
          %s353 = int_to_ptr.vmem [resolvable:$true] %s352
          %358 = dma.hbm_to_vmem [thread:$0]  %s351, 1024, %s353, %s341, 64, 64, 4
        $region28: #{tpu_custom_call.1} parent=19 // pred_fallthru
          _
        // Predicated region
        $region29: #{tpu_custom_call.1} parent=19 // pred_check
          %p359 = pneg %p146
        $region30: #{tpu_custom_call.1} parent=19 // pred_check_branch
          %361 = sbr.rel (%p359) target = $region32
        $region31: #{tpu_custom_call.1} parent=19 // pred_region
          %s362 = sand.u32 %s39, 1
          %s363 = scalar_lea.sflag [#allocation14], %s362
          %s364 = sand.u32 %s136, 1
          %s365 = smul.addr %s364, 128
          %s366 = scalar_lea.vmem [#allocation13], %s365
          %368 = vsyncadd %s363, 0
          %s369 = smul.addr %s46, 32
          %s370 = smul.addr %s369, 4
          %s371 = scalar_lea.hbm %s4, %s370
          %s372 = sshll.u32 %s371, 4
          %s373 = int_to_ptr.hbm [resolvable:$true] %s372
          %s374 = sshll.u32 %s366, 4
          %s375 = int_to_ptr.vmem [resolvable:$true] %s374
          %380 = dma.hbm_to_vmem [thread:$0]  %s373, 2048, %s375, %s363, 64, 64, 4
        $region32: #{tpu_custom_call.1} parent=19 // pred_fallthru
          _
        // Predicated region
        $region33: #{tpu_custom_call.1} parent=19 // pred_check
          %p381 = pneg %p172
        $region34: #{tpu_custom_call.1} parent=19 // pred_check_branch
          %383 = sbr.rel (%p381) target = $region36
        $region35: #{tpu_custom_call.1} parent=19 // pred_region
          %s384 = sand.u32 %s39, 1
          %s385 = scalar_lea.sflag [#allocation14], %s384
          %s386 = sand.u32 %s162, 1
          %s387 = scalar_lea.vmem [#allocation15], %s386
          %389 = vsyncadd %s385, 0
          %s390 = scalar_lea.hbm %s5, %s46
          %s392 = sshll.u32 %s390, 4
          %s393 = int_to_ptr.hbm [resolvable:$true] %s392
          %s394 = sshll.u32 %s387, 4
          %s395 = int_to_ptr.vmem [resolvable:$true] %s394
          %397 = dma.hbm_to_vmem [thread:$0]  %s393, 16, %s395, %s385
        $region36: #{tpu_custom_call.1} parent=19 // pred_fallthru
          _
        // Predicated region
        $region37: #{tpu_custom_call.1} parent=19 // pred_check
          %p398 = pneg %p198
        $region38: #{tpu_custom_call.1} parent=19 // pred_check_branch
          %400 = sbr.rel (%p398) target = $region40
        $region39: #{tpu_custom_call.1} parent=19 // pred_region
          %s401 = sand.u32 %s188, 1
          %s402 = scalar_lea.sflag [#allocation17], %s401
          %s403 = sand.u32 %s188, 1
          %s404 = scalar_lea.vmem [#allocation16], %s403
          %406 = vsyncadd %s402, 0
          %s407 = scalar_lea.hbm %s6, %s46
          %s409 = sshll.u32 %s407, 4
          %s410 = int_to_ptr.hbm [resolvable:$true] %s409
          %s411 = sshll.u32 %s404, 4
          %s412 = int_to_ptr.vmem [resolvable:$true] %s411
          %414 = dma.hbm_to_vmem [thread:$0]  %s410, 16, %s412, %s402
        $region40: #{tpu_custom_call.1} parent=19 // pred_fallthru
          _
      $region20: #{tpu_custom_call.1} parent=5 // pred_fallthru
        _
      %p415 = scmp.le.s32.totalorder 1, %s39
      %p416 = scmp.lt.s32.totalorder %s39, 5
      %p417 = pnand %p415, %p416
      %p418 = pneg %p417
      // Predicated region
      $region41: #{tpu_custom_call.1} parent=5 // pred_check
        _
      $region42: #{tpu_custom_call.1} parent=5 // pred_check_branch
        %420 = sbr.rel (%p417) target = $region44
      $region43: #{tpu_custom_call.1} parent=5 // pred_region
        %s421 = ssub.s32 %s39, 1
        // Predicated region
        $region45: #{tpu_custom_call.1} parent=43 // pred_check
          %p422 = pneg %p72
        $region46: #{tpu_custom_call.1} parent=43 // pred_check_branch
          %424 = sbr.rel (%p422) target = $region48
        $region47: #{tpu_custom_call.1} parent=43 // pred_region
          %426 = dma.done [#allocation8], 128
        $region48: #{tpu_custom_call.1} parent=43 // pred_fallthru
          _
        %s427 = sand.u32 %s44, 1
        %s428 = scalar_lea.sflag [#allocation11], %s427
        %s429 = sand.u32 %s87, 1
        %s430 = smul.addr %s429, 1024
        %s431 = scalar_lea.vmem [#allocation10], %s430
        // Predicated region
        $region49: #{tpu_custom_call.1} parent=43 // pred_check
          %p432 = pneg %p100
        $region50: #{tpu_custom_call.1} parent=43 // pred_check_branch
          %434 = sbr.rel (%p432) target = $region52
        $region51: #{tpu_custom_call.1} parent=43 // pred_region
          %436 = dma.done %s428, 16384
        $region52: #{tpu_custom_call.1} parent=43 // pred_fallthru
          _
        %s437 = sand.u32 %s44, 1
        %s438 = scalar_lea.sflag [#allocation11], %s437
        %s439 = sand.u32 %s113, 1
        %s440 = smul.addr %s439, 64
        %s441 = scalar_lea.vmem [#allocation12], %s440
        // Predicated region
        $region53: #{tpu_custom_call.1} parent=43 // pred_check
          %p442 = pneg %p126
        $region54: #{tpu_custom_call.1} parent=43 // pred_check_branch
          %444 = sbr.rel (%p442) target = $region56
        $region55: #{tpu_custom_call.1} parent=43 // pred_region
          %446 = dma.done %s438, 1024
        $region56: #{tpu_custom_call.1} parent=43 // pred_fallthru
          _
        %s447 = sand.u32 %s44, 1
        %s448 = scalar_lea.sflag [#allocation14], %s447
        %s449 = sand.u32 %s139, 1
        %s450 = smul.addr %s449, 128
        %s451 = scalar_lea.vmem [#allocation13], %s450
        // Predicated region
        $region57: #{tpu_custom_call.1} parent=43 // pred_check
          %p452 = pneg %p152
        $region58: #{tpu_custom_call.1} parent=43 // pred_check_branch
          %454 = sbr.rel (%p452) target = $region60
        $region59: #{tpu_custom_call.1} parent=43 // pred_region
          %456 = dma.done %s448, 2048
        $region60: #{tpu_custom_call.1} parent=43 // pred_fallthru
          _
        %s457 = sand.u32 %s44, 1
        %s458 = scalar_lea.sflag [#allocation14], %s457
        %s459 = sand.u32 %s165, 1
        %s460 = scalar_lea.vmem [#allocation15], %s459
        // Predicated region
        $region61: #{tpu_custom_call.1} parent=43 // pred_check
          %p461 = pneg %p178
        $region62: #{tpu_custom_call.1} parent=43 // pred_check_branch
          %463 = sbr.rel (%p461) target = $region64
        $region63: #{tpu_custom_call.1} parent=43 // pred_region
          %465 = dma.done %s458, 16
        $region64: #{tpu_custom_call.1} parent=43 // pred_fallthru
          _
        %s466 = sand.u32 %s191, 1
        %s467 = scalar_lea.sflag [#allocation17], %s466
        %s468 = sand.u32 %s191, 1
        %s469 = scalar_lea.vmem [#allocation16], %s468
        // Predicated region
        $region65: #{tpu_custom_call.1} parent=43 // pred_check
          %p470 = pneg %p204
        $region66: #{tpu_custom_call.1} parent=43 // pred_check_branch
          %472 = sbr.rel (%p470) target = $region68
        $region67: #{tpu_custom_call.1} parent=43 // pred_region
          %474 = dma.done %s467, 16
        $region68: #{tpu_custom_call.1} parent=43 // pred_fallthru
          _
        %p475 = pneg %p72
        %p476 = pneg %p69
        %s477 = sand.u32 %s44, 1
        %s478 = scalar_lea.sflag [#allocation11], %s477
        %s479 = sand.u32 %s87, 1
        %s480 = smul.addr %s479, 1024
        %s481 = scalar_lea.vmem [#allocation10], %s480
        %p482 = pneg %p100
        %p483 = pneg %p97
        %s484 = sand.u32 %s44, 1
        %s485 = scalar_lea.sflag [#allocation11], %s484
        %s486 = sand.u32 %s113, 1
        %s487 = smul.addr %s486, 64
        %s488 = scalar_lea.vmem [#allocation12], %s487
        %p489 = pneg %p126
        %p490 = pneg %p123
        %s491 = sand.u32 %s44, 1
        %s492 = scalar_lea.sflag [#allocation14], %s491
        %s493 = sand.u32 %s139, 1
        %s494 = smul.addr %s493, 128
        %s495 = scalar_lea.vmem [#allocation13], %s494
        %p496 = pneg %p152
        %p497 = pneg %p149
        %s498 = sand.u32 %s44, 1
        %s499 = scalar_lea.sflag [#allocation14], %s498
        %s500 = sand.u32 %s165, 1
        %s501 = scalar_lea.vmem [#allocation15], %s500
        %p502 = pneg %p178
        %p503 = pneg %p175
        %s504 = sand.u32 %s191, 1
        %s505 = scalar_lea.sflag [#allocation17], %s504
        %s506 = sand.u32 %s191, 1
        %s507 = scalar_lea.vmem [#allocation16], %s506
        %p508 = pneg %p204
        %p509 = pneg %p201
        %p510 = pneg %p230
        %p511 = pneg %p227
        %s512 = sand.u32 %s217, 1
        %s513 = scalar_lea.sflag [#allocation9], %s512
        %s514 = sand.u32 %s217, 1
        %s515 = smul.addr %s514, 16
        %s516 = scalar_lea.vmem [#allocation18], %s515
        %p517 = pneg %p256
        %p518 = pneg %p253
        %s519 = sand.u32 %s243, 1
        %s520 = scalar_lea.sflag [#allocation20], %s519
        %s521 = sand.u32 %s243, 1
        %s522 = smul.addr %s521, 16
        %s523 = scalar_lea.vmem [#allocation19], %s522
        %s524 = smul.u32 16, %s49
        %p525 = scmp.eq.s32.totalorder %s49, 0
        // Predicated region
        $region69: #{tpu_custom_call.1} parent=43 // pred_check
          %p526 = pneg %p525
        $region70: #{tpu_custom_call.1} parent=43 // pred_check_branch
          %528 = sbr.rel (%p526) target = $region72
        $region71: #{tpu_custom_call.1} parent=43 // pred_region
          %v529 = vld [vmem:[#allocation7] sm:$0xff]
          %v530 = vpack.c.bf16 %v529, %v529
          %v531 = vld [vmem:[%s441] sm:$0xf]
          %v532 = vld [vmem:[%s441 + $0x4] sm:$0xf]
          %v533 = vld [vmem:[%s441 + $0x8] sm:$0xf]
          %v534 = vld [vmem:[%s441 + $0xc] sm:$0xf]
          %v535 = vld [vmem:[%s441 + $0x10] sm:$0xf]
          %v536 = vld [vmem:[%s441 + $0x14] sm:$0xf]
          %v537 = vld [vmem:[%s441 + $0x18] sm:$0xf]
          %v538 = vld [vmem:[%s441 + $0x1c] sm:$0xf]
          %v539 = vld [vmem:[%s441 + $0x20] sm:$0xf]
          %v540 = vld [vmem:[%s441 + $0x24] sm:$0xf]
          %v541 = vld [vmem:[%s441 + $0x28] sm:$0xf]
          %v542 = vld [vmem:[%s441 + $0x2c] sm:$0xf]
          %v543 = vld [vmem:[%s441 + $0x30] sm:$0xf]
          %v544 = vld [vmem:[%s441 + $0x34] sm:$0xf]
          %v545 = vld [vmem:[%s441 + $0x38] sm:$0xf]
          %v546 = vld [vmem:[%s441 + $0x3c] sm:$0xf]
          %v547 = vld [vmem:[%s460] sm:$0x1]
          %v549 = vperm.slane %v547, 0
          %v567 = vunpack.c.l.b16 %v531
          %v568 = vunpack.c.l.b16 %v532
          %v569 = vunpack.c.l.b16 %v533
          %v570 = vunpack.c.l.b16 %v534
          %v571 = vunpack.c.l.b16 %v535
          %v572 = vunpack.c.l.b16 %v536
          %v573 = vunpack.c.l.b16 %v537
          %v574 = vunpack.c.l.b16 %v538
          %v575 = vunpack.c.l.b16 %v539
          %v576 = vunpack.c.l.b16 %v540
          %v577 = vunpack.c.l.b16 %v541
          %v578 = vunpack.c.l.b16 %v542
          %v579 = vunpack.c.l.b16 %v543
          %v580 = vunpack.c.l.b16 %v544
          %v581 = vunpack.c.l.b16 %v545
          %v582 = vunpack.c.l.b16 %v546
          %v583 = vpack.c.b16 %v568, %v567
          %v584 = vpack.c.b16 %v570, %v569
          %v585 = vpack.c.b16 %v572, %v571
          %v586 = vpack.c.b16 %v574, %v573
          %v587 = vpack.c.b16 %v576, %v575
          %v588 = vpack.c.b16 %v578, %v577
          %v589 = vpack.c.b16 %v580, %v579
          %v590 = vpack.c.b16 %v582, %v581
          %599 = vmatpush.bf16.msra.mxu0 %v590
          %600 = vmatpush.bf16.msra.mxu0 %v589
          %601 = vmatpush.bf16.msra.mxu0 %v588
          %602 = vmatpush.bf16.msra.mxu0 %v587
          %603 = vmatpush.bf16.msra.mxu0 %v586
          %604 = vmatpush.bf16.msra.mxu0 %v585
          %605 = vmatpush.bf16.msra.mxu0 %v584
          %606 = vmatpush.bf16.msra.mxu0 %v583
          %607 = vmatmul.bf16.gmra.mxu0 %v530
          %v608 = vpop.f32.mrf.mxu0
          %v609 = vadd.f32 %v549, %v608
          %v610 = vpop.f32.mrf.mxu0
          %611 = vdwg.mxu0
          %612 = vst [vmem:[#allocation2] sm:$0xff] %v609
          %vm613 = vcmask 7168
          %614 = vst.msk [vmem:[#allocation3] sm:$0xff] %vm613, -inf
          %615 = vst.msk [vmem:[#allocation4] sm:$0xff] %vm613, 0.0
          %616 = vst [vmem:[%s516] sm:$0xff] 0.0
          %617 = vst [vmem:[%s516 + $0x8] sm:$0xff] 0.0
        $region72: #{tpu_custom_call.1} parent=43 // pred_fallthru
          _
        %v618 = vld [vmem:[%s431] sm:$0xff]
        %v619 = vld [vmem:[%s431 + $0x8] sm:$0xff]
        %v620 = vld [vmem:[%s431 + $0x10] sm:$0xff]
        %v621 = vld [vmem:[%s431 + $0x18] sm:$0xff]
        %v622 = vld [vmem:[%s431 + $0x20] sm:$0xff]
        %v623 = vld [vmem:[%s431 + $0x28] sm:$0xff]
        %v624 = vld [vmem:[%s431 + $0x30] sm:$0xff]
        %v625 = vld [vmem:[%s431 + $0x38] sm:$0xff]
        %v626 = vld [vmem:[%s431 + $0x40] sm:$0xff]
        %v627 = vld [vmem:[%s431 + $0x48] sm:$0xff]
        %v628 = vld [vmem:[%s431 + $0x50] sm:$0xff]
        %v629 = vld [vmem:[%s431 + $0x58] sm:$0xff]
        %v630 = vld [vmem:[%s431 + $0x60] sm:$0xff]
        %v631 = vld [vmem:[%s431 + $0x68] sm:$0xff]
        %v632 = vld [vmem:[%s431 + $0x70] sm:$0xff]
        %v633 = vld [vmem:[%s431 + $0x78] sm:$0xff]
        %v634 = vld [vmem:[%s431 + $0x80] sm:$0xff]
        %v635 = vld [vmem:[%s431 + $0x88] sm:$0xff]
        %v636 = vld [vmem:[%s431 + $0x90] sm:$0xff]
        %v637 = vld [vmem:[%s431 + $0x98] sm:$0xff]
        %v638 = vld [vmem:[%s431 + $0xa0] sm:$0xff]
        %v639 = vld [vmem:[%s431 + $0xa8] sm:$0xff]
        %v640 = vld [vmem:[%s431 + $0xb0] sm:$0xff]
        %v641 = vld [vmem:[%s431 + $0xb8] sm:$0xff]
        %v642 = vld [vmem:[%s431 + $0xc0] sm:$0xff]
        %v643 = vld [vmem:[%s431 + $0xc8] sm:$0xff]
        %v644 = vld [vmem:[%s431 + $0xd0] sm:$0xff]
        %v645 = vld [vmem:[%s431 + $0xd8] sm:$0xff]
        %v646 = vld [vmem:[%s431 + $0xe0] sm:$0xff]
        %v647 = vld [vmem:[%s431 + $0xe8] sm:$0xff]
        %v648 = vld [vmem:[%s431 + $0xf0] sm:$0xff]
        %v649 = vld [vmem:[%s431 + $0xf8] sm:$0xff]
        %v650 = vld [vmem:[%s431 + $0x100] sm:$0xff]
        %v651 = vld [vmem:[%s431 + $0x108] sm:$0xff]
        %v652 = vld [vmem:[%s431 + $0x110] sm:$0xff]
        %v653 = vld [vmem:[%s431 + $0x118] sm:$0xff]
        %v654 = vld [vmem:[%s431 + $0x120] sm:$0xff]
        %v655 = vld [vmem:[%s431 + $0x128] sm:$0xff]
        %v656 = vld [vmem:[%s431 + $0x130] sm:$0xff]
        %v657 = vld [vmem:[%s431 + $0x138] sm:$0xff]
        %v658 = vld [vmem:[%s431 + $0x140] sm:$0xff]
        %v659 = vld [vmem:[%s431 + $0x148] sm:$0xff]
        %v660 = vld [vmem:[%s431 + $0x150] sm:$0xff]
        %v661 = vld [vmem:[%s431 + $0x158] sm:$0xff]
        %v662 = vld [vmem:[%s431 + $0x160] sm:$0xff]
        %v663 = vld [vmem:[%s431 + $0x168] sm:$0xff]
        %v664 = vld [vmem:[%s431 + $0x170] sm:$0xff]
        %v665 = vld [vmem:[%s431 + $0x178] sm:$0xff]
        %v666 = vld [vmem:[%s431 + $0x180] sm:$0xff]
        %v667 = vld [vmem:[%s431 + $0x188] sm:$0xff]
        %v668 = vld [vmem:[%s431 + $0x190] sm:$0xff]
        %v669 = vld [vmem:[%s431 + $0x198] sm:$0xff]
        %v670 = vld [vmem:[%s431 + $0x1a0] sm:$0xff]
        %v671 = vld [vmem:[%s431 + $0x1a8] sm:$0xff]
        %v672 = vld [vmem:[%s431 + $0x1b0] sm:$0xff]
        %v673 = vld [vmem:[%s431 + $0x1b8] sm:$0xff]
        %v674 = vld [vmem:[%s431 + $0x1c0] sm:$0xff]
        %v675 = vld [vmem:[%s431 + $0x1c8] sm:$0xff]
        %v676 = vld [vmem:[%s431 + $0x1d0] sm:$0xff]
        %v677 = vld [vmem:[%s431 + $0x1d8] sm:$0xff]
        %v678 = vld [vmem:[%s431 + $0x1e0] sm:$0xff]
        %v679 = vld [vmem:[%s431 + $0x1e8] sm:$0xff]
        %v680 = vld [vmem:[%s431 + $0x1f0] sm:$0xff]
        %v681 = vld [vmem:[%s431 + $0x1f8] sm:$0xff]
        %v682 = vld [vmem:[%s431 + $0x200] sm:$0xff]
        %v683 = vld [vmem:[%s431 + $0x208] sm:$0xff]
        %v684 = vld [vmem:[%s431 + $0x210] sm:$0xff]
        %v685 = vld [vmem:[%s431 + $0x218] sm:$0xff]
        %v686 = vld [vmem:[%s431 + $0x220] sm:$0xff]
        %v687 = vld [vmem:[%s431 + $0x228] sm:$0xff]
        %v688 = vld [vmem:[%s431 + $0x230] sm:$0xff]
        %v689 = vld [vmem:[%s431 + $0x238] sm:$0xff]
        %v690 = vld [vmem:[%s431 + $0x240] sm:$0xff]
        %v691 = vld [vmem:[%s431 + $0x248] sm:$0xff]
        %v692 = vld [vmem:[%s431 + $0x250] sm:$0xff]
        %v693 = vld [vmem:[%s431 + $0x258] sm:$0xff]
        %v694 = vld [vmem:[%s431 + $0x260] sm:$0xff]
        %v695 = vld [vmem:[%s431 + $0x268] sm:$0xff]
        %v696 = vld [vmem:[%s431 + $0x270] sm:$0xff]
        %v697 = vld [vmem:[%s431 + $0x278] sm:$0xff]
        %v698 = vld [vmem:[%s431 + $0x280] sm:$0xff]
        %v699 = vld [vmem:[%s431 + $0x288] sm:$0xff]
        %v700 = vld [vmem:[%s431 + $0x290] sm:$0xff]
        %v701 = vld [vmem:[%s431 + $0x298] sm:$0xff]
        %v702 = vld [vmem:[%s431 + $0x2a0] sm:$0xff]
        %v703 = vld [vmem:[%s431 + $0x2a8] sm:$0xff]
        %v704 = vld [vmem:[%s431 + $0x2b0] sm:$0xff]
        %v705 = vld [vmem:[%s431 + $0x2b8] sm:$0xff]
        %v706 = vld [vmem:[%s431 + $0x2c0] sm:$0xff]
        %v707 = vld [vmem:[%s431 + $0x2c8] sm:$0xff]
        %v708 = vld [vmem:[%s431 + $0x2d0] sm:$0xff]
        %v709 = vld [vmem:[%s431 + $0x2d8] sm:$0xff]
        %v710 = vld [vmem:[%s431 + $0x2e0] sm:$0xff]
        %v711 = vld [vmem:[%s431 + $0x2e8] sm:$0xff]
        %v712 = vld [vmem:[%s431 + $0x2f0] sm:$0xff]
        %v713 = vld [vmem:[%s431 + $0x2f8] sm:$0xff]
        %v714 = vld [vmem:[%s431 + $0x300] sm:$0xff]
        %v715 = vld [vmem:[%s431 + $0x308] sm:$0xff]
        %v716 = vld [vmem:[%s431 + $0x310] sm:$0xff]
        %v717 = vld [vmem:[%s431 + $0x318] sm:$0xff]
        %v718 = vld [vmem:[%s431 + $0x320] sm:$0xff]
        %v719 = vld [vmem:[%s431 + $0x328] sm:$0xff]
        %v720 = vld [vmem:[%s431 + $0x330] sm:$0xff]
        %v721 = vld [vmem:[%s431 + $0x338] sm:$0xff]
        %v722 = vld [vmem:[%s431 + $0x340] sm:$0xff]
        %v723 = vld [vmem:[%s431 + $0x348] sm:$0xff]
        %v724 = vld [vmem:[%s431 + $0x350] sm:$0xff]
        %v725 = vld [vmem:[%s431 + $0x358] sm:$0xff]
        %v726 = vld [vmem:[%s431 + $0x360] sm:$0xff]
        %v727 = vld [vmem:[%s431 + $0x368] sm:$0xff]
        %v728 = vld [vmem:[%s431 + $0x370] sm:$0xff]
        %v729 = vld [vmem:[%s431 + $0x378] sm:$0xff]
        %v730 = vld [vmem:[%s431 + $0x380] sm:$0xff]
        %v731 = vld [vmem:[%s431 + $0x388] sm:$0xff]
        %v732 = vld [vmem:[%s431 + $0x390] sm:$0xff]
        %v733 = vld [vmem:[%s431 + $0x398] sm:$0xff]
        %v734 = vld [vmem:[%s431 + $0x3a0] sm:$0xff]
        %v735 = vld [vmem:[%s431 + $0x3a8] sm:$0xff]
        %v736 = vld [vmem:[%s431 + $0x3b0] sm:$0xff]
        %v737 = vld [vmem:[%s431 + $0x3b8] sm:$0xff]
        %v738 = vld [vmem:[%s431 + $0x3c0] sm:$0xff]
        %v739 = vld [vmem:[%s431 + $0x3c8] sm:$0xff]
        %v740 = vld [vmem:[%s431 + $0x3d0] sm:$0xff]
        %v741 = vld [vmem:[%s431 + $0x3d8] sm:$0xff]
        %v742 = vld [vmem:[%s431 + $0x3e0] sm:$0xff]
        %v743 = vld [vmem:[%s431 + $0x3e8] sm:$0xff]
        %v744 = vld [vmem:[%s431 + $0x3f0] sm:$0xff]
        %v745 = vld [vmem:[%s431 + $0x3f8] sm:$0xff]
        %v746 = vld [vmem:[%s451] sm:$0xf]
        %v747 = vld [vmem:[%s451 + $0x4] sm:$0xf]
        %v748 = vld [vmem:[%s451 + $0x8] sm:$0xf]
        %v749 = vld [vmem:[%s451 + $0xc] sm:$0xf]
        %v750 = vld [vmem:[%s451 + $0x10] sm:$0xf]
        %v751 = vld [vmem:[%s451 + $0x14] sm:$0xf]
        %v752 = vld [vmem:[%s451 + $0x18] sm:$0xf]
        %v753 = vld [vmem:[%s451 + $0x1c] sm:$0xf]
        %v754 = vld [vmem:[%s451 + $0x20] sm:$0xf]
        %v755 = vld [vmem:[%s451 + $0x24] sm:$0xf]
        %v756 = vld [vmem:[%s451 + $0x28] sm:$0xf]
        %v757 = vld [vmem:[%s451 + $0x2c] sm:$0xf]
        %v758 = vld [vmem:[%s451 + $0x30] sm:$0xf]
        %v759 = vld [vmem:[%s451 + $0x34] sm:$0xf]
        %v760 = vld [vmem:[%s451 + $0x38] sm:$0xf]
        %v761 = vld [vmem:[%s451 + $0x3c] sm:$0xf]
        %v762 = vld [vmem:[%s451 + $0x40] sm:$0xf]
        %v763 = vld [vmem:[%s451 + $0x44] sm:$0xf]
        %v764 = vld [vmem:[%s451 + $0x48] sm:$0xf]
        %v765 = vld [vmem:[%s451 + $0x4c] sm:$0xf]
        %v766 = vld [vmem:[%s451 + $0x50] sm:$0xf]
        %v767 = vld [vmem:[%s451 + $0x54] sm:$0xf]
        %v768 = vld [vmem:[%s451 + $0x58] sm:$0xf]
        %v769 = vld [vmem:[%s451 + $0x5c] sm:$0xf]
        %v770 = vld [vmem:[%s451 + $0x60] sm:$0xf]
        %v771 = vld [vmem:[%s451 + $0x64] sm:$0xf]
        %v772 = vld [vmem:[%s451 + $0x68] sm:$0xf]
        %v773 = vld [vmem:[%s451 + $0x6c] sm:$0xf]
        %v774 = vld [vmem:[%s451 + $0x70] sm:$0xf]
        %v775 = vld [vmem:[%s451 + $0x74] sm:$0xf]
        %v776 = vld [vmem:[%s451 + $0x78] sm:$0xf]
        %v777 = vld [vmem:[%s451 + $0x7c] sm:$0xf]
        %v906 = vunpack.c.l.b16 %v618
        %v907 = vunpack.c.h.b16 %v618
        %v908 = vunpack.c.l.b16 %v619
        %v909 = vunpack.c.h.b16 %v619
        %v910 = vunpack.c.l.b16 %v620
        %v911 = vunpack.c.h.b16 %v620
        %v912 = vunpack.c.l.b16 %v621
        %v913 = vunpack.c.h.b16 %v621
        %v914 = vunpack.c.l.b16 %v622
        %v915 = vunpack.c.h.b16 %v622
        %v916 = vunpack.c.l.b16 %v623
        %v917 = vunpack.c.h.b16 %v623
        %v918 = vunpack.c.l.b16 %v624
        %v919 = vunpack.c.h.b16 %v624
        %v920 = vunpack.c.l.b16 %v625
        %v921 = vunpack.c.h.b16 %v625
        %v922 = vunpack.c.l.b16 %v626
        %v923 = vunpack.c.h.b16 %v626
        %v924 = vunpack.c.l.b16 %v627
        %v925 = vunpack.c.h.b16 %v627
        %v926 = vunpack.c.l.b16 %v628
        %v927 = vunpack.c.h.b16 %v628
        %v928 = vunpack.c.l.b16 %v629
        %v929 = vunpack.c.h.b16 %v629
        %v930 = vunpack.c.l.b16 %v630
        %v931 = vunpack.c.h.b16 %v630
        %v932 = vunpack.c.l.b16 %v631
        %v933 = vunpack.c.h.b16 %v631
        %v934 = vunpack.c.l.b16 %v632
        %v935 = vunpack.c.h.b16 %v632
        %v936 = vunpack.c.l.b16 %v633
        %v937 = vunpack.c.h.b16 %v633
        %v938 = vunpack.c.l.b16 %v634
        %v939 = vunpack.c.h.b16 %v634
        %v940 = vunpack.c.l.b16 %v635
        %v941 = vunpack.c.h.b16 %v635
        %v942 = vunpack.c.l.b16 %v636
        %v943 = vunpack.c.h.b16 %v636
        %v944 = vunpack.c.l.b16 %v637
        %v945 = vunpack.c.h.b16 %v637
        %v946 = vunpack.c.l.b16 %v638
        %v947 = vunpack.c.h.b16 %v638
        %v948 = vunpack.c.l.b16 %v639
        %v949 = vunpack.c.h.b16 %v639
        %v950 = vunpack.c.l.b16 %v640
        %v951 = vunpack.c.h.b16 %v640
        %v952 = vunpack.c.l.b16 %v641
        %v953 = vunpack.c.h.b16 %v641
        %v954 = vunpack.c.l.b16 %v642
        %v955 = vunpack.c.h.b16 %v642
        %v956 = vunpack.c.l.b16 %v643
        %v957 = vunpack.c.h.b16 %v643
        %v958 = vunpack.c.l.b16 %v644
        %v959 = vunpack.c.h.b16 %v644
        %v960 = vunpack.c.l.b16 %v645
        %v961 = vunpack.c.h.b16 %v645
        %v962 = vunpack.c.l.b16 %v646
        %v963 = vunpack.c.h.b16 %v646
        %v964 = vunpack.c.l.b16 %v647
        %v965 = vunpack.c.h.b16 %v647
        %v966 = vunpack.c.l.b16 %v648
        %v967 = vunpack.c.h.b16 %v648
        %v968 = vunpack.c.l.b16 %v649
        %v969 = vunpack.c.h.b16 %v649
        %v970 = vunpack.c.l.b16 %v650
        %v971 = vunpack.c.h.b16 %v650
        %v972 = vunpack.c.l.b16 %v651
        %v973 = vunpack.c.h.b16 %v651
        %v974 = vunpack.c.l.b16 %v652
        %v975 = vunpack.c.h.b16 %v652
        %v976 = vunpack.c.l.b16 %v653
        %v977 = vunpack.c.h.b16 %v653
        %v978 = vunpack.c.l.b16 %v654
        %v979 = vunpack.c.h.b16 %v654
        %v980 = vunpack.c.l.b16 %v655
        %v981 = vunpack.c.h.b16 %v655
        %v982 = vunpack.c.l.b16 %v656
        %v983 = vunpack.c.h.b16 %v656
        %v984 = vunpack.c.l.b16 %v657
        %v985 = vunpack.c.h.b16 %v657
        %v986 = vunpack.c.l.b16 %v658
        %v987 = vunpack.c.h.b16 %v658
        %v988 = vunpack.c.l.b16 %v659
        %v989 = vunpack.c.h.b16 %v659
        %v990 = vunpack.c.l.b16 %v660
        %v991 = vunpack.c.h.b16 %v660
        %v992 = vunpack.c.l.b16 %v661
        %v993 = vunpack.c.h.b16 %v661
        %v994 = vunpack.c.l.b16 %v662
        %v995 = vunpack.c.h.b16 %v662
        %v996 = vunpack.c.l.b16 %v663
        %v997 = vunpack.c.h.b16 %v663
        %v998 = vunpack.c.l.b16 %v664
        %v999 = vunpack.c.h.b16 %v664
        %v1000 = vunpack.c.l.b16 %v665
        %v1001 = vunpack.c.h.b16 %v665
        %v1002 = vunpack.c.l.b16 %v666
        %v1003 = vunpack.c.h.b16 %v666
        %v1004 = vunpack.c.l.b16 %v667
        %v1005 = vunpack.c.h.b16 %v667
        %v1006 = vunpack.c.l.b16 %v668
        %v1007 = vunpack.c.h.b16 %v668
        %v1008 = vunpack.c.l.b16 %v669
        %v1009 = vunpack.c.h.b16 %v669
        %v1010 = vunpack.c.l.b16 %v670
        %v1011 = vunpack.c.h.b16 %v670
        %v1012 = vunpack.c.l.b16 %v671
        %v1013 = vunpack.c.h.b16 %v671
        %v1014 = vunpack.c.l.b16 %v672
        %v1015 = vunpack.c.h.b16 %v672
        %v1016 = vunpack.c.l.b16 %v673
        %v1017 = vunpack.c.h.b16 %v673
        %v1018 = vunpack.c.l.b16 %v674
        %v1019 = vunpack.c.h.b16 %v674
        %v1020 = vunpack.c.l.b16 %v675
        %v1021 = vunpack.c.h.b16 %v675
        %v1022 = vunpack.c.l.b16 %v676
        %v1023 = vunpack.c.h.b16 %v676
        %v1024 = vunpack.c.l.b16 %v677
        %v1025 = vunpack.c.h.b16 %v677
        %v1026 = vunpack.c.l.b16 %v678
        %v1027 = vunpack.c.h.b16 %v678
        %v1028 = vunpack.c.l.b16 %v679
        %v1029 = vunpack.c.h.b16 %v679
        %v1030 = vunpack.c.l.b16 %v680
        %v1031 = vunpack.c.h.b16 %v680
        %v1032 = vunpack.c.l.b16 %v681
        %v1033 = vunpack.c.h.b16 %v681
        %v1034 = vunpack.c.l.b16 %v682
        %v1035 = vunpack.c.h.b16 %v682
        %v1036 = vunpack.c.l.b16 %v683
        %v1037 = vunpack.c.h.b16 %v683
        %v1038 = vunpack.c.l.b16 %v684
        %v1039 = vunpack.c.h.b16 %v684
        %v1040 = vunpack.c.l.b16 %v685
        %v1041 = vunpack.c.h.b16 %v685
        %v1042 = vunpack.c.l.b16 %v686
        %v1043 = vunpack.c.h.b16 %v686
        %v1044 = vunpack.c.l.b16 %v687
        %v1045 = vunpack.c.h.b16 %v687
        %v1046 = vunpack.c.l.b16 %v688
        %v1047 = vunpack.c.h.b16 %v688
        %v1048 = vunpack.c.l.b16 %v689
        %v1049 = vunpack.c.h.b16 %v689
        %v1050 = vunpack.c.l.b16 %v690
        %v1051 = vunpack.c.h.b16 %v690
        %v1052 = vunpack.c.l.b16 %v691
        %v1053 = vunpack.c.h.b16 %v691
        %v1054 = vunpack.c.l.b16 %v692
        %v1055 = vunpack.c.h.b16 %v692
        %v1056 = vunpack.c.l.b16 %v693
        %v1057 = vunpack.c.h.b16 %v693
        %v1058 = vunpack.c.l.b16 %v694
        %v1059 = vunpack.c.h.b16 %v694
        %v1060 = vunpack.c.l.b16 %v695
        %v1061 = vunpack.c.h.b16 %v695
        %v1062 = vunpack.c.l.b16 %v696
        %v1063 = vunpack.c.h.b16 %v696
        %v1064 = vunpack.c.l.b16 %v697
        %v1065 = vunpack.c.h.b16 %v697
        %v1066 = vunpack.c.l.b16 %v698
        %v1067 = vunpack.c.h.b16 %v698
        %v1068 = vunpack.c.l.b16 %v699
        %v1069 = vunpack.c.h.b16 %v699
        %v1070 = vunpack.c.l.b16 %v700
        %v1071 = vunpack.c.h.b16 %v700
        %v1072 = vunpack.c.l.b16 %v701
        %v1073 = vunpack.c.h.b16 %v701
        %v1074 = vunpack.c.l.b16 %v702
        %v1075 = vunpack.c.h.b16 %v702
        %v1076 = vunpack.c.l.b16 %v703
        %v1077 = vunpack.c.h.b16 %v703
        %v1078 = vunpack.c.l.b16 %v704
        %v1079 = vunpack.c.h.b16 %v704
        %v1080 = vunpack.c.l.b16 %v705
        %v1081 = vunpack.c.h.b16 %v705
        %v1082 = vunpack.c.l.b16 %v706
        %v1083 = vunpack.c.h.b16 %v706
        %v1084 = vunpack.c.l.b16 %v707
        %v1085 = vunpack.c.h.b16 %v707
        %v1086 = vunpack.c.l.b16 %v708
        %v1087 = vunpack.c.h.b16 %v708
        %v1088 = vunpack.c.l.b16 %v709
        %v1089 = vunpack.c.h.b16 %v709
        %v1090 = vunpack.c.l.b16 %v710
        %v1091 = vunpack.c.h.b16 %v710
        %v1092 = vunpack.c.l.b16 %v711
        %v1093 = vunpack.c.h.b16 %v711
        %v1094 = vunpack.c.l.b16 %v712
        %v1095 = vunpack.c.h.b16 %v712
        %v1096 = vunpack.c.l.b16 %v713
        %v1097 = vunpack.c.h.b16 %v713
        %v1098 = vunpack.c.l.b16 %v714
        %v1099 = vunpack.c.h.b16 %v714
        %v1100 = vunpack.c.l.b16 %v715
        %v1101 = vunpack.c.h.b16 %v715
        %v1102 = vunpack.c.l.b16 %v716
        %v1103 = vunpack.c.h.b16 %v716
        %v1104 = vunpack.c.l.b16 %v717
        %v1105 = vunpack.c.h.b16 %v717
        %v1106 = vunpack.c.l.b16 %v718
        %v1107 = vunpack.c.h.b16 %v718
        %v1108 = vunpack.c.l.b16 %v719
        %v1109 = vunpack.c.h.b16 %v719
        %v1110 = vunpack.c.l.b16 %v720
        %v1111 = vunpack.c.h.b16 %v720
        %v1112 = vunpack.c.l.b16 %v721
        %v1113 = vunpack.c.h.b16 %v721
        %v1114 = vunpack.c.l.b16 %v722
        %v1115 = vunpack.c.h.b16 %v722
        %v1116 = vunpack.c.l.b16 %v723
        %v1117 = vunpack.c.h.b16 %v723
        %v1118 = vunpack.c.l.b16 %v724
        %v1119 = vunpack.c.h.b16 %v724
        %v1120 = vunpack.c.l.b16 %v725
        %v1121 = vunpack.c.h.b16 %v725
        %v1122 = vunpack.c.l.b16 %v726
        %v1123 = vunpack.c.h.b16 %v726
        %v1124 = vunpack.c.l.b16 %v727
        %v1125 = vunpack.c.h.b16 %v727
        %v1126 = vunpack.c.l.b16 %v728
        %v1127 = vunpack.c.h.b16 %v728
        %v1128 = vunpack.c.l.b16 %v729
        %v1129 = vunpack.c.h.b16 %v729
        %v1130 = vunpack.c.l.b16 %v730
        %v1131 = vunpack.c.h.b16 %v730
        %v1132 = vunpack.c.l.b16 %v731
        %v1133 = vunpack.c.h.b16 %v731
        %v1134 = vunpack.c.l.b16 %v732
        %v1135 = vunpack.c.h.b16 %v732
        %v1136 = vunpack.c.l.b16 %v733
        %v1137 = vunpack.c.h.b16 %v733
        %v1138 = vunpack.c.l.b16 %v734
        %v1139 = vunpack.c.h.b16 %v734
        %v1140 = vunpack.c.l.b16 %v735
        %v1141 = vunpack.c.h.b16 %v735
        %v1142 = vunpack.c.l.b16 %v736
        %v1143 = vunpack.c.h.b16 %v736
        %v1144 = vunpack.c.l.b16 %v737
        %v1145 = vunpack.c.h.b16 %v737
        %v1146 = vunpack.c.l.b16 %v738
        %v1147 = vunpack.c.h.b16 %v738
        %v1148 = vunpack.c.l.b16 %v739
        %v1149 = vunpack.c.h.b16 %v739
        %v1150 = vunpack.c.l.b16 %v740
        %v1151 = vunpack.c.h.b16 %v740
        %v1152 = vunpack.c.l.b16 %v741
        %v1153 = vunpack.c.h.b16 %v741
        %v1154 = vunpack.c.l.b16 %v742
        %v1155 = vunpack.c.h.b16 %v742
        %v1156 = vunpack.c.l.b16 %v743
        %v1157 = vunpack.c.h.b16 %v743
        %v1158 = vunpack.c.l.b16 %v744
        %v1159 = vunpack.c.h.b16 %v744
        %v1160 = vunpack.c.l.b16 %v745
        %v1161 = vunpack.c.h.b16 %v745
        %v1162 = vpack.c.b16 %v908, %v906
        %v1163 = vpack.c.b16 %v909, %v907
        %v1164 = vpack.c.b16 %v912, %v910
        %v1165 = vpack.c.b16 %v913, %v911
        %v1166 = vpack.c.b16 %v916, %v914
        %v1167 = vpack.c.b16 %v917, %v915
        %v1168 = vpack.c.b16 %v920, %v918
        %v1169 = vpack.c.b16 %v921, %v919
        %v1170 = vpack.c.b16 %v924, %v922
        %v1171 = vpack.c.b16 %v925, %v923
        %v1172 = vpack.c.b16 %v928, %v926
        %v1173 = vpack.c.b16 %v929, %v927
        %v1174 = vpack.c.b16 %v932, %v930
        %v1175 = vpack.c.b16 %v933, %v931
        %v1176 = vpack.c.b16 %v936, %v934
        %v1177 = vpack.c.b16 %v937, %v935
        %v1178 = vpack.c.b16 %v940, %v938
        %v1179 = vpack.c.b16 %v941, %v939
        %v1180 = vpack.c.b16 %v944, %v942
        %v1181 = vpack.c.b16 %v945, %v943
        %v1182 = vpack.c.b16 %v948, %v946
        %v1183 = vpack.c.b16 %v949, %v947
        %v1184 = vpack.c.b16 %v952, %v950
        %v1185 = vpack.c.b16 %v953, %v951
        %v1186 = vpack.c.b16 %v956, %v954
        %v1187 = vpack.c.b16 %v957, %v955
        %v1188 = vpack.c.b16 %v960, %v958
        %v1189 = vpack.c.b16 %v961, %v959
        %v1190 = vpack.c.b16 %v964, %v962
        %v1191 = vpack.c.b16 %v965, %v963
        %v1192 = vpack.c.b16 %v968, %v966
        %v1193 = vpack.c.b16 %v969, %v967
        %v1194 = vpack.c.b16 %v972, %v970
        %v1195 = vpack.c.b16 %v973, %v971
        %v1196 = vpack.c.b16 %v976, %v974
        %v1197 = vpack.c.b16 %v977, %v975
        %v1198 = vpack.c.b16 %v980, %v978
        %v1199 = vpack.c.b16 %v981, %v979
        %v1200 = vpack.c.b16 %v984, %v982
        %v1201 = vpack.c.b16 %v985, %v983
        %v1202 = vpack.c.b16 %v988, %v986
        %v1203 = vpack.c.b16 %v989, %v987
        %v1204 = vpack.c.b16 %v992, %v990
        %v1205 = vpack.c.b16 %v993, %v991
        %v1206 = vpack.c.b16 %v996, %v994
        %v1207 = vpack.c.b16 %v997, %v995
        %v1208 = vpack.c.b16 %v1000, %v998
        %v1209 = vpack.c.b16 %v1001, %v999
        %v1210 = vpack.c.b16 %v1004, %v1002
        %v1211 = vpack.c.b16 %v1005, %v1003
        %v1212 = vpack.c.b16 %v1008, %v1006
        %v1213 = vpack.c.b16 %v1009, %v1007
        %v1214 = vpack.c.b16 %v1012, %v1010
        %v1215 = vpack.c.b16 %v1013, %v1011
        %v1216 = vpack.c.b16 %v1016, %v1014
        %v1217 = vpack.c.b16 %v1017, %v1015
        %v1218 = vpack.c.b16 %v1020, %v1018
        %v1219 = vpack.c.b16 %v1021, %v1019
        %v1220 = vpack.c.b16 %v1024, %v1022
        %v1221 = vpack.c.b16 %v1025, %v1023
        %v1222 = vpack.c.b16 %v1028, %v1026
        %v1223 = vpack.c.b16 %v1029, %v1027
        %v1224 = vpack.c.b16 %v1032, %v1030
        %v1225 = vpack.c.b16 %v1033, %v1031
        %v1226 = vpack.c.b16 %v1036, %v1034
        %v1227 = vpack.c.b16 %v1037, %v1035
        %v1228 = vpack.c.b16 %v1040, %v1038
        %v1229 = vpack.c.b16 %v1041, %v1039
        %v1230 = vpack.c.b16 %v1044, %v1042
        %v1231 = vpack.c.b16 %v1045, %v1043
        %v1232 = vpack.c.b16 %v1048, %v1046
        %v1233 = vpack.c.b16 %v1049, %v1047
        %v1234 = vpack.c.b16 %v1052, %v1050
        %v1235 = vpack.c.b16 %v1053, %v1051
        %v1236 = vpack.c.b16 %v1056, %v1054
        %v1237 = vpack.c.b16 %v1057, %v1055
        %v1238 = vpack.c.b16 %v1060, %v1058
        %v1239 = vpack.c.b16 %v1061, %v1059
        %v1240 = vpack.c.b16 %v1064, %v1062
        %v1241 = vpack.c.b16 %v1065, %v1063
        %v1242 = vpack.c.b16 %v1068, %v1066
        %v1243 = vpack.c.b16 %v1069, %v1067
        %v1244 = vpack.c.b16 %v1072, %v1070
        %v1245 = vpack.c.b16 %v1073, %v1071
        %v1246 = vpack.c.b16 %v1076, %v1074
        %v1247 = vpack.c.b16 %v1077, %v1075
        %v1248 = vpack.c.b16 %v1080, %v1078
        %v1249 = vpack.c.b16 %v1081, %v1079
        %v1250 = vpack.c.b16 %v1084, %v1082
        %v1251 = vpack.c.b16 %v1085, %v1083
        %v1252 = vpack.c.b16 %v1088, %v1086
        %v1253 = vpack.c.b16 %v1089, %v1087
        %v1254 = vpack.c.b16 %v1092, %v1090
        %v1255 = vpack.c.b16 %v1093, %v1091
        %v1256 = vpack.c.b16 %v1096, %v1094
        %v1257 = vpack.c.b16 %v1097, %v1095
        %v1258 = vpack.c.b16 %v1100, %v1098
        %v1259 = vpack.c.b16 %v1101, %v1099
        %v1260 = vpack.c.b16 %v1104, %v1102
        %v1261 = vpack.c.b16 %v1105, %v1103
        %v1262 = vpack.c.b16 %v1108, %v1106
        %v1263 = vpack.c.b16 %v1109, %v1107
        %v1264 = vpack.c.b16 %v1112, %v1110
        %v1265 = vpack.c.b16 %v1113, %v1111
        %v1266 = vpack.c.b16 %v1116, %v1114
        %v1267 = vpack.c.b16 %v1117, %v1115
        %v1268 = vpack.c.b16 %v1120, %v1118
        %v1269 = vpack.c.b16 %v1121, %v1119
        %v1270 = vpack.c.b16 %v1124, %v1122
        %v1271 = vpack.c.b16 %v1125, %v1123
        %v1272 = vpack.c.b16 %v1128, %v1126
        %v1273 = vpack.c.b16 %v1129, %v1127
        %v1274 = vpack.c.b16 %v1132, %v1130
        %v1275 = vpack.c.b16 %v1133, %v1131
        %v1276 = vpack.c.b16 %v1136, %v1134
        %v1277 = vpack.c.b16 %v1137, %v1135
        %v1278 = vpack.c.b16 %v1140, %v1138
        %v1279 = vpack.c.b16 %v1141, %v1139
        %v1280 = vpack.c.b16 %v1144, %v1142
        %v1281 = vpack.c.b16 %v1145, %v1143
        %v1282 = vpack.c.b16 %v1148, %v1146
        %v1283 = vpack.c.b16 %v1149, %v1147
        %v1284 = vpack.c.b16 %v1152, %v1150
        %v1285 = vpack.c.b16 %v1153, %v1151
        %v1286 = vpack.c.b16 %v1156, %v1154
        %v1287 = vpack.c.b16 %v1157, %v1155
        %v1288 = vpack.c.b16 %v1160, %v1158
        %v1289 = vpack.c.b16 %v1161, %v1159
        %v1450 = vunpack.c.l.b16 %v746
        %v1451 = vunpack.c.l.b16 %v747
        %v1452 = vunpack.c.l.b16 %v748
        %v1453 = vunpack.c.l.b16 %v749
        %v1454 = vunpack.c.l.b16 %v750
        %v1455 = vunpack.c.l.b16 %v751
        %v1456 = vunpack.c.l.b16 %v752
        %v1457 = vunpack.c.l.b16 %v753
        %v1458 = vunpack.c.l.b16 %v754
        %v1459 = vunpack.c.l.b16 %v755
        %v1460 = vunpack.c.l.b16 %v756
        %v1461 = vunpack.c.l.b16 %v757
        %v1462 = vunpack.c.l.b16 %v758
        %v1463 = vunpack.c.l.b16 %v759
        %v1464 = vunpack.c.l.b16 %v760
        %v1465 = vunpack.c.l.b16 %v761
        %v1466 = vunpack.c.l.b16 %v762
        %v1467 = vunpack.c.l.b16 %v763
        %v1468 = vunpack.c.l.b16 %v764
        %v1469 = vunpack.c.l.b16 %v765
        %v1470 = vunpack.c.l.b16 %v766
        %v1471 = vunpack.c.l.b16 %v767
        %v1472 = vunpack.c.l.b16 %v768
        %v1473 = vunpack.c.l.b16 %v769
        %v1474 = vunpack.c.l.b16 %v770
        %v1475 = vunpack.c.l.b16 %v771
        %v1476 = vunpack.c.l.b16 %v772
        %v1477 = vunpack.c.l.b16 %v773
        %v1478 = vunpack.c.l.b16 %v774
        %v1479 = vunpack.c.l.b16 %v775
        %v1480 = vunpack.c.l.b16 %v776
        %v1481 = vunpack.c.l.b16 %v777
        %v1482 = vpack.c.b16 %v1451, %v1450
        %v1483 = vpack.c.b16 %v1453, %v1452
        %v1484 = vpack.c.b16 %v1455, %v1454
        %v1485 = vpack.c.b16 %v1457, %v1456
        %v1486 = vpack.c.b16 %v1459, %v1458
        %v1487 = vpack.c.b16 %v1461, %v1460
        %v1488 = vpack.c.b16 %v1463, %v1462
        %v1489 = vpack.c.b16 %v1465, %v1464
        %v1490 = vpack.c.b16 %v1467, %v1466
        %v1491 = vpack.c.b16 %v1469, %v1468
        %v1492 = vpack.c.b16 %v1471, %v1470
        %v1493 = vpack.c.b16 %v1473, %v1472
        %v1494 = vpack.c.b16 %v1475, %v1474
        %v1495 = vpack.c.b16 %v1477, %v1476
        %v1496 = vpack.c.b16 %v1479, %v1478
        %v1497 = vpack.c.b16 %v1481, %v1480
        %1514 = vmatpush.bf16.msra.mxu0 %v1489
        %1515 = vmatpush.bf16.msra.mxu0 %v1488
        %1516 = vmatpush.bf16.msra.mxu0 %v1487
        %1517 = vmatpush.bf16.msra.mxu0 %v1486
        %1518 = vmatpush.bf16.msra.mxu0 %v1485
        %1519 = vmatpush.bf16.msra.mxu0 %v1484
        %1520 = vmatpush.bf16.msra.mxu0 %v1483
        %1521 = vmatpush.bf16.msra.mxu0 %v1482
        %1522 = vmatmul.bf16.gmra.mxu0 %v1162
        %v1523 = vpop.f32.mrf.mxu0
        %v1524 = vadd.f32 0.0, %v1523
        %v1525 = vpop.f32.mrf.mxu0
        %v1526 = vadd.f32 0.0, %v1525
        %1527 = vmatmul.bf16.gmra.mxu0 %v1164
        %v1528 = vpop.f32.mrf.mxu0
        %v1529 = vadd.f32 0.0, %v1528
        %v1530 = vpop.f32.mrf.mxu0
        %v1531 = vadd.f32 0.0, %v1530
        %1532 = vmatmul.bf16.gmra.mxu0 %v1166
        %v1533 = vpop.f32.mrf.mxu0
        %v1534 = vadd.f32 0.0, %v1533
        %v1535 = vpop.f32.mrf.mxu0
        %v1536 = vadd.f32 0.0, %v1535
        %1537 = vmatmul.bf16.gmra.mxu0 %v1168
        %v1538 = vpop.f32.mrf.mxu0
        %v1539 = vadd.f32 0.0, %v1538
        %v1540 = vpop.f32.mrf.mxu0
        %v1541 = vadd.f32 0.0, %v1540
        %1542 = vmatmul.bf16.gmra.mxu0 %v1170
        %v1543 = vpop.f32.mrf.mxu0
        %v1544 = vadd.f32 0.0, %v1543
        %v1545 = vpop.f32.mrf.mxu0
        %v1546 = vadd.f32 0.0, %v1545
        %1547 = vmatmul.bf16.gmra.mxu0 %v1172
        %v1548 = vpop.f32.mrf.mxu0
        %v1549 = vadd.f32 0.0, %v1548
        %v1550 = vpop.f32.mrf.mxu0
        %v1551 = vadd.f32 0.0, %v1550
        %1552 = vmatmul.bf16.gmra.mxu0 %v1174
        %v1553 = vpop.f32.mrf.mxu0
        %v1554 = vadd.f32 0.0, %v1553
        %v1555 = vpop.f32.mrf.mxu0
        %v1556 = vadd.f32 0.0, %v1555
        %1557 = vmatmul.bf16.gmra.mxu0 %v1176
        %v1558 = vpop.f32.mrf.mxu0
        %v1559 = vadd.f32 0.0, %v1558
        %v1560 = vpop.f32.mrf.mxu0
        %v1561 = vadd.f32 0.0, %v1560
        %1562 = vmatmul.bf16.gmra.mxu0 %v1178
        %v1563 = vpop.f32.mrf.mxu0
        %v1564 = vadd.f32 0.0, %v1563
        %v1565 = vpop.f32.mrf.mxu0
        %v1566 = vadd.f32 0.0, %v1565
        %1567 = vmatmul.bf16.gmra.mxu0 %v1180
        %v1568 = vpop.f32.mrf.mxu0
        %v1569 = vadd.f32 0.0, %v1568
        %v1570 = vpop.f32.mrf.mxu0
        %v1571 = vadd.f32 0.0, %v1570
        %1572 = vmatmul.bf16.gmra.mxu0 %v1182
        %v1573 = vpop.f32.mrf.mxu0
        %v1574 = vadd.f32 0.0, %v1573
        %v1575 = vpop.f32.mrf.mxu0
        %v1576 = vadd.f32 0.0, %v1575
        %1577 = vmatmul.bf16.gmra.mxu0 %v1184
        %v1578 = vpop.f32.mrf.mxu0
        %v1579 = vadd.f32 0.0, %v1578
        %v1580 = vpop.f32.mrf.mxu0
        %v1581 = vadd.f32 0.0, %v1580
        %1582 = vmatmul.bf16.gmra.mxu0 %v1186
        %v1583 = vpop.f32.mrf.mxu0
        %v1584 = vadd.f32 0.0, %v1583
        %v1585 = vpop.f32.mrf.mxu0
        %v1586 = vadd.f32 0.0, %v1585
        %1587 = vmatmul.bf16.gmra.mxu0 %v1188
        %v1588 = vpop.f32.mrf.mxu0
        %v1589 = vadd.f32 0.0, %v1588
        %v1590 = vpop.f32.mrf.mxu0
        %v1591 = vadd.f32 0.0, %v1590
        %1592 = vmatmul.bf16.gmra.mxu0 %v1190
        %v1593 = vpop.f32.mrf.mxu0
        %v1594 = vadd.f32 0.0, %v1593
        %v1595 = vpop.f32.mrf.mxu0
        %v1596 = vadd.f32 0.0, %v1595
        %1597 = vmatmul.bf16.gmra.mxu0 %v1192
        %v1598 = vpop.f32.mrf.mxu0
        %v1599 = vadd.f32 0.0, %v1598
        %v1600 = vpop.f32.mrf.mxu0
        %v1601 = vadd.f32 0.0, %v1600
        %1602 = vmatmul.bf16.gmra.mxu0 %v1194
        %v1603 = vpop.f32.mrf.mxu0
        %v1604 = vadd.f32 0.0, %v1603
        %v1605 = vpop.f32.mrf.mxu0
        %v1606 = vadd.f32 0.0, %v1605
        %1607 = vmatmul.bf16.gmra.mxu0 %v1196
        %v1608 = vpop.f32.mrf.mxu0
        %v1609 = vadd.f32 0.0, %v1608
        %v1610 = vpop.f32.mrf.mxu0
        %v1611 = vadd.f32 0.0, %v1610
        %1612 = vmatmul.bf16.gmra.mxu0 %v1198
        %v1613 = vpop.f32.mrf.mxu0
        %v1614 = vadd.f32 0.0, %v1613
        %v1615 = vpop.f32.mrf.mxu0
        %v1616 = vadd.f32 0.0, %v1615
        %1617 = vmatmul.bf16.gmra.mxu0 %v1200
        %v1618 = vpop.f32.mrf.mxu0
        %v1619 = vadd.f32 0.0, %v1618
        %v1620 = vpop.f32.mrf.mxu0
        %v1621 = vadd.f32 0.0, %v1620
        %1622 = vmatmul.bf16.gmra.mxu0 %v1202
        %v1623 = vpop.f32.mrf.mxu0
        %v1624 = vadd.f32 0.0, %v1623
        %v1625 = vpop.f32.mrf.mxu0
        %v1626 = vadd.f32 0.0, %v1625
        %1627 = vmatmul.bf16.gmra.mxu0 %v1204
        %v1628 = vpop.f32.mrf.mxu0
        %v1629 = vadd.f32 0.0, %v1628
        %v1630 = vpop.f32.mrf.mxu0
        %v1631 = vadd.f32 0.0, %v1630
        %1632 = vmatmul.bf16.gmra.mxu0 %v1206
        %v1633 = vpop.f32.mrf.mxu0
        %v1634 = vadd.f32 0.0, %v1633
        %v1635 = vpop.f32.mrf.mxu0
        %v1636 = vadd.f32 0.0, %v1635
        %1637 = vmatmul.bf16.gmra.mxu0 %v1208
        %v1638 = vpop.f32.mrf.mxu0
        %v1639 = vadd.f32 0.0, %v1638
        %v1640 = vpop.f32.mrf.mxu0
        %v1641 = vadd.f32 0.0, %v1640
        %1642 = vmatmul.bf16.gmra.mxu0 %v1210
        %v1643 = vpop.f32.mrf.mxu0
        %v1644 = vadd.f32 0.0, %v1643
        %v1645 = vpop.f32.mrf.mxu0
        %v1646 = vadd.f32 0.0, %v1645
        %1647 = vmatmul.bf16.gmra.mxu0 %v1212
        %v1648 = vpop.f32.mrf.mxu0
        %v1649 = vadd.f32 0.0, %v1648
        %v1650 = vpop.f32.mrf.mxu0
        %v1651 = vadd.f32 0.0, %v1650
        %1652 = vmatmul.bf16.gmra.mxu0 %v1214
        %v1653 = vpop.f32.mrf.mxu0
        %v1654 = vadd.f32 0.0, %v1653
        %v1655 = vpop.f32.mrf.mxu0
        %v1656 = vadd.f32 0.0, %v1655
        %1657 = vmatmul.bf16.gmra.mxu0 %v1216
        %v1658 = vpop.f32.mrf.mxu0
        %v1659 = vadd.f32 0.0, %v1658
        %v1660 = vpop.f32.mrf.mxu0
        %v1661 = vadd.f32 0.0, %v1660
        %1662 = vmatmul.bf16.gmra.mxu0 %v1218
        %v1663 = vpop.f32.mrf.mxu0
        %v1664 = vadd.f32 0.0, %v1663
        %v1665 = vpop.f32.mrf.mxu0
        %v1666 = vadd.f32 0.0, %v1665
        %1667 = vmatmul.bf16.gmra.mxu0 %v1220
        %v1668 = vpop.f32.mrf.mxu0
        %v1669 = vadd.f32 0.0, %v1668
        %v1670 = vpop.f32.mrf.mxu0
        %v1671 = vadd.f32 0.0, %v1670
        %1672 = vmatmul.bf16.gmra.mxu0 %v1222
        %v1673 = vpop.f32.mrf.mxu0
        %v1674 = vadd.f32 0.0, %v1673
        %v1675 = vpop.f32.mrf.mxu0
        %v1676 = vadd.f32 0.0, %v1675
        %1677 = vmatmul.bf16.gmra.mxu0 %v1224
        %v1678 = vpop.f32.mrf.mxu0
        %v1679 = vadd.f32 0.0, %v1678
        %v1680 = vpop.f32.mrf.mxu0
        %v1681 = vadd.f32 0.0, %v1680
        %1682 = vmatmul.bf16.gmra.mxu0 %v1226
        %v1683 = vpop.f32.mrf.mxu0
        %v1684 = vadd.f32 0.0, %v1683
        %v1685 = vpop.f32.mrf.mxu0
        %v1686 = vadd.f32 0.0, %v1685
        %1687 = vmatmul.bf16.gmra.mxu0 %v1228
        %v1688 = vpop.f32.mrf.mxu0
        %v1689 = vadd.f32 0.0, %v1688
        %v1690 = vpop.f32.mrf.mxu0
        %v1691 = vadd.f32 0.0, %v1690
        %1692 = vmatmul.bf16.gmra.mxu0 %v1230
        %v1693 = vpop.f32.mrf.mxu0
        %v1694 = vadd.f32 0.0, %v1693
        %v1695 = vpop.f32.mrf.mxu0
        %v1696 = vadd.f32 0.0, %v1695
        %1697 = vmatmul.bf16.gmra.mxu0 %v1232
        %v1698 = vpop.f32.mrf.mxu0
        %v1699 = vadd.f32 0.0, %v1698
        %v1700 = vpop.f32.mrf.mxu0
        %v1701 = vadd.f32 0.0, %v1700
        %1702 = vmatmul.bf16.gmra.mxu0 %v1234
        %v1703 = vpop.f32.mrf.mxu0
        %v1704 = vadd.f32 0.0, %v1703
        %v1705 = vpop.f32.mrf.mxu0
        %v1706 = vadd.f32 0.0, %v1705
        %1707 = vmatmul.bf16.gmra.mxu0 %v1236
        %v1708 = vpop.f32.mrf.mxu0
        %v1709 = vadd.f32 0.0, %v1708
        %v1710 = vpop.f32.mrf.mxu0
        %v1711 = vadd.f32 0.0, %v1710
        %1712 = vmatmul.bf16.gmra.mxu0 %v1238
        %v1713 = vpop.f32.mrf.mxu0
        %v1714 = vadd.f32 0.0, %v1713
        %v1715 = vpop.f32.mrf.mxu0
        %v1716 = vadd.f32 0.0, %v1715
        %1717 = vmatmul.bf16.gmra.mxu0 %v1240
        %v1718 = vpop.f32.mrf.mxu0
        %v1719 = vadd.f32 0.0, %v1718
        %v1720 = vpop.f32.mrf.mxu0
        %v1721 = vadd.f32 0.0, %v1720
        %1722 = vmatmul.bf16.gmra.mxu0 %v1242
        %v1723 = vpop.f32.mrf.mxu0
        %v1724 = vadd.f32 0.0, %v1723
        %v1725 = vpop.f32.mrf.mxu0
        %v1726 = vadd.f32 0.0, %v1725
        %1727 = vmatmul.bf16.gmra.mxu0 %v1244
        %v1728 = vpop.f32.mrf.mxu0
        %v1729 = vadd.f32 0.0, %v1728
        %v1730 = vpop.f32.mrf.mxu0
        %v1731 = vadd.f32 0.0, %v1730
        %1732 = vmatmul.bf16.gmra.mxu0 %v1246
        %v1733 = vpop.f32.mrf.mxu0
        %v1734 = vadd.f32 0.0, %v1733
        %v1735 = vpop.f32.mrf.mxu0
        %v1736 = vadd.f32 0.0, %v1735
        %1737 = vmatmul.bf16.gmra.mxu0 %v1248
        %v1738 = vpop.f32.mrf.mxu0
        %v1739 = vadd.f32 0.0, %v1738
        %v1740 = vpop.f32.mrf.mxu0
        %v1741 = vadd.f32 0.0, %v1740
        %1742 = vmatmul.bf16.gmra.mxu0 %v1250
        %v1743 = vpop.f32.mrf.mxu0
        %v1744 = vadd.f32 0.0, %v1743
        %v1745 = vpop.f32.mrf.mxu0
        %v1746 = vadd.f32 0.0, %v1745
        %1747 = vmatmul.bf16.gmra.mxu0 %v1252
        %v1748 = vpop.f32.mrf.mxu0
        %v1749 = vadd.f32 0.0, %v1748
        %v1750 = vpop.f32.mrf.mxu0
        %v1751 = vadd.f32 0.0, %v1750
        %1752 = vmatmul.bf16.gmra.mxu0 %v1254
        %v1753 = vpop.f32.mrf.mxu0
        %v1754 = vadd.f32 0.0, %v1753
        %v1755 = vpop.f32.mrf.mxu0
        %v1756 = vadd.f32 0.0, %v1755
        %1757 = vmatmul.bf16.gmra.mxu0 %v1256
        %v1758 = vpop.f32.mrf.mxu0
        %v1759 = vadd.f32 0.0, %v1758
        %v1760 = vpop.f32.mrf.mxu0
        %v1761 = vadd.f32 0.0, %v1760
        %1762 = vmatmul.bf16.gmra.mxu0 %v1258
        %v1763 = vpop.f32.mrf.mxu0
        %v1764 = vadd.f32 0.0, %v1763
        %v1765 = vpop.f32.mrf.mxu0
        %v1766 = vadd.f32 0.0, %v1765
        %1767 = vmatmul.bf16.gmra.mxu0 %v1260
        %v1768 = vpop.f32.mrf.mxu0
        %v1769 = vadd.f32 0.0, %v1768
        %v1770 = vpop.f32.mrf.mxu0
        %v1771 = vadd.f32 0.0, %v1770
        %1772 = vmatmul.bf16.gmra.mxu0 %v1262
        %v1773 = vpop.f32.mrf.mxu0
        %v1774 = vadd.f32 0.0, %v1773
        %v1775 = vpop.f32.mrf.mxu0
        %v1776 = vadd.f32 0.0, %v1775
        %1777 = vmatmul.bf16.gmra.mxu0 %v1264
        %v1778 = vpop.f32.mrf.mxu0
        %v1779 = vadd.f32 0.0, %v1778
        %v1780 = vpop.f32.mrf.mxu0
        %v1781 = vadd.f32 0.0, %v1780
        %1782 = vmatmul.bf16.gmra.mxu0 %v1266
        %v1783 = vpop.f32.mrf.mxu0
        %v1784 = vadd.f32 0.0, %v1783
        %v1785 = vpop.f32.mrf.mxu0
        %v1786 = vadd.f32 0.0, %v1785
        %1787 = vmatmul.bf16.gmra.mxu0 %v1268
        %v1788 = vpop.f32.mrf.mxu0
        %v1789 = vadd.f32 0.0, %v1788
        %v1790 = vpop.f32.mrf.mxu0
        %v1791 = vadd.f32 0.0, %v1790
        %1792 = vmatmul.bf16.gmra.mxu0 %v1270
        %v1793 = vpop.f32.mrf.mxu0
        %v1794 = vadd.f32 0.0, %v1793
        %v1795 = vpop.f32.mrf.mxu0
        %v1796 = vadd.f32 0.0, %v1795
        %1797 = vmatmul.bf16.gmra.mxu0 %v1272
        %v1798 = vpop.f32.mrf.mxu0
        %v1799 = vadd.f32 0.0, %v1798
        %v1800 = vpop.f32.mrf.mxu0
        %v1801 = vadd.f32 0.0, %v1800
        %1802 = vmatmul.bf16.gmra.mxu0 %v1274
        %v1803 = vpop.f32.mrf.mxu0
        %v1804 = vadd.f32 0.0, %v1803
        %v1805 = vpop.f32.mrf.mxu0
        %v1806 = vadd.f32 0.0, %v1805
        %1807 = vmatmul.bf16.gmra.mxu0 %v1276
        %v1808 = vpop.f32.mrf.mxu0
        %v1809 = vadd.f32 0.0, %v1808
        %v1810 = vpop.f32.mrf.mxu0
        %v1811 = vadd.f32 0.0, %v1810
        %1812 = vmatmul.bf16.gmra.mxu0 %v1278
        %v1813 = vpop.f32.mrf.mxu0
        %v1814 = vadd.f32 0.0, %v1813
        %v1815 = vpop.f32.mrf.mxu0
        %v1816 = vadd.f32 0.0, %v1815
        %1817 = vmatmul.bf16.gmra.mxu0 %v1280
        %v1818 = vpop.f32.mrf.mxu0
        %v1819 = vadd.f32 0.0, %v1818
        %v1820 = vpop.f32.mrf.mxu0
        %v1821 = vadd.f32 0.0, %v1820
        %1822 = vmatmul.bf16.gmra.mxu0 %v1282
        %v1823 = vpop.f32.mrf.mxu0
        %v1824 = vadd.f32 0.0, %v1823
        %v1825 = vpop.f32.mrf.mxu0
        %v1826 = vadd.f32 0.0, %v1825
        %1827 = vmatmul.bf16.gmra.mxu0 %v1284
        %v1828 = vpop.f32.mrf.mxu0
        %v1829 = vadd.f32 0.0, %v1828
        %v1830 = vpop.f32.mrf.mxu0
        %v1831 = vadd.f32 0.0, %v1830
        %1832 = vmatmul.bf16.gmra.mxu0 %v1286
        %v1833 = vpop.f32.mrf.mxu0
        %v1834 = vadd.f32 0.0, %v1833
        %v1835 = vpop.f32.mrf.mxu0
        %v1836 = vadd.f32 0.0, %v1835
        %1837 = vmatmul.bf16.gmra.mxu0 %v1288
        %v1838 = vpop.f32.mrf.mxu0
        %v1839 = vadd.f32 0.0, %v1838
        %v1840 = vpop.f32.mrf.mxu0
        %v1841 = vadd.f32 0.0, %v1840
        %1842 = vdwg.mxu0
        %1843 = vmatpush.bf16.msra.mxu0 %v1497
        %1844 = vmatpush.bf16.msra.mxu0 %v1496
        %1845 = vmatpush.bf16.msra.mxu0 %v1495
        %1846 = vmatpush.bf16.msra.mxu0 %v1494
        %1847 = vmatpush.bf16.msra.mxu0 %v1493
        %1848 = vmatpush.bf16.msra.mxu0 %v1492
        %1849 = vmatpush.bf16.msra.mxu0 %v1491
        %1850 = vmatpush.bf16.msra.mxu0 %v1490
        %1851 = vmatmul.bf16.gmra.mxu0 %v1163
        %v1852 = vpop.f32.mrf.mxu0
        %v1853 = vadd.f32 %v1524, %v1852
        %v1854 = vpop.f32.mrf.mxu0
        %v1855 = vadd.f32 %v1526, %v1854
        %1856 = vmatmul.bf16.gmra.mxu0 %v1165
        %v1857 = vpop.f32.mrf.mxu0
        %v1858 = vadd.f32 %v1529, %v1857
        %v1859 = vpop.f32.mrf.mxu0
        %v1860 = vadd.f32 %v1531, %v1859
        %1861 = vmatmul.bf16.gmra.mxu0 %v1167
        %v1862 = vpop.f32.mrf.mxu0
        %v1863 = vadd.f32 %v1534, %v1862
        %v1864 = vpop.f32.mrf.mxu0
        %v1865 = vadd.f32 %v1536, %v1864
        %1866 = vmatmul.bf16.gmra.mxu0 %v1169
        %v1867 = vpop.f32.mrf.mxu0
        %v1868 = vadd.f32 %v1539, %v1867
        %v1869 = vpop.f32.mrf.mxu0
        %v1870 = vadd.f32 %v1541, %v1869
        %1871 = vmatmul.bf16.gmra.mxu0 %v1171
        %v1872 = vpop.f32.mrf.mxu0
        %v1873 = vadd.f32 %v1544, %v1872
        %v1874 = vpop.f32.mrf.mxu0
        %v1875 = vadd.f32 %v1546, %v1874
        %1876 = vmatmul.bf16.gmra.mxu0 %v1173
        %v1877 = vpop.f32.mrf.mxu0
        %v1878 = vadd.f32 %v1549, %v1877
        %v1879 = vpop.f32.mrf.mxu0
        %v1880 = vadd.f32 %v1551, %v1879
        %1881 = vmatmul.bf16.gmra.mxu0 %v1175
        %v1882 = vpop.f32.mrf.mxu0
        %v1883 = vadd.f32 %v1554, %v1882
        %v1884 = vpop.f32.mrf.mxu0
        %v1885 = vadd.f32 %v1556, %v1884
        %1886 = vmatmul.bf16.gmra.mxu0 %v1177
        %v1887 = vpop.f32.mrf.mxu0
        %v1888 = vadd.f32 %v1559, %v1887
        %v1889 = vpop.f32.mrf.mxu0
        %v1890 = vadd.f32 %v1561, %v1889
        %1891 = vmatmul.bf16.gmra.mxu0 %v1179
        %v1892 = vpop.f32.mrf.mxu0
        %v1893 = vadd.f32 %v1564, %v1892
        %v1894 = vpop.f32.mrf.mxu0
        %v1895 = vadd.f32 %v1566, %v1894
        %1896 = vmatmul.bf16.gmra.mxu0 %v1181
        %v1897 = vpop.f32.mrf.mxu0
        %v1898 = vadd.f32 %v1569, %v1897
        %v1899 = vpop.f32.mrf.mxu0
        %v1900 = vadd.f32 %v1571, %v1899
        %1901 = vmatmul.bf16.gmra.mxu0 %v1183
        %v1902 = vpop.f32.mrf.mxu0
        %v1903 = vadd.f32 %v1574, %v1902
        %v1904 = vpop.f32.mrf.mxu0
        %v1905 = vadd.f32 %v1576, %v1904
        %1906 = vmatmul.bf16.gmra.mxu0 %v1185
        %v1907 = vpop.f32.mrf.mxu0
        %v1908 = vadd.f32 %v1579, %v1907
        %v1909 = vpop.f32.mrf.mxu0
        %v1910 = vadd.f32 %v1581, %v1909
        %1911 = vmatmul.bf16.gmra.mxu0 %v1187
        %v1912 = vpop.f32.mrf.mxu0
        %v1913 = vadd.f32 %v1584, %v1912
        %v1914 = vpop.f32.mrf.mxu0
        %v1915 = vadd.f32 %v1586, %v1914
        %1916 = vmatmul.bf16.gmra.mxu0 %v1189
        %v1917 = vpop.f32.mrf.mxu0
        %v1918 = vadd.f32 %v1589, %v1917
        %v1919 = vpop.f32.mrf.mxu0
        %v1920 = vadd.f32 %v1591, %v1919
        %1921 = vmatmul.bf16.gmra.mxu0 %v1191
        %v1922 = vpop.f32.mrf.mxu0
        %v1923 = vadd.f32 %v1594, %v1922
        %v1924 = vpop.f32.mrf.mxu0
        %v1925 = vadd.f32 %v1596, %v1924
        %1926 = vmatmul.bf16.gmra.mxu0 %v1193
        %v1927 = vpop.f32.mrf.mxu0
        %v1928 = vadd.f32 %v1599, %v1927
        %v1929 = vpop.f32.mrf.mxu0
        %v1930 = vadd.f32 %v1601, %v1929
        %1931 = vmatmul.bf16.gmra.mxu0 %v1195
        %v1932 = vpop.f32.mrf.mxu0
        %v1933 = vadd.f32 %v1604, %v1932
        %v1934 = vpop.f32.mrf.mxu0
        %v1935 = vadd.f32 %v1606, %v1934
        %1936 = vmatmul.bf16.gmra.mxu0 %v1197
        %v1937 = vpop.f32.mrf.mxu0
        %v1938 = vadd.f32 %v1609, %v1937
        %v1939 = vpop.f32.mrf.mxu0
        %v1940 = vadd.f32 %v1611, %v1939
        %1941 = vmatmul.bf16.gmra.mxu0 %v1199
        %v1942 = vpop.f32.mrf.mxu0
        %v1943 = vadd.f32 %v1614, %v1942
        %v1944 = vpop.f32.mrf.mxu0
        %v1945 = vadd.f32 %v1616, %v1944
        %1946 = vmatmul.bf16.gmra.mxu0 %v1201
        %v1947 = vpop.f32.mrf.mxu0
        %v1948 = vadd.f32 %v1619, %v1947
        %v1949 = vpop.f32.mrf.mxu0
        %v1950 = vadd.f32 %v1621, %v1949
        %1951 = vmatmul.bf16.gmra.mxu0 %v1203
        %v1952 = vpop.f32.mrf.mxu0
        %v1953 = vadd.f32 %v1624, %v1952
        %v1954 = vpop.f32.mrf.mxu0
        %v1955 = vadd.f32 %v1626, %v1954
        %1956 = vmatmul.bf16.gmra.mxu0 %v1205
        %v1957 = vpop.f32.mrf.mxu0
        %v1958 = vadd.f32 %v1629, %v1957
        %v1959 = vpop.f32.mrf.mxu0
        %v1960 = vadd.f32 %v1631, %v1959
        %1961 = vmatmul.bf16.gmra.mxu0 %v1207
        %v1962 = vpop.f32.mrf.mxu0
        %v1963 = vadd.f32 %v1634, %v1962
        %v1964 = vpop.f32.mrf.mxu0
        %v1965 = vadd.f32 %v1636, %v1964
        %1966 = vmatmul.bf16.gmra.mxu0 %v1209
        %v1967 = vpop.f32.mrf.mxu0
        %v1968 = vadd.f32 %v1639, %v1967
        %v1969 = vpop.f32.mrf.mxu0
        %v1970 = vadd.f32 %v1641, %v1969
        %1971 = vmatmul.bf16.gmra.mxu0 %v1211
        %v1972 = vpop.f32.mrf.mxu0
        %v1973 = vadd.f32 %v1644, %v1972
        %v1974 = vpop.f32.mrf.mxu0
        %v1975 = vadd.f32 %v1646, %v1974
        %1976 = vmatmul.bf16.gmra.mxu0 %v1213
        %v1977 = vpop.f32.mrf.mxu0
        %v1978 = vadd.f32 %v1649, %v1977
        %v1979 = vpop.f32.mrf.mxu0
        %v1980 = vadd.f32 %v1651, %v1979
        %1981 = vmatmul.bf16.gmra.mxu0 %v1215
        %v1982 = vpop.f32.mrf.mxu0
        %v1983 = vadd.f32 %v1654, %v1982
        %v1984 = vpop.f32.mrf.mxu0
        %v1985 = vadd.f32 %v1656, %v1984
        %1986 = vmatmul.bf16.gmra.mxu0 %v1217
        %v1987 = vpop.f32.mrf.mxu0
        %v1988 = vadd.f32 %v1659, %v1987
        %v1989 = vpop.f32.mrf.mxu0
        %v1990 = vadd.f32 %v1661, %v1989
        %1991 = vmatmul.bf16.gmra.mxu0 %v1219
        %v1992 = vpop.f32.mrf.mxu0
        %v1993 = vadd.f32 %v1664, %v1992
        %v1994 = vpop.f32.mrf.mxu0
        %v1995 = vadd.f32 %v1666, %v1994
        %1996 = vmatmul.bf16.gmra.mxu0 %v1221
        %v1997 = vpop.f32.mrf.mxu0
        %v1998 = vadd.f32 %v1669, %v1997
        %v1999 = vpop.f32.mrf.mxu0
        %v2000 = vadd.f32 %v1671, %v1999
        %2001 = vmatmul.bf16.gmra.mxu0 %v1223
        %v2002 = vpop.f32.mrf.mxu0
        %v2003 = vadd.f32 %v1674, %v2002
        %v2004 = vpop.f32.mrf.mxu0
        %v2005 = vadd.f32 %v1676, %v2004
        %2006 = vmatmul.bf16.gmra.mxu0 %v1225
        %v2007 = vpop.f32.mrf.mxu0
        %v2008 = vadd.f32 %v1679, %v2007
        %v2009 = vpop.f32.mrf.mxu0
        %v2010 = vadd.f32 %v1681, %v2009
        %2011 = vmatmul.bf16.gmra.mxu0 %v1227
        %v2012 = vpop.f32.mrf.mxu0
        %v2013 = vadd.f32 %v1684, %v2012
        %v2014 = vpop.f32.mrf.mxu0
        %v2015 = vadd.f32 %v1686, %v2014
        %2016 = vmatmul.bf16.gmra.mxu0 %v1229
        %v2017 = vpop.f32.mrf.mxu0
        %v2018 = vadd.f32 %v1689, %v2017
        %v2019 = vpop.f32.mrf.mxu0
        %v2020 = vadd.f32 %v1691, %v2019
        %2021 = vmatmul.bf16.gmra.mxu0 %v1231
        %v2022 = vpop.f32.mrf.mxu0
        %v2023 = vadd.f32 %v1694, %v2022
        %v2024 = vpop.f32.mrf.mxu0
        %v2025 = vadd.f32 %v1696, %v2024
        %2026 = vmatmul.bf16.gmra.mxu0 %v1233
        %v2027 = vpop.f32.mrf.mxu0
        %v2028 = vadd.f32 %v1699, %v2027
        %v2029 = vpop.f32.mrf.mxu0
        %v2030 = vadd.f32 %v1701, %v2029
        %2031 = vmatmul.bf16.gmra.mxu0 %v1235
        %v2032 = vpop.f32.mrf.mxu0
        %v2033 = vadd.f32 %v1704, %v2032
        %v2034 = vpop.f32.mrf.mxu0
        %v2035 = vadd.f32 %v1706, %v2034
        %2036 = vmatmul.bf16.gmra.mxu0 %v1237
        %v2037 = vpop.f32.mrf.mxu0
        %v2038 = vadd.f32 %v1709, %v2037
        %v2039 = vpop.f32.mrf.mxu0
        %v2040 = vadd.f32 %v1711, %v2039
        %2041 = vmatmul.bf16.gmra.mxu0 %v1239
        %v2042 = vpop.f32.mrf.mxu0
        %v2043 = vadd.f32 %v1714, %v2042
        %v2044 = vpop.f32.mrf.mxu0
        %v2045 = vadd.f32 %v1716, %v2044
        %2046 = vmatmul.bf16.gmra.mxu0 %v1241
        %v2047 = vpop.f32.mrf.mxu0
        %v2048 = vadd.f32 %v1719, %v2047
        %v2049 = vpop.f32.mrf.mxu0
        %v2050 = vadd.f32 %v1721, %v2049
        %2051 = vmatmul.bf16.gmra.mxu0 %v1243
        %v2052 = vpop.f32.mrf.mxu0
        %v2053 = vadd.f32 %v1724, %v2052
        %v2054 = vpop.f32.mrf.mxu0
        %v2055 = vadd.f32 %v1726, %v2054
        %2056 = vmatmul.bf16.gmra.mxu0 %v1245
        %v2057 = vpop.f32.mrf.mxu0
        %v2058 = vadd.f32 %v1729, %v2057
        %v2059 = vpop.f32.mrf.mxu0
        %v2060 = vadd.f32 %v1731, %v2059
        %2061 = vmatmul.bf16.gmra.mxu0 %v1247
        %v2062 = vpop.f32.mrf.mxu0
        %v2063 = vadd.f32 %v1734, %v2062
        %v2064 = vpop.f32.mrf.mxu0
        %v2065 = vadd.f32 %v1736, %v2064
        %2066 = vmatmul.bf16.gmra.mxu0 %v1249
        %v2067 = vpop.f32.mrf.mxu0
        %v2068 = vadd.f32 %v1739, %v2067
        %v2069 = vpop.f32.mrf.mxu0
        %v2070 = vadd.f32 %v1741, %v2069
        %2071 = vmatmul.bf16.gmra.mxu0 %v1251
        %v2072 = vpop.f32.mrf.mxu0
        %v2073 = vadd.f32 %v1744, %v2072
        %v2074 = vpop.f32.mrf.mxu0
        %v2075 = vadd.f32 %v1746, %v2074
        %2076 = vmatmul.bf16.gmra.mxu0 %v1253
        %v2077 = vpop.f32.mrf.mxu0
        %v2078 = vadd.f32 %v1749, %v2077
        %v2079 = vpop.f32.mrf.mxu0
        %v2080 = vadd.f32 %v1751, %v2079
        %2081 = vmatmul.bf16.gmra.mxu0 %v1255
        %v2082 = vpop.f32.mrf.mxu0
        %v2083 = vadd.f32 %v1754, %v2082
        %v2084 = vpop.f32.mrf.mxu0
        %v2085 = vadd.f32 %v1756, %v2084
        %2086 = vmatmul.bf16.gmra.mxu0 %v1257
        %v2087 = vpop.f32.mrf.mxu0
        %v2088 = vadd.f32 %v1759, %v2087
        %v2089 = vpop.f32.mrf.mxu0
        %v2090 = vadd.f32 %v1761, %v2089
        %2091 = vmatmul.bf16.gmra.mxu0 %v1259
        %v2092 = vpop.f32.mrf.mxu0
        %v2093 = vadd.f32 %v1764, %v2092
        %v2094 = vpop.f32.mrf.mxu0
        %v2095 = vadd.f32 %v1766, %v2094
        %2096 = vmatmul.bf16.gmra.mxu0 %v1261
        %v2097 = vpop.f32.mrf.mxu0
        %v2098 = vadd.f32 %v1769, %v2097
        %v2099 = vpop.f32.mrf.mxu0
        %v2100 = vadd.f32 %v1771, %v2099
        %2101 = vmatmul.bf16.gmra.mxu0 %v1263
        %v2102 = vpop.f32.mrf.mxu0
        %v2103 = vadd.f32 %v1774, %v2102
        %v2104 = vpop.f32.mrf.mxu0
        %v2105 = vadd.f32 %v1776, %v2104
        %2106 = vmatmul.bf16.gmra.mxu0 %v1265
        %v2107 = vpop.f32.mrf.mxu0
        %v2108 = vadd.f32 %v1779, %v2107
        %v2109 = vpop.f32.mrf.mxu0
        %v2110 = vadd.f32 %v1781, %v2109
        %2111 = vmatmul.bf16.gmra.mxu0 %v1267
        %v2112 = vpop.f32.mrf.mxu0
        %v2113 = vadd.f32 %v1784, %v2112
        %v2114 = vpop.f32.mrf.mxu0
        %v2115 = vadd.f32 %v1786, %v2114
        %2116 = vmatmul.bf16.gmra.mxu0 %v1269
        %v2117 = vpop.f32.mrf.mxu0
        %v2118 = vadd.f32 %v1789, %v2117
        %v2119 = vpop.f32.mrf.mxu0
        %v2120 = vadd.f32 %v1791, %v2119
        %2121 = vmatmul.bf16.gmra.mxu0 %v1271
        %v2122 = vpop.f32.mrf.mxu0
        %v2123 = vadd.f32 %v1794, %v2122
        %v2124 = vpop.f32.mrf.mxu0
        %v2125 = vadd.f32 %v1796, %v2124
        %2126 = vmatmul.bf16.gmra.mxu0 %v1273
        %v2127 = vpop.f32.mrf.mxu0
        %v2128 = vadd.f32 %v1799, %v2127
        %v2129 = vpop.f32.mrf.mxu0
        %v2130 = vadd.f32 %v1801, %v2129
        %2131 = vmatmul.bf16.gmra.mxu0 %v1275
        %v2132 = vpop.f32.mrf.mxu0
        %v2133 = vadd.f32 %v1804, %v2132
        %v2134 = vpop.f32.mrf.mxu0
        %v2135 = vadd.f32 %v1806, %v2134
        %2136 = vmatmul.bf16.gmra.mxu0 %v1277
        %v2137 = vpop.f32.mrf.mxu0
        %v2138 = vadd.f32 %v1809, %v2137
        %v2139 = vpop.f32.mrf.mxu0
        %v2140 = vadd.f32 %v1811, %v2139
        %2141 = vmatmul.bf16.gmra.mxu0 %v1279
        %v2142 = vpop.f32.mrf.mxu0
        %v2143 = vadd.f32 %v1814, %v2142
        %v2144 = vpop.f32.mrf.mxu0
        %v2145 = vadd.f32 %v1816, %v2144
        %2146 = vmatmul.bf16.gmra.mxu0 %v1281
        %v2147 = vpop.f32.mrf.mxu0
        %v2148 = vadd.f32 %v1819, %v2147
        %v2149 = vpop.f32.mrf.mxu0
        %v2150 = vadd.f32 %v1821, %v2149
        %2151 = vmatmul.bf16.gmra.mxu0 %v1283
        %v2152 = vpop.f32.mrf.mxu0
        %v2153 = vadd.f32 %v1824, %v2152
        %v2154 = vpop.f32.mrf.mxu0
        %v2155 = vadd.f32 %v1826, %v2154
        %2156 = vmatmul.bf16.gmra.mxu0 %v1285
        %v2157 = vpop.f32.mrf.mxu0
        %v2158 = vadd.f32 %v1829, %v2157
        %v2159 = vpop.f32.mrf.mxu0
        %v2160 = vadd.f32 %v1831, %v2159
        %2161 = vmatmul.bf16.gmra.mxu0 %v1287
        %v2162 = vpop.f32.mrf.mxu0
        %v2163 = vadd.f32 %v1834, %v2162
        %v2164 = vpop.f32.mrf.mxu0
        %v2165 = vadd.f32 %v1836, %v2164
        %2166 = vmatmul.bf16.gmra.mxu0 %v1289
        %v2167 = vpop.f32.mrf.mxu0
        %v2168 = vadd.f32 %v1839, %v2167
        %v2169 = vpop.f32.mrf.mxu0
        %v2170 = vadd.f32 %v1841, %v2169
        %2171 = vdwg.mxu0
        %v2172 = vld [vmem:[#allocation2] sm:$0xff]
        %v2174 = vrot.slane %v2172, 1
        %v2175 = vrot.slane %v2172, 2
        %v2176 = vrot.slane %v2172, 3
        %v2177 = vrot.slane %v2172, 4
        %v2178 = vrot.slane %v2172, 5
        %v2179 = vrot.slane %v2172, 6
        %v2180 = vrot.slane %v2172, 7
        %v2181 = vperm.slane %v2172, 0
        %v2182 = vperm.slane %v2174, 0
        %v2183 = vperm.slane %v2175, 0
        %v2184 = vperm.slane %v2176, 0
        %v2185 = vperm.slane %v2177, 0
        %v2186 = vperm.slane %v2178, 0
        %v2187 = vperm.slane %v2179, 0
        %v2188 = vperm.slane %v2180, 0
        %v2197 = vadd.f32 %v1853, %v2181
        %v2198 = vadd.f32 %v1855, %v2181
        %v2199 = vadd.f32 %v1858, %v2181
        %v2200 = vadd.f32 %v1860, %v2181
        %v2201 = vadd.f32 %v1863, %v2181
        %v2202 = vadd.f32 %v1865, %v2181
        %v2203 = vadd.f32 %v1868, %v2181
        %v2204 = vadd.f32 %v1870, %v2181
        %v2205 = vadd.f32 %v1873, %v2181
        %v2206 = vadd.f32 %v1875, %v2181
        %v2207 = vadd.f32 %v1878, %v2181
        %v2208 = vadd.f32 %v1880, %v2181
        %v2209 = vadd.f32 %v1883, %v2181
        %v2210 = vadd.f32 %v1885, %v2181
        %v2211 = vadd.f32 %v1888, %v2181
        %v2212 = vadd.f32 %v1890, %v2181
        %v2213 = vadd.f32 %v1893, %v2182
        %v2214 = vadd.f32 %v1895, %v2182
        %v2215 = vadd.f32 %v1898, %v2182
        %v2216 = vadd.f32 %v1900, %v2182
        %v2217 = vadd.f32 %v1903, %v2182
        %v2218 = vadd.f32 %v1905, %v2182
        %v2219 = vadd.f32 %v1908, %v2182
        %v2220 = vadd.f32 %v1910, %v2182
        %v2221 = vadd.f32 %v1913, %v2182
        %v2222 = vadd.f32 %v1915, %v2182
        %v2223 = vadd.f32 %v1918, %v2182
        %v2224 = vadd.f32 %v1920, %v2182
        %v2225 = vadd.f32 %v1923, %v2182
        %v2226 = vadd.f32 %v1925, %v2182
        %v2227 = vadd.f32 %v1928, %v2182
        %v2228 = vadd.f32 %v1930, %v2182
        %v2229 = vadd.f32 %v1933, %v2183
        %v2230 = vadd.f32 %v1935, %v2183
        %v2231 = vadd.f32 %v1938, %v2183
        %v2232 = vadd.f32 %v1940, %v2183
        %v2233 = vadd.f32 %v1943, %v2183
        %v2234 = vadd.f32 %v1945, %v2183
        %v2235 = vadd.f32 %v1948, %v2183
        %v2236 = vadd.f32 %v1950, %v2183
        %v2237 = vadd.f32 %v1953, %v2183
        %v2238 = vadd.f32 %v1955, %v2183
        %v2239 = vadd.f32 %v1958, %v2183
        %v2240 = vadd.f32 %v1960, %v2183
        %v2241 = vadd.f32 %v1963, %v2183
        %v2242 = vadd.f32 %v1965, %v2183
        %v2243 = vadd.f32 %v1968, %v2183
        %v2244 = vadd.f32 %v1970, %v2183
        %v2245 = vadd.f32 %v1973, %v2184
        %v2246 = vadd.f32 %v1975, %v2184
        %v2247 = vadd.f32 %v1978, %v2184
        %v2248 = vadd.f32 %v1980, %v2184
        %v2249 = vadd.f32 %v1983, %v2184
        %v2250 = vadd.f32 %v1985, %v2184
        %v2251 = vadd.f32 %v1988, %v2184
        %v2252 = vadd.f32 %v1990, %v2184
        %v2253 = vadd.f32 %v1993, %v2184
        %v2254 = vadd.f32 %v1995, %v2184
        %v2255 = vadd.f32 %v1998, %v2184
        %v2256 = vadd.f32 %v2000, %v2184
        %v2257 = vadd.f32 %v2003, %v2184
        %v2258 = vadd.f32 %v2005, %v2184
        %v2259 = vadd.f32 %v2008, %v2184
        %v2260 = vadd.f32 %v2010, %v2184
        %v2261 = vadd.f32 %v2013, %v2185
        %v2262 = vadd.f32 %v2015, %v2185
        %v2263 = vadd.f32 %v2018, %v2185
        %v2264 = vadd.f32 %v2020, %v2185
        %v2265 = vadd.f32 %v2023, %v2185
        %v2266 = vadd.f32 %v2025, %v2185
        %v2267 = vadd.f32 %v2028, %v2185
        %v2268 = vadd.f32 %v2030, %v2185
        %v2269 = vadd.f32 %v2033, %v2185
        %v2270 = vadd.f32 %v2035, %v2185
        %v2271 = vadd.f32 %v2038, %v2185
        %v2272 = vadd.f32 %v2040, %v2185
        %v2273 = vadd.f32 %v2043, %v2185
        %v2274 = vadd.f32 %v2045, %v2185
        %v2275 = vadd.f32 %v2048, %v2185
        %v2276 = vadd.f32 %v2050, %v2185
        %v2277 = vadd.f32 %v2053, %v2186
        %v2278 = vadd.f32 %v2055, %v2186
        %v2279 = vadd.f32 %v2058, %v2186
        %v2280 = vadd.f32 %v2060, %v2186
        %v2281 = vadd.f32 %v2063, %v2186
        %v2282 = vadd.f32 %v2065, %v2186
        %v2283 = vadd.f32 %v2068, %v2186
        %v2284 = vadd.f32 %v2070, %v2186
        %v2285 = vadd.f32 %v2073, %v2186
        %v2286 = vadd.f32 %v2075, %v2186
        %v2287 = vadd.f32 %v2078, %v2186
        %v2288 = vadd.f32 %v2080, %v2186
        %v2289 = vadd.f32 %v2083, %v2186
        %v2290 = vadd.f32 %v2085, %v2186
        %v2291 = vadd.f32 %v2088, %v2186
        %v2292 = vadd.f32 %v2090, %v2186
        %v2293 = vadd.f32 %v2093, %v2187
        %v2294 = vadd.f32 %v2095, %v2187
        %v2295 = vadd.f32 %v2098, %v2187
        %v2296 = vadd.f32 %v2100, %v2187
        %v2297 = vadd.f32 %v2103, %v2187
        %v2298 = vadd.f32 %v2105, %v2187
        %v2299 = vadd.f32 %v2108, %v2187
        %v2300 = vadd.f32 %v2110, %v2187
        %v2301 = vadd.f32 %v2113, %v2187
        %v2302 = vadd.f32 %v2115, %v2187
        %v2303 = vadd.f32 %v2118, %v2187
        %v2304 = vadd.f32 %v2120, %v2187
        %v2305 = vadd.f32 %v2123, %v2187
        %v2306 = vadd.f32 %v2125, %v2187
        %v2307 = vadd.f32 %v2128, %v2187
        %v2308 = vadd.f32 %v2130, %v2187
        %v2309 = vadd.f32 %v2133, %v2188
        %v2310 = vadd.f32 %v2135, %v2188
        %v2311 = vadd.f32 %v2138, %v2188
        %v2312 = vadd.f32 %v2140, %v2188
        %v2313 = vadd.f32 %v2143, %v2188
        %v2314 = vadd.f32 %v2145, %v2188
        %v2315 = vadd.f32 %v2148, %v2188
        %v2316 = vadd.f32 %v2150, %v2188
        %v2317 = vadd.f32 %v2153, %v2188
        %v2318 = vadd.f32 %v2155, %v2188
        %v2319 = vadd.f32 %v2158, %v2188
        %v2320 = vadd.f32 %v2160, %v2188
        %v2321 = vadd.f32 %v2163, %v2188
        %v2322 = vadd.f32 %v2165, %v2188
        %v2323 = vadd.f32 %v2168, %v2188
        %v2324 = vadd.f32 %v2170, %v2188
        %v2325 = vtanh.pop %v2197
        %v2326 = vtanh.pop %v2198
        %v2327 = vtanh.pop %v2199
        %v2328 = vtanh.pop %v2200
        %v2329 = vtanh.pop %v2201
        %v2330 = vtanh.pop %v2202
        %v2331 = vtanh.pop %v2203
        %v2332 = vtanh.pop %v2204
        %v2333 = vtanh.pop %v2205
        %v2334 = vtanh.pop %v2206
        %v2335 = vtanh.pop %v2207
        %v2336 = vtanh.pop %v2208
        %v2337 = vtanh.pop %v2209
        %v2338 = vtanh.pop %v2210
        %v2339 = vtanh.pop %v2211
        %v2340 = vtanh.pop %v2212
        %v2341 = vtanh.pop %v2213
        %v2342 = vtanh.pop %v2214
        %v2343 = vtanh.pop %v2215
        %v2344 = vtanh.pop %v2216
        %v2345 = vtanh.pop %v2217
        %v2346 = vtanh.pop %v2218
        %v2347 = vtanh.pop %v2219
        %v2348 = vtanh.pop %v2220
        %v2349 = vtanh.pop %v2221
        %v2350 = vtanh.pop %v2222
        %v2351 = vtanh.pop %v2223
        %v2352 = vtanh.pop %v2224
        %v2353 = vtanh.pop %v2225
        %v2354 = vtanh.pop %v2226
        %v2355 = vtanh.pop %v2227
        %v2356 = vtanh.pop %v2228
        %v2357 = vtanh.pop %v2229
        %v2358 = vtanh.pop %v2230
        %v2359 = vtanh.pop %v2231
        %v2360 = vtanh.pop %v2232
        %v2361 = vtanh.pop %v2233
        %v2362 = vtanh.pop %v2234
        %v2363 = vtanh.pop %v2235
        %v2364 = vtanh.pop %v2236
        %v2365 = vtanh.pop %v2237
        %v2366 = vtanh.pop %v2238
        %v2367 = vtanh.pop %v2239
        %v2368 = vtanh.pop %v2240
        %v2369 = vtanh.pop %v2241
        %v2370 = vtanh.pop %v2242
        %v2371 = vtanh.pop %v2243
        %v2372 = vtanh.pop %v2244
        %v2373 = vtanh.pop %v2245
        %v2374 = vtanh.pop %v2246
        %v2375 = vtanh.pop %v2247
        %v2376 = vtanh.pop %v2248
        %v2377 = vtanh.pop %v2249
        %v2378 = vtanh.pop %v2250
        %v2379 = vtanh.pop %v2251
        %v2380 = vtanh.pop %v2252
        %v2381 = vtanh.pop %v2253
        %v2382 = vtanh.pop %v2254
        %v2383 = vtanh.pop %v2255
        %v2384 = vtanh.pop %v2256
        %v2385 = vtanh.pop %v2257
        %v2386 = vtanh.pop %v2258
        %v2387 = vtanh.pop %v2259
        %v2388 = vtanh.pop %v2260
        %v2389 = vtanh.pop %v2261
        %v2390 = vtanh.pop %v2262
        %v2391 = vtanh.pop %v2263
        %v2392 = vtanh.pop %v2264
        %v2393 = vtanh.pop %v2265
        %v2394 = vtanh.pop %v2266
        %v2395 = vtanh.pop %v2267
        %v2396 = vtanh.pop %v2268
        %v2397 = vtanh.pop %v2269
        %v2398 = vtanh.pop %v2270
        %v2399 = vtanh.pop %v2271
        %v2400 = vtanh.pop %v2272
        %v2401 = vtanh.pop %v2273
        %v2402 = vtanh.pop %v2274
        %v2403 = vtanh.pop %v2275
        %v2404 = vtanh.pop %v2276
        %v2405 = vtanh.pop %v2277
        %v2406 = vtanh.pop %v2278
        %v2407 = vtanh.pop %v2279
        %v2408 = vtanh.pop %v2280
        %v2409 = vtanh.pop %v2281
        %v2410 = vtanh.pop %v2282
        %v2411 = vtanh.pop %v2283
        %v2412 = vtanh.pop %v2284
        %v2413 = vtanh.pop %v2285
        %v2414 = vtanh.pop %v2286
        %v2415 = vtanh.pop %v2287
        %v2416 = vtanh.pop %v2288
        %v2417 = vtanh.pop %v2289
        %v2418 = vtanh.pop %v2290
        %v2419 = vtanh.pop %v2291
        %v2420 = vtanh.pop %v2292
        %v2421 = vtanh.pop %v2293
        %v2422 = vtanh.pop %v2294
        %v2423 = vtanh.pop %v2295
        %v2424 = vtanh.pop %v2296
        %v2425 = vtanh.pop %v2297
        %v2426 = vtanh.pop %v2298
        %v2427 = vtanh.pop %v2299
        %v2428 = vtanh.pop %v2300
        %v2429 = vtanh.pop %v2301
        %v2430 = vtanh.pop %v2302
        %v2431 = vtanh.pop %v2303
        %v2432 = vtanh.pop %v2304
        %v2433 = vtanh.pop %v2305
        %v2434 = vtanh.pop %v2306
        %v2435 = vtanh.pop %v2307
        %v2436 = vtanh.pop %v2308
        %v2437 = vtanh.pop %v2309
        %v2438 = vtanh.pop %v2310
        %v2439 = vtanh.pop %v2311
        %v2440 = vtanh.pop %v2312
        %v2441 = vtanh.pop %v2313
        %v2442 = vtanh.pop %v2314
        %v2443 = vtanh.pop %v2315
        %v2444 = vtanh.pop %v2316
        %v2445 = vtanh.pop %v2317
        %v2446 = vtanh.pop %v2318
        %v2447 = vtanh.pop %v2319
        %v2448 = vtanh.pop %v2320
        %v2449 = vtanh.pop %v2321
        %v2450 = vtanh.pop %v2322
        %v2451 = vtanh.pop %v2323
        %v2452 = vtanh.pop %v2324
        %v2453 = vld [vmem:[%s469] sm:$0x1]
        %v2455 = vperm.slane %v2453, 0
        %v2457 = vmul.f32 %v2325, %v2455
        %v2458 = vmul.f32 %v2326, %v2455
        %v2459 = vmul.f32 %v2327, %v2455
        %v2460 = vmul.f32 %v2328, %v2455
        %v2461 = vmul.f32 %v2329, %v2455
        %v2462 = vmul.f32 %v2330, %v2455
        %v2463 = vmul.f32 %v2331, %v2455
        %v2464 = vmul.f32 %v2332, %v2455
        %v2465 = vmul.f32 %v2333, %v2455
        %v2466 = vmul.f32 %v2334, %v2455
        %v2467 = vmul.f32 %v2335, %v2455
        %v2468 = vmul.f32 %v2336, %v2455
        %v2469 = vmul.f32 %v2337, %v2455
        %v2470 = vmul.f32 %v2338, %v2455
        %v2471 = vmul.f32 %v2339, %v2455
        %v2472 = vmul.f32 %v2340, %v2455
        %v2473 = vmul.f32 %v2341, %v2455
        %v2474 = vmul.f32 %v2342, %v2455
        %v2475 = vmul.f32 %v2343, %v2455
        %v2476 = vmul.f32 %v2344, %v2455
        %v2477 = vmul.f32 %v2345, %v2455
        %v2478 = vmul.f32 %v2346, %v2455
        %v2479 = vmul.f32 %v2347, %v2455
        %v2480 = vmul.f32 %v2348, %v2455
        %v2481 = vmul.f32 %v2349, %v2455
        %v2482 = vmul.f32 %v2350, %v2455
        %v2483 = vmul.f32 %v2351, %v2455
        %v2484 = vmul.f32 %v2352, %v2455
        %v2485 = vmul.f32 %v2353, %v2455
        %v2486 = vmul.f32 %v2354, %v2455
        %v2487 = vmul.f32 %v2355, %v2455
        %v2488 = vmul.f32 %v2356, %v2455
        %v2489 = vmul.f32 %v2357, %v2455
        %v2490 = vmul.f32 %v2358, %v2455
        %v2491 = vmul.f32 %v2359, %v2455
        %v2492 = vmul.f32 %v2360, %v2455
        %v2493 = vmul.f32 %v2361, %v2455
        %v2494 = vmul.f32 %v2362, %v2455
        %v2495 = vmul.f32 %v2363, %v2455
        %v2496 = vmul.f32 %v2364, %v2455
        %v2497 = vmul.f32 %v2365, %v2455
        %v2498 = vmul.f32 %v2366, %v2455
        %v2499 = vmul.f32 %v2367, %v2455
        %v2500 = vmul.f32 %v2368, %v2455
        %v2501 = vmul.f32 %v2369, %v2455
        %v2502 = vmul.f32 %v2370, %v2455
        %v2503 = vmul.f32 %v2371, %v2455
        %v2504 = vmul.f32 %v2372, %v2455
        %v2505 = vmul.f32 %v2373, %v2455
        %v2506 = vmul.f32 %v2374, %v2455
        %v2507 = vmul.f32 %v2375, %v2455
        %v2508 = vmul.f32 %v2376, %v2455
        %v2509 = vmul.f32 %v2377, %v2455
        %v2510 = vmul.f32 %v2378, %v2455
        %v2511 = vmul.f32 %v2379, %v2455
        %v2512 = vmul.f32 %v2380, %v2455
        %v2513 = vmul.f32 %v2381, %v2455
        %v2514 = vmul.f32 %v2382, %v2455
        %v2515 = vmul.f32 %v2383, %v2455
        %v2516 = vmul.f32 %v2384, %v2455
        %v2517 = vmul.f32 %v2385, %v2455
        %v2518 = vmul.f32 %v2386, %v2455
        %v2519 = vmul.f32 %v2387, %v2455
        %v2520 = vmul.f32 %v2388, %v2455
        %v2521 = vmul.f32 %v2389, %v2455
        %v2522 = vmul.f32 %v2390, %v2455
        %v2523 = vmul.f32 %v2391, %v2455
        %v2524 = vmul.f32 %v2392, %v2455
        %v2525 = vmul.f32 %v2393, %v2455
        %v2526 = vmul.f32 %v2394, %v2455
        %v2527 = vmul.f32 %v2395, %v2455
        %v2528 = vmul.f32 %v2396, %v2455
        %v2529 = vmul.f32 %v2397, %v2455
        %v2530 = vmul.f32 %v2398, %v2455
        %v2531 = vmul.f32 %v2399, %v2455
        %v2532 = vmul.f32 %v2400, %v2455
        %v2533 = vmul.f32 %v2401, %v2455
        %v2534 = vmul.f32 %v2402, %v2455
        %v2535 = vmul.f32 %v2403, %v2455
        %v2536 = vmul.f32 %v2404, %v2455
        %v2537 = vmul.f32 %v2405, %v2455
        %v2538 = vmul.f32 %v2406, %v2455
        %v2539 = vmul.f32 %v2407, %v2455
        %v2540 = vmul.f32 %v2408, %v2455
        %v2541 = vmul.f32 %v2409, %v2455
        %v2542 = vmul.f32 %v2410, %v2455
        %v2543 = vmul.f32 %v2411, %v2455
        %v2544 = vmul.f32 %v2412, %v2455
        %v2545 = vmul.f32 %v2413, %v2455
        %v2546 = vmul.f32 %v2414, %v2455
        %v2547 = vmul.f32 %v2415, %v2455
        %v2548 = vmul.f32 %v2416, %v2455
        %v2549 = vmul.f32 %v2417, %v2455
        %v2550 = vmul.f32 %v2418, %v2455
        %v2551 = vmul.f32 %v2419, %v2455
        %v2552 = vmul.f32 %v2420, %v2455
        %v2553 = vmul.f32 %v2421, %v2455
        %v2554 = vmul.f32 %v2422, %v2455
        %v2555 = vmul.f32 %v2423, %v2455
        %v2556 = vmul.f32 %v2424, %v2455
        %v2557 = vmul.f32 %v2425, %v2455
        %v2558 = vmul.f32 %v2426, %v2455
        %v2559 = vmul.f32 %v2427, %v2455
        %v2560 = vmul.f32 %v2428, %v2455
        %v2561 = vmul.f32 %v2429, %v2455
        %v2562 = vmul.f32 %v2430, %v2455
        %v2563 = vmul.f32 %v2431, %v2455
        %v2564 = vmul.f32 %v2432, %v2455
        %v2565 = vmul.f32 %v2433, %v2455
        %v2566 = vmul.f32 %v2434, %v2455
        %v2567 = vmul.f32 %v2435, %v2455
        %v2568 = vmul.f32 %v2436, %v2455
        %v2569 = vmul.f32 %v2437, %v2455
        %v2570 = vmul.f32 %v2438, %v2455
        %v2571 = vmul.f32 %v2439, %v2455
        %v2572 = vmul.f32 %v2440, %v2455
        %v2573 = vmul.f32 %v2441, %v2455
        %v2574 = vmul.f32 %v2442, %v2455
        %v2575 = vmul.f32 %v2443, %v2455
        %v2576 = vmul.f32 %v2444, %v2455
        %v2577 = vmul.f32 %v2445, %v2455
        %v2578 = vmul.f32 %v2446, %v2455
        %v2579 = vmul.f32 %v2447, %v2455
        %v2580 = vmul.f32 %v2448, %v2455
        %v2581 = vmul.f32 %v2449, %v2455
        %v2582 = vmul.f32 %v2450, %v2455
        %v2583 = vmul.f32 %v2451, %v2455
        %v2584 = vmul.f32 %v2452, %v2455
        %2585 = vadd.xlane.f32.xlu0 %v2457
        %v2586 = vpop.xlane.xlu0 %2585
        %2587 = vadd.xlane.f32.xlu0 %v2458
        %v2588 = vpop.xlane.xlu0 %2587
        %2589 = vadd.xlane.f32.xlu0 %v2459
        %v2590 = vpop.xlane.xlu0 %2589
        %2591 = vadd.xlane.f32.xlu0 %v2460
        %v2592 = vpop.xlane.xlu0 %2591
        %2593 = vadd.xlane.f32.xlu0 %v2461
        %v2594 = vpop.xlane.xlu0 %2593
        %2595 = vadd.xlane.f32.xlu0 %v2462
        %v2596 = vpop.xlane.xlu0 %2595
        %2597 = vadd.xlane.f32.xlu0 %v2463
        %v2598 = vpop.xlane.xlu0 %2597
        %2599 = vadd.xlane.f32.xlu0 %v2464
        %v2600 = vpop.xlane.xlu0 %2599
        %2601 = vadd.xlane.f32.xlu0 %v2465
        %v2602 = vpop.xlane.xlu0 %2601
        %2603 = vadd.xlane.f32.xlu0 %v2466
        %v2604 = vpop.xlane.xlu0 %2603
        %2605 = vadd.xlane.f32.xlu0 %v2467
        %v2606 = vpop.xlane.xlu0 %2605
        %2607 = vadd.xlane.f32.xlu0 %v2468
        %v2608 = vpop.xlane.xlu0 %2607
        %2609 = vadd.xlane.f32.xlu0 %v2469
        %v2610 = vpop.xlane.xlu0 %2609
        %2611 = vadd.xlane.f32.xlu0 %v2470
        %v2612 = vpop.xlane.xlu0 %2611
        %2613 = vadd.xlane.f32.xlu0 %v2471
        %v2614 = vpop.xlane.xlu0 %2613
        %2615 = vadd.xlane.f32.xlu0 %v2472
        %v2616 = vpop.xlane.xlu0 %2615
        %2617 = vadd.xlane.f32.xlu0 %v2473
        %v2618 = vpop.xlane.xlu0 %2617
        %2619 = vadd.xlane.f32.xlu0 %v2474
        %v2620 = vpop.xlane.xlu0 %2619
        %2621 = vadd.xlane.f32.xlu0 %v2475
        %v2622 = vpop.xlane.xlu0 %2621
        %2623 = vadd.xlane.f32.xlu0 %v2476
        %v2624 = vpop.xlane.xlu0 %2623
        %2625 = vadd.xlane.f32.xlu0 %v2477
        %v2626 = vpop.xlane.xlu0 %2625
        %2627 = vadd.xlane.f32.xlu0 %v2478
        %v2628 = vpop.xlane.xlu0 %2627
        %2629 = vadd.xlane.f32.xlu0 %v2479
        %v2630 = vpop.xlane.xlu0 %2629
        %2631 = vadd.xlane.f32.xlu0 %v2480
        %v2632 = vpop.xlane.xlu0 %2631
        %2633 = vadd.xlane.f32.xlu0 %v2481
        %v2634 = vpop.xlane.xlu0 %2633
        %2635 = vadd.xlane.f32.xlu0 %v2482
        %v2636 = vpop.xlane.xlu0 %2635
        %2637 = vadd.xlane.f32.xlu0 %v2483
        %v2638 = vpop.xlane.xlu0 %2637
        %2639 = vadd.xlane.f32.xlu0 %v2484
        %v2640 = vpop.xlane.xlu0 %2639
        %2641 = vadd.xlane.f32.xlu0 %v2485
        %v2642 = vpop.xlane.xlu0 %2641
        %2643 = vadd.xlane.f32.xlu0 %v2486
        %v2644 = vpop.xlane.xlu0 %2643
        %2645 = vadd.xlane.f32.xlu0 %v2487
        %v2646 = vpop.xlane.xlu0 %2645
        %2647 = vadd.xlane.f32.xlu0 %v2488
        %v2648 = vpop.xlane.xlu0 %2647
        %2649 = vadd.xlane.f32.xlu0 %v2489
        %v2650 = vpop.xlane.xlu0 %2649
        %2651 = vadd.xlane.f32.xlu0 %v2490
        %v2652 = vpop.xlane.xlu0 %2651
        %2653 = vadd.xlane.f32.xlu0 %v2491
        %v2654 = vpop.xlane.xlu0 %2653
        %2655 = vadd.xlane.f32.xlu0 %v2492
        %v2656 = vpop.xlane.xlu0 %2655
        %2657 = vadd.xlane.f32.xlu0 %v2493
        %v2658 = vpop.xlane.xlu0 %2657
        %2659 = vadd.xlane.f32.xlu0 %v2494
        %v2660 = vpop.xlane.xlu0 %2659
        %2661 = vadd.xlane.f32.xlu0 %v2495
        %v2662 = vpop.xlane.xlu0 %2661
        %2663 = vadd.xlane.f32.xlu0 %v2496
        %v2664 = vpop.xlane.xlu0 %2663
        %2665 = vadd.xlane.f32.xlu0 %v2497
        %v2666 = vpop.xlane.xlu0 %2665
        %2667 = vadd.xlane.f32.xlu0 %v2498
        %v2668 = vpop.xlane.xlu0 %2667
        %2669 = vadd.xlane.f32.xlu0 %v2499
        %v2670 = vpop.xlane.xlu0 %2669
        %2671 = vadd.xlane.f32.xlu0 %v2500
        %v2672 = vpop.xlane.xlu0 %2671
        %2673 = vadd.xlane.f32.xlu0 %v2501
        %v2674 = vpop.xlane.xlu0 %2673
        %2675 = vadd.xlane.f32.xlu0 %v2502
        %v2676 = vpop.xlane.xlu0 %2675
        %2677 = vadd.xlane.f32.xlu0 %v2503
        %v2678 = vpop.xlane.xlu0 %2677
        %2679 = vadd.xlane.f32.xlu0 %v2504
        %v2680 = vpop.xlane.xlu0 %2679
        %2681 = vadd.xlane.f32.xlu0 %v2505
        %v2682 = vpop.xlane.xlu0 %2681
        %2683 = vadd.xlane.f32.xlu0 %v2506
        %v2684 = vpop.xlane.xlu0 %2683
        %2685 = vadd.xlane.f32.xlu0 %v2507
        %v2686 = vpop.xlane.xlu0 %2685
        %2687 = vadd.xlane.f32.xlu0 %v2508
        %v2688 = vpop.xlane.xlu0 %2687
        %2689 = vadd.xlane.f32.xlu0 %v2509
        %v2690 = vpop.xlane.xlu0 %2689
        %2691 = vadd.xlane.f32.xlu0 %v2510
        %v2692 = vpop.xlane.xlu0 %2691
        %2693 = vadd.xlane.f32.xlu0 %v2511
        %v2694 = vpop.xlane.xlu0 %2693
        %2695 = vadd.xlane.f32.xlu0 %v2512
        %v2696 = vpop.xlane.xlu0 %2695
        %2697 = vadd.xlane.f32.xlu0 %v2513
        %v2698 = vpop.xlane.xlu0 %2697
        %2699 = vadd.xlane.f32.xlu0 %v2514
        %v2700 = vpop.xlane.xlu0 %2699
        %2701 = vadd.xlane.f32.xlu0 %v2515
        %v2702 = vpop.xlane.xlu0 %2701
        %2703 = vadd.xlane.f32.xlu0 %v2516
        %v2704 = vpop.xlane.xlu0 %2703
        %2705 = vadd.xlane.f32.xlu0 %v2517
        %v2706 = vpop.xlane.xlu0 %2705
        %2707 = vadd.xlane.f32.xlu0 %v2518
        %v2708 = vpop.xlane.xlu0 %2707
        %2709 = vadd.xlane.f32.xlu0 %v2519
        %v2710 = vpop.xlane.xlu0 %2709
        %2711 = vadd.xlane.f32.xlu0 %v2520
        %v2712 = vpop.xlane.xlu0 %2711
        %2713 = vadd.xlane.f32.xlu0 %v2521
        %v2714 = vpop.xlane.xlu0 %2713
        %2715 = vadd.xlane.f32.xlu0 %v2522
        %v2716 = vpop.xlane.xlu0 %2715
        %2717 = vadd.xlane.f32.xlu0 %v2523
        %v2718 = vpop.xlane.xlu0 %2717
        %2719 = vadd.xlane.f32.xlu0 %v2524
        %v2720 = vpop.xlane.xlu0 %2719
        %2721 = vadd.xlane.f32.xlu0 %v2525
        %v2722 = vpop.xlane.xlu0 %2721
        %2723 = vadd.xlane.f32.xlu0 %v2526
        %v2724 = vpop.xlane.xlu0 %2723
        %2725 = vadd.xlane.f32.xlu0 %v2527
        %v2726 = vpop.xlane.xlu0 %2725
        %2727 = vadd.xlane.f32.xlu0 %v2528
        %v2728 = vpop.xlane.xlu0 %2727
        %2729 = vadd.xlane.f32.xlu0 %v2529
        %v2730 = vpop.xlane.xlu0 %2729
        %2731 = vadd.xlane.f32.xlu0 %v2530
        %v2732 = vpop.xlane.xlu0 %2731
        %2733 = vadd.xlane.f32.xlu0 %v2531
        %v2734 = vpop.xlane.xlu0 %2733
        %2735 = vadd.xlane.f32.xlu0 %v2532
        %v2736 = vpop.xlane.xlu0 %2735
        %2737 = vadd.xlane.f32.xlu0 %v2533
        %v2738 = vpop.xlane.xlu0 %2737
        %2739 = vadd.xlane.f32.xlu0 %v2534
        %v2740 = vpop.xlane.xlu0 %2739
        %2741 = vadd.xlane.f32.xlu0 %v2535
        %v2742 = vpop.xlane.xlu0 %2741
        %2743 = vadd.xlane.f32.xlu0 %v2536
        %v2744 = vpop.xlane.xlu0 %2743
        %2745 = vadd.xlane.f32.xlu0 %v2537
        %v2746 = vpop.xlane.xlu0 %2745
        %2747 = vadd.xlane.f32.xlu0 %v2538
        %v2748 = vpop.xlane.xlu0 %2747
        %2749 = vadd.xlane.f32.xlu0 %v2539
        %v2750 = vpop.xlane.xlu0 %2749
        %2751 = vadd.xlane.f32.xlu0 %v2540
        %v2752 = vpop.xlane.xlu0 %2751
        %2753 = vadd.xlane.f32.xlu0 %v2541
        %v2754 = vpop.xlane.xlu0 %2753
        %2755 = vadd.xlane.f32.xlu0 %v2542
        %v2756 = vpop.xlane.xlu0 %2755
        %2757 = vadd.xlane.f32.xlu0 %v2543
        %v2758 = vpop.xlane.xlu0 %2757
        %2759 = vadd.xlane.f32.xlu0 %v2544
        %v2760 = vpop.xlane.xlu0 %2759
        %2761 = vadd.xlane.f32.xlu0 %v2545
        %v2762 = vpop.xlane.xlu0 %2761
        %2763 = vadd.xlane.f32.xlu0 %v2546
        %v2764 = vpop.xlane.xlu0 %2763
        %2765 = vadd.xlane.f32.xlu0 %v2547
        %v2766 = vpop.xlane.xlu0 %2765
        %2767 = vadd.xlane.f32.xlu0 %v2548
        %v2768 = vpop.xlane.xlu0 %2767
        %2769 = vadd.xlane.f32.xlu0 %v2549
        %v2770 = vpop.xlane.xlu0 %2769
        %2771 = vadd.xlane.f32.xlu0 %v2550
        %v2772 = vpop.xlane.xlu0 %2771
        %2773 = vadd.xlane.f32.xlu0 %v2551
        %v2774 = vpop.xlane.xlu0 %2773
        %2775 = vadd.xlane.f32.xlu0 %v2552
        %v2776 = vpop.xlane.xlu0 %2775
        %2777 = vadd.xlane.f32.xlu0 %v2553
        %v2778 = vpop.xlane.xlu0 %2777
        %2779 = vadd.xlane.f32.xlu0 %v2554
        %v2780 = vpop.xlane.xlu0 %2779
        %2781 = vadd.xlane.f32.xlu0 %v2555
        %v2782 = vpop.xlane.xlu0 %2781
        %2783 = vadd.xlane.f32.xlu0 %v2556
        %v2784 = vpop.xlane.xlu0 %2783
        %2785 = vadd.xlane.f32.xlu0 %v2557
        %v2786 = vpop.xlane.xlu0 %2785
        %2787 = vadd.xlane.f32.xlu0 %v2558
        %v2788 = vpop.xlane.xlu0 %2787
        %2789 = vadd.xlane.f32.xlu0 %v2559
        %v2790 = vpop.xlane.xlu0 %2789
        %2791 = vadd.xlane.f32.xlu0 %v2560
        %v2792 = vpop.xlane.xlu0 %2791
        %2793 = vadd.xlane.f32.xlu0 %v2561
        %v2794 = vpop.xlane.xlu0 %2793
        %2795 = vadd.xlane.f32.xlu0 %v2562
        %v2796 = vpop.xlane.xlu0 %2795
        %2797 = vadd.xlane.f32.xlu0 %v2563
        %v2798 = vpop.xlane.xlu0 %2797
        %2799 = vadd.xlane.f32.xlu0 %v2564
        %v2800 = vpop.xlane.xlu0 %2799
        %2801 = vadd.xlane.f32.xlu0 %v2565
        %v2802 = vpop.xlane.xlu0 %2801
        %2803 = vadd.xlane.f32.xlu0 %v2566
        %v2804 = vpop.xlane.xlu0 %2803
        %2805 = vadd.xlane.f32.xlu0 %v2567
        %v2806 = vpop.xlane.xlu0 %2805
        %2807 = vadd.xlane.f32.xlu0 %v2568
        %v2808 = vpop.xlane.xlu0 %2807
        %2809 = vadd.xlane.f32.xlu0 %v2569
        %v2810 = vpop.xlane.xlu0 %2809
        %2811 = vadd.xlane.f32.xlu0 %v2570
        %v2812 = vpop.xlane.xlu0 %2811
        %2813 = vadd.xlane.f32.xlu0 %v2571
        %v2814 = vpop.xlane.xlu0 %2813
        %2815 = vadd.xlane.f32.xlu0 %v2572
        %v2816 = vpop.xlane.xlu0 %2815
        %2817 = vadd.xlane.f32.xlu0 %v2573
        %v2818 = vpop.xlane.xlu0 %2817
        %2819 = vadd.xlane.f32.xlu0 %v2574
        %v2820 = vpop.xlane.xlu0 %2819
        %2821 = vadd.xlane.f32.xlu0 %v2575
        %v2822 = vpop.xlane.xlu0 %2821
        %2823 = vadd.xlane.f32.xlu0 %v2576
        %v2824 = vpop.xlane.xlu0 %2823
        %2825 = vadd.xlane.f32.xlu0 %v2577
        %v2826 = vpop.xlane.xlu0 %2825
        %2827 = vadd.xlane.f32.xlu0 %v2578
        %v2828 = vpop.xlane.xlu0 %2827
        %2829 = vadd.xlane.f32.xlu0 %v2579
        %v2830 = vpop.xlane.xlu0 %2829
        %2831 = vadd.xlane.f32.xlu0 %v2580
        %v2832 = vpop.xlane.xlu0 %2831
        %2833 = vadd.xlane.f32.xlu0 %v2581
        %v2834 = vpop.xlane.xlu0 %2833
        %2835 = vadd.xlane.f32.xlu0 %v2582
        %v2836 = vpop.xlane.xlu0 %2835
        %2837 = vadd.xlane.f32.xlu0 %v2583
        %v2838 = vpop.xlane.xlu0 %2837
        %2839 = vadd.xlane.f32.xlu0 %v2584
        %v2840 = vpop.xlane.xlu0 %2839
        %s2841 = smul.u32 %s49, 128
        %v2842 = vlaneseq
        %v2843 = vand.u32 %v2842, 127
        %v2844 = vstv %s2841
        %v2845 = vadd.s32 %v2844, %v2843
        %s2846 = sld [smem:[#allocation6 + %s48]]
        %v2847 = vstv %s2846
        %vm2848 = vcmp.lt.s32.totalorder %v2845, %v2847
        %v2977 = vperm.slane %v2586, %v2843
        %v2978 = vadd.s32 %v2843, 4294967288
        %v2979 = vperm.slane %v2588, %v2978
        %vm2980 = vcmask 130112
        %v2981 = vsel %vm2980, %v2979, %v2977
        %v2982 = vadd.s32 %v2843, 4294967280
        %v2983 = vperm.slane %v2590, %v2982
        %vm2984 = vcmask 195712
        %v2985 = vsel %vm2984, %v2983, %v2981
        %v2986 = vadd.s32 %v2843, 4294967272
        %v2987 = vperm.slane %v2592, %v2986
        %vm2988 = vcmask 261312
        %v2989 = vsel %vm2988, %v2987, %v2985
        %v2990 = vadd.s32 %v2843, 4294967264
        %v2991 = vperm.slane %v2594, %v2990
        %vm2992 = vcmask 326912
        %v2993 = vsel %vm2992, %v2991, %v2989
        %v2994 = vadd.s32 %v2843, 4294967256
        %v2995 = vperm.slane %v2596, %v2994
        %vm2996 = vcmask 392512
        %v2997 = vsel %vm2996, %v2995, %v2993
        %v2998 = vadd.s32 %v2843, 4294967248
        %v2999 = vperm.slane %v2598, %v2998
        %vm3000 = vcmask 458112
        %v3001 = vsel %vm3000, %v2999, %v2997
        %v3002 = vadd.s32 %v2843, 4294967240
        %v3003 = vperm.slane %v2600, %v3002
        %vm3004 = vcmask 523712
        %v3005 = vsel %vm3004, %v3003, %v3001
        %v3006 = vadd.s32 %v2843, 4294967232
        %v3007 = vperm.slane %v2602, %v3006
        %vm3008 = vcmask 589312
        %v3009 = vsel %vm3008, %v3007, %v3005
        %v3010 = vadd.s32 %v2843, 4294967224
        %v3011 = vperm.slane %v2604, %v3010
        %vm3012 = vcmask 654912
        %v3013 = vsel %vm3012, %v3011, %v3009
        %v3014 = vadd.s32 %v2843, 4294967216
        %v3015 = vperm.slane %v2606, %v3014
        %vm3016 = vcmask 720512
        %v3017 = vsel %vm3016, %v3015, %v3013
        %v3018 = vadd.s32 %v2843, 4294967208
        %v3019 = vperm.slane %v2608, %v3018
        %vm3020 = vcmask 786112
        %v3021 = vsel %vm3020, %v3019, %v3017
        %v3022 = vadd.s32 %v2843, 4294967200
        %v3023 = vperm.slane %v2610, %v3022
        %vm3024 = vcmask 851712
        %v3025 = vsel %vm3024, %v3023, %v3021
        %v3026 = vadd.s32 %v2843, 4294967192
        %v3027 = vperm.slane %v2612, %v3026
        %vm3028 = vcmask 917312
        %v3029 = vsel %vm3028, %v3027, %v3025
        %v3030 = vadd.s32 %v2843, 4294967184
        %v3031 = vperm.slane %v2614, %v3030
        %vm3032 = vcmask 982912
        %v3033 = vsel %vm3032, %v3031, %v3029
        %v3034 = vadd.s32 %v2843, 4294967176
        %v3035 = vperm.slane %v2616, %v3034
        %vm3036 = vcmask 1048512
        %v3037 = vsel %vm3036, %v3035, %v3033
        %v3038 = vperm.slane %v2618, %v2843
        %v3039 = vperm.slane %v2620, %v2978
        %v3040 = vsel %vm2980, %v3039, %v3038
        %v3041 = vperm.slane %v2622, %v2982
        %v3042 = vsel %vm2984, %v3041, %v3040
        %v3043 = vperm.slane %v2624, %v2986
        %v3044 = vsel %vm2988, %v3043, %v3042
        %v3045 = vperm.slane %v2626, %v2990
        %v3046 = vsel %vm2992, %v3045, %v3044
        %v3047 = vperm.slane %v2628, %v2994
        %v3048 = vsel %vm2996, %v3047, %v3046
        %v3049 = vperm.slane %v2630, %v2998
        %v3050 = vsel %vm3000, %v3049, %v3048
        %v3051 = vperm.slane %v2632, %v3002
        %v3052 = vsel %vm3004, %v3051, %v3050
        %v3053 = vperm.slane %v2634, %v3006
        %v3054 = vsel %vm3008, %v3053, %v3052
        %v3055 = vperm.slane %v2636, %v3010
        %v3056 = vsel %vm3012, %v3055, %v3054
        %v3057 = vperm.slane %v2638, %v3014
        %v3058 = vsel %vm3016, %v3057, %v3056
        %v3059 = vperm.slane %v2640, %v3018
        %v3060 = vsel %vm3020, %v3059, %v3058
        %v3061 = vperm.slane %v2642, %v3022
        %v3062 = vsel %vm3024, %v3061, %v3060
        %v3063 = vperm.slane %v2644, %v3026
        %v3064 = vsel %vm3028, %v3063, %v3062
        %v3065 = vperm.slane %v2646, %v3030
        %v3066 = vsel %vm3032, %v3065, %v3064
        %v3067 = vperm.slane %v2648, %v3034
        %v3068 = vsel %vm3036, %v3067, %v3066
        %v3069 = vperm.slane %v2650, %v2843
        %v3070 = vperm.slane %v2652, %v2978
        %v3071 = vsel %vm2980, %v3070, %v3069
        %v3072 = vperm.slane %v2654, %v2982
        %v3073 = vsel %vm2984, %v3072, %v3071
        %v3074 = vperm.slane %v2656, %v2986
        %v3075 = vsel %vm2988, %v3074, %v3073
        %v3076 = vperm.slane %v2658, %v2990
        %v3077 = vsel %vm2992, %v3076, %v3075
        %v3078 = vperm.slane %v2660, %v2994
        %v3079 = vsel %vm2996, %v3078, %v3077
        %v3080 = vperm.slane %v2662, %v2998
        %v3081 = vsel %vm3000, %v3080, %v3079
        %v3082 = vperm.slane %v2664, %v3002
        %v3083 = vsel %vm3004, %v3082, %v3081
        %v3084 = vperm.slane %v2666, %v3006
        %v3085 = vsel %vm3008, %v3084, %v3083
        %v3086 = vperm.slane %v2668, %v3010
        %v3087 = vsel %vm3012, %v3086, %v3085
        %v3088 = vperm.slane %v2670, %v3014
        %v3089 = vsel %vm3016, %v3088, %v3087
        %v3090 = vperm.slane %v2672, %v3018
        %v3091 = vsel %vm3020, %v3090, %v3089
        %v3092 = vperm.slane %v2674, %v3022
        %v3093 = vsel %vm3024, %v3092, %v3091
        %v3094 = vperm.slane %v2676, %v3026
        %v3095 = vsel %vm3028, %v3094, %v3093
        %v3096 = vperm.slane %v2678, %v3030
        %v3097 = vsel %vm3032, %v3096, %v3095
        %v3098 = vperm.slane %v2680, %v3034
        %v3099 = vsel %vm3036, %v3098, %v3097
        %v3100 = vperm.slane %v2682, %v2843
        %v3101 = vperm.slane %v2684, %v2978
        %v3102 = vsel %vm2980, %v3101, %v3100
        %v3103 = vperm.slane %v2686, %v2982
        %v3104 = vsel %vm2984, %v3103, %v3102
        %v3105 = vperm.slane %v2688, %v2986
        %v3106 = vsel %vm2988, %v3105, %v3104
        %v3107 = vperm.slane %v2690, %v2990
        %v3108 = vsel %vm2992, %v3107, %v3106
        %v3109 = vperm.slane %v2692, %v2994
        %v3110 = vsel %vm2996, %v3109, %v3108
        %v3111 = vperm.slane %v2694, %v2998
        %v3112 = vsel %vm3000, %v3111, %v3110
        %v3113 = vperm.slane %v2696, %v3002
        %v3114 = vsel %vm3004, %v3113, %v3112
        %v3115 = vperm.slane %v2698, %v3006
        %v3116 = vsel %vm3008, %v3115, %v3114
        %v3117 = vperm.slane %v2700, %v3010
        %v3118 = vsel %vm3012, %v3117, %v3116
        %v3119 = vperm.slane %v2702, %v3014
        %v3120 = vsel %vm3016, %v3119, %v3118
        %v3121 = vperm.slane %v2704, %v3018
        %v3122 = vsel %vm3020, %v3121, %v3120
        %v3123 = vperm.slane %v2706, %v3022
        %v3124 = vsel %vm3024, %v3123, %v3122
        %v3125 = vperm.slane %v2708, %v3026
        %v3126 = vsel %vm3028, %v3125, %v3124
        %v3127 = vperm.slane %v2710, %v3030
        %v3128 = vsel %vm3032, %v3127, %v3126
        %v3129 = vperm.slane %v2712, %v3034
        %v3130 = vsel %vm3036, %v3129, %v3128
        %v3131 = vperm.slane %v2714, %v2843
        %v3132 = vperm.slane %v2716, %v2978
        %v3133 = vsel %vm2980, %v3132, %v3131
        %v3134 = vperm.slane %v2718, %v2982
        %v3135 = vsel %vm2984, %v3134, %v3133
        %v3136 = vperm.slane %v2720, %v2986
        %v3137 = vsel %vm2988, %v3136, %v3135
        %v3138 = vperm.slane %v2722, %v2990
        %v3139 = vsel %vm2992, %v3138, %v3137
        %v3140 = vperm.slane %v2724, %v2994
        %v3141 = vsel %vm2996, %v3140, %v3139
        %v3142 = vperm.slane %v2726, %v2998
        %v3143 = vsel %vm3000, %v3142, %v3141
        %v3144 = vperm.slane %v2728, %v3002
        %v3145 = vsel %vm3004, %v3144, %v3143
        %v3146 = vperm.slane %v2730, %v3006
        %v3147 = vsel %vm3008, %v3146, %v3145
        %v3148 = vperm.slane %v2732, %v3010
        %v3149 = vsel %vm3012, %v3148, %v3147
        %v3150 = vperm.slane %v2734, %v3014
        %v3151 = vsel %vm3016, %v3150, %v3149
        %v3152 = vperm.slane %v2736, %v3018
        %v3153 = vsel %vm3020, %v3152, %v3151
        %v3154 = vperm.slane %v2738, %v3022
        %v3155 = vsel %vm3024, %v3154, %v3153
        %v3156 = vperm.slane %v2740, %v3026
        %v3157 = vsel %vm3028, %v3156, %v3155
        %v3158 = vperm.slane %v2742, %v3030
        %v3159 = vsel %vm3032, %v3158, %v3157
        %v3160 = vperm.slane %v2744, %v3034
        %v3161 = vsel %vm3036, %v3160, %v3159
        %v3162 = vperm.slane %v2746, %v2843
        %v3163 = vperm.slane %v2748, %v2978
        %v3164 = vsel %vm2980, %v3163, %v3162
        %v3165 = vperm.slane %v2750, %v2982
        %v3166 = vsel %vm2984, %v3165, %v3164
        %v3167 = vperm.slane %v2752, %v2986
        %v3168 = vsel %vm2988, %v3167, %v3166
        %v3169 = vperm.slane %v2754, %v2990
        %v3170 = vsel %vm2992, %v3169, %v3168
        %v3171 = vperm.slane %v2756, %v2994
        %v3172 = vsel %vm2996, %v3171, %v3170
        %v3173 = vperm.slane %v2758, %v2998
        %v3174 = vsel %vm3000, %v3173, %v3172
        %v3175 = vperm.slane %v2760, %v3002
        %v3176 = vsel %vm3004, %v3175, %v3174
        %v3177 = vperm.slane %v2762, %v3006
        %v3178 = vsel %vm3008, %v3177, %v3176
        %v3179 = vperm.slane %v2764, %v3010
        %v3180 = vsel %vm3012, %v3179, %v3178
        %v3181 = vperm.slane %v2766, %v3014
        %v3182 = vsel %vm3016, %v3181, %v3180
        %v3183 = vperm.slane %v2768, %v3018
        %v3184 = vsel %vm3020, %v3183, %v3182
        %v3185 = vperm.slane %v2770, %v3022
        %v3186 = vsel %vm3024, %v3185, %v3184
        %v3187 = vperm.slane %v2772, %v3026
        %v3188 = vsel %vm3028, %v3187, %v3186
        %v3189 = vperm.slane %v2774, %v3030
        %v3190 = vsel %vm3032, %v3189, %v3188
        %v3191 = vperm.slane %v2776, %v3034
        %v3192 = vsel %vm3036, %v3191, %v3190
        %v3193 = vperm.slane %v2778, %v2843
        %v3194 = vperm.slane %v2780, %v2978
        %v3195 = vsel %vm2980, %v3194, %v3193
        %v3196 = vperm.slane %v2782, %v2982
        %v3197 = vsel %vm2984, %v3196, %v3195
        %v3198 = vperm.slane %v2784, %v2986
        %v3199 = vsel %vm2988, %v3198, %v3197
        %v3200 = vperm.slane %v2786, %v2990
        %v3201 = vsel %vm2992, %v3200, %v3199
        %v3202 = vperm.slane %v2788, %v2994
        %v3203 = vsel %vm2996, %v3202, %v3201
        %v3204 = vperm.slane %v2790, %v2998
        %v3205 = vsel %vm3000, %v3204, %v3203
        %v3206 = vperm.slane %v2792, %v3002
        %v3207 = vsel %vm3004, %v3206, %v3205
        %v3208 = vperm.slane %v2794, %v3006
        %v3209 = vsel %vm3008, %v3208, %v3207
        %v3210 = vperm.slane %v2796, %v3010
        %v3211 = vsel %vm3012, %v3210, %v3209
        %v3212 = vperm.slane %v2798, %v3014
        %v3213 = vsel %vm3016, %v3212, %v3211
        %v3214 = vperm.slane %v2800, %v3018
        %v3215 = vsel %vm3020, %v3214, %v3213
        %v3216 = vperm.slane %v2802, %v3022
        %v3217 = vsel %vm3024, %v3216, %v3215
        %v3218 = vperm.slane %v2804, %v3026
        %v3219 = vsel %vm3028, %v3218, %v3217
        %v3220 = vperm.slane %v2806, %v3030
        %v3221 = vsel %vm3032, %v3220, %v3219
        %v3222 = vperm.slane %v2808, %v3034
        %v3223 = vsel %vm3036, %v3222, %v3221
        %v3224 = vperm.slane %v2810, %v2843
        %v3225 = vperm.slane %v2812, %v2978
        %v3226 = vsel %vm2980, %v3225, %v3224
        %v3227 = vperm.slane %v2814, %v2982
        %v3228 = vsel %vm2984, %v3227, %v3226
        %v3229 = vperm.slane %v2816, %v2986
        %v3230 = vsel %vm2988, %v3229, %v3228
        %v3231 = vperm.slane %v2818, %v2990
        %v3232 = vsel %vm2992, %v3231, %v3230
        %v3233 = vperm.slane %v2820, %v2994
        %v3234 = vsel %vm2996, %v3233, %v3232
        %v3235 = vperm.slane %v2822, %v2998
        %v3236 = vsel %vm3000, %v3235, %v3234
        %v3237 = vperm.slane %v2824, %v3002
        %v3238 = vsel %vm3004, %v3237, %v3236
        %v3239 = vperm.slane %v2826, %v3006
        %v3240 = vsel %vm3008, %v3239, %v3238
        %v3241 = vperm.slane %v2828, %v3010
        %v3242 = vsel %vm3012, %v3241, %v3240
        %v3243 = vperm.slane %v2830, %v3014
        %v3244 = vsel %vm3016, %v3243, %v3242
        %v3245 = vperm.slane %v2832, %v3018
        %v3246 = vsel %vm3020, %v3245, %v3244
        %v3247 = vperm.slane %v2834, %v3022
        %v3248 = vsel %vm3024, %v3247, %v3246
        %v3249 = vperm.slane %v2836, %v3026
        %v3250 = vsel %vm3028, %v3249, %v3248
        %v3251 = vperm.slane %v2838, %v3030
        %v3252 = vsel %vm3032, %v3251, %v3250
        %v3253 = vperm.slane %v2840, %v3034
        %v3254 = vsel %vm3036, %v3253, %v3252
        %vm3255 = vcmask 1041409
        %v3256 = vsel %vm3255, %v3068, %v3037
        %vm3257 = vcmask 1042434
        %v3258 = vsel %vm3257, %v3099, %v3256
        %vm3259 = vcmask 1043459
        %v3260 = vsel %vm3259, %v3130, %v3258
        %vm3261 = vcmask 1044484
        %v3262 = vsel %vm3261, %v3161, %v3260
        %vm3263 = vcmask 1045509
        %v3264 = vsel %vm3263, %v3192, %v3262
        %vm3265 = vcmask 1046534
        %v3266 = vsel %vm3265, %v3223, %v3264
        %vm3267 = vcmask 1047559
        %v3268 = vsel %vm3267, %v3254, %v3266
        %v3270 = vsel %vm2848, %v3268, -inf
        %s3271 = sshra.s32 %s2841, 7
        %s3272 = sand.u32 %s2841, 127
        %s3273 = smul.addr %s3271, 8
        %s3274 = scalar_lea.vmem %s523, %s3273 [#allocation19]
        %3275 = vst [vmem:[%s3274] sm:$0xff] %v3270
        %v3276 = vld [vmem:[#allocation3] sm:$0xff]
        %3277 = vmax.xlane.f32.xlu0 %v3270
        %v3278 = vpop.xlane.xlu0 %3277
        %v3279 = vmax.f32 %v3276, %v3278
        %v3280 = vsub.f32 %v3276, %v3279
        %v3281 = vmul.f32 %v3280, 1.442695
        %v3282 = vpow.pop %v3281
        %3284 = vset.pattern.permute.xlu0 0
        %3285 = vperm.xlu0 %3284, %v3279
        %v3286 = vpop.permute.xlu0 %3285
        %v3288 = vsub.f32 %v3270, %v3286
        %v3289 = vmul.f32 %v3288, 1.442695
        %v3290 = vpow.pop %v3289
        %v3291 = vld [vmem:[#allocation4] sm:$0xff]
        %v3292 = vmul.f32 %v3282, %v3291
        %3293 = vadd.xlane.f32.xlu0 %v3290
        %v3294 = vpop.xlane.xlu0 %3293
        %v3295 = vadd.f32 %v3292, %v3294
        %vm3296 = vcmask 7168
        %3297 = vst.msk [vmem:[#allocation4] sm:$0xff] %vm3296, %v3295
        %v3298 = vld [vmem:[%s516] sm:$0xff]
        %v3299 = vld [vmem:[%s516 + $0x8] sm:$0xff]
        %3301 = vset.pattern.permute.xlu0 0
        %3302 = vperm.xlu0 %3301, %v3282
        %v3303 = vpop.permute.xlu0 %3302
        %v3305 = vmul.f32 %v3303, %v3298
        %v3306 = vmul.f32 %v3303, %v3299
        %v3308 = vrot.slane %v3290, 1
        %v3309 = vrot.slane %v3290, 2
        %v3310 = vrot.slane %v3290, 3
        %v3311 = vrot.slane %v3290, 4
        %v3312 = vrot.slane %v3290, 5
        %v3313 = vrot.slane %v3290, 6
        %v3314 = vrot.slane %v3290, 7
        %v3322 = vpack.c.bf16 %v3290, %v3290
        %v3323 = vpack.c.bf16 %v3308, %v3308
        %v3324 = vpack.c.bf16 %v3309, %v3309
        %v3325 = vpack.c.bf16 %v3310, %v3310
        %v3326 = vpack.c.bf16 %v3311, %v3311
        %v3327 = vpack.c.bf16 %v3312, %v3312
        %v3328 = vpack.c.bf16 %v3313, %v3313
        %v3329 = vpack.c.bf16 %v3314, %v3314
        %3330 = vmatpush.bf16.msra.mxu0 %v1176
        %3331 = vmatpush.bf16.msra.mxu0 %v1174
        %3332 = vmatpush.bf16.msra.mxu0 %v1172
        %3333 = vmatpush.bf16.msra.mxu0 %v1170
        %3334 = vmatpush.bf16.msra.mxu0 %v1168
        %3335 = vmatpush.bf16.msra.mxu0 %v1166
        %3336 = vmatpush.bf16.msra.mxu0 %v1164
        %3337 = vmatpush.bf16.msra.mxu0 %v1162
        %3338 = vmatmul.bf16.gmra.mxu0 %v3322
        %v3339 = vpop.f32.mrf.mxu0
        %v3340 = vadd.f32 0.0, %v3339
        %v3341 = vpop.f32.mrf.mxu0
        %3342 = vdwg.mxu0
        %3343 = vmatpush.bf16.msra.mxu0 %v1177
        %3344 = vmatpush.bf16.msra.mxu0 %v1175
        %3345 = vmatpush.bf16.msra.mxu0 %v1173
        %3346 = vmatpush.bf16.msra.mxu0 %v1171
        %3347 = vmatpush.bf16.msra.mxu0 %v1169
        %3348 = vmatpush.bf16.msra.mxu0 %v1167
        %3349 = vmatpush.bf16.msra.mxu0 %v1165
        %3350 = vmatpush.bf16.msra.mxu0 %v1163
        %3351 = vmatmul.bf16.gmra.mxu0 %v3322
        %v3352 = vpop.f32.mrf.mxu0
        %v3353 = vadd.f32 0.0, %v3352
        %v3354 = vpop.f32.mrf.mxu0
        %3355 = vdwg.mxu0
        %3356 = vmatpush.bf16.msra.mxu0 %v1192
        %3357 = vmatpush.bf16.msra.mxu0 %v1190
        %3358 = vmatpush.bf16.msra.mxu0 %v1188
        %3359 = vmatpush.bf16.msra.mxu0 %v1186
        %3360 = vmatpush.bf16.msra.mxu0 %v1184
        %3361 = vmatpush.bf16.msra.mxu0 %v1182
        %3362 = vmatpush.bf16.msra.mxu0 %v1180
        %3363 = vmatpush.bf16.msra.mxu0 %v1178
        %3364 = vmatmul.bf16.gmra.mxu0 %v3323
        %v3365 = vpop.f32.mrf.mxu0
        %v3366 = vadd.f32 0.0, %v3365
        %v3367 = vpop.f32.mrf.mxu0
        %3368 = vdwg.mxu0
        %3369 = vmatpush.bf16.msra.mxu0 %v1193
        %3370 = vmatpush.bf16.msra.mxu0 %v1191
        %3371 = vmatpush.bf16.msra.mxu0 %v1189
        %3372 = vmatpush.bf16.msra.mxu0 %v1187
        %3373 = vmatpush.bf16.msra.mxu0 %v1185
        %3374 = vmatpush.bf16.msra.mxu0 %v1183
        %3375 = vmatpush.bf16.msra.mxu0 %v1181
        %3376 = vmatpush.bf16.msra.mxu0 %v1179
        %3377 = vmatmul.bf16.gmra.mxu0 %v3323
        %v3378 = vpop.f32.mrf.mxu0
        %v3379 = vadd.f32 0.0, %v3378
        %v3380 = vpop.f32.mrf.mxu0
        %3381 = vdwg.mxu0
        %3382 = vmatpush.bf16.msra.mxu0 %v1208
        %3383 = vmatpush.bf16.msra.mxu0 %v1206
        %3384 = vmatpush.bf16.msra.mxu0 %v1204
        %3385 = vmatpush.bf16.msra.mxu0 %v1202
        %3386 = vmatpush.bf16.msra.mxu0 %v1200
        %3387 = vmatpush.bf16.msra.mxu0 %v1198
        %3388 = vmatpush.bf16.msra.mxu0 %v1196
        %3389 = vmatpush.bf16.msra.mxu0 %v1194
        %3390 = vmatmul.bf16.gmra.mxu0 %v3324
        %v3391 = vpop.f32.mrf.mxu0
        %v3392 = vadd.f32 0.0, %v3391
        %v3393 = vpop.f32.mrf.mxu0
        %3394 = vdwg.mxu0
        %3395 = vmatpush.bf16.msra.mxu0 %v1209
        %3396 = vmatpush.bf16.msra.mxu0 %v1207
        %3397 = vmatpush.bf16.msra.mxu0 %v1205
        %3398 = vmatpush.bf16.msra.mxu0 %v1203
        %3399 = vmatpush.bf16.msra.mxu0 %v1201
        %3400 = vmatpush.bf16.msra.mxu0 %v1199
        %3401 = vmatpush.bf16.msra.mxu0 %v1197
        %3402 = vmatpush.bf16.msra.mxu0 %v1195
        %3403 = vmatmul.bf16.gmra.mxu0 %v3324
        %v3404 = vpop.f32.mrf.mxu0
        %v3405 = vadd.f32 0.0, %v3404
        %v3406 = vpop.f32.mrf.mxu0
        %3407 = vdwg.mxu0
        %3408 = vmatpush.bf16.msra.mxu0 %v1224
        %3409 = vmatpush.bf16.msra.mxu0 %v1222
        %3410 = vmatpush.bf16.msra.mxu0 %v1220
        %3411 = vmatpush.bf16.msra.mxu0 %v1218
        %3412 = vmatpush.bf16.msra.mxu0 %v1216
        %3413 = vmatpush.bf16.msra.mxu0 %v1214
        %3414 = vmatpush.bf16.msra.mxu0 %v1212
        %3415 = vmatpush.bf16.msra.mxu0 %v1210
        %3416 = vmatmul.bf16.gmra.mxu0 %v3325
        %v3417 = vpop.f32.mrf.mxu0
        %v3418 = vadd.f32 0.0, %v3417
        %v3419 = vpop.f32.mrf.mxu0
        %3420 = vdwg.mxu0
        %3421 = vmatpush.bf16.msra.mxu0 %v1225
        %3422 = vmatpush.bf16.msra.mxu0 %v1223
        %3423 = vmatpush.bf16.msra.mxu0 %v1221
        %3424 = vmatpush.bf16.msra.mxu0 %v1219
        %3425 = vmatpush.bf16.msra.mxu0 %v1217
        %3426 = vmatpush.bf16.msra.mxu0 %v1215
        %3427 = vmatpush.bf16.msra.mxu0 %v1213
        %3428 = vmatpush.bf16.msra.mxu0 %v1211
        %3429 = vmatmul.bf16.gmra.mxu0 %v3325
        %v3430 = vpop.f32.mrf.mxu0
        %v3431 = vadd.f32 0.0, %v3430
        %v3432 = vpop.f32.mrf.mxu0
        %3433 = vdwg.mxu0
        %3434 = vmatpush.bf16.msra.mxu0 %v1240
        %3435 = vmatpush.bf16.msra.mxu0 %v1238
        %3436 = vmatpush.bf16.msra.mxu0 %v1236
        %3437 = vmatpush.bf16.msra.mxu0 %v1234
        %3438 = vmatpush.bf16.msra.mxu0 %v1232
        %3439 = vmatpush.bf16.msra.mxu0 %v1230
        %3440 = vmatpush.bf16.msra.mxu0 %v1228
        %3441 = vmatpush.bf16.msra.mxu0 %v1226
        %3442 = vmatmul.bf16.gmra.mxu0 %v3326
        %v3443 = vpop.f32.mrf.mxu0
        %v3444 = vadd.f32 0.0, %v3443
        %v3445 = vpop.f32.mrf.mxu0
        %3446 = vdwg.mxu0
        %3447 = vmatpush.bf16.msra.mxu0 %v1241
        %3448 = vmatpush.bf16.msra.mxu0 %v1239
        %3449 = vmatpush.bf16.msra.mxu0 %v1237
        %3450 = vmatpush.bf16.msra.mxu0 %v1235
        %3451 = vmatpush.bf16.msra.mxu0 %v1233
        %3452 = vmatpush.bf16.msra.mxu0 %v1231
        %3453 = vmatpush.bf16.msra.mxu0 %v1229
        %3454 = vmatpush.bf16.msra.mxu0 %v1227
        %3455 = vmatmul.bf16.gmra.mxu0 %v3326
        %v3456 = vpop.f32.mrf.mxu0
        %v3457 = vadd.f32 0.0, %v3456
        %v3458 = vpop.f32.mrf.mxu0
        %3459 = vdwg.mxu0
        %3460 = vmatpush.bf16.msra.mxu0 %v1256
        %3461 = vmatpush.bf16.msra.mxu0 %v1254
        %3462 = vmatpush.bf16.msra.mxu0 %v1252
        %3463 = vmatpush.bf16.msra.mxu0 %v1250
        %3464 = vmatpush.bf16.msra.mxu0 %v1248
        %3465 = vmatpush.bf16.msra.mxu0 %v1246
        %3466 = vmatpush.bf16.msra.mxu0 %v1244
        %3467 = vmatpush.bf16.msra.mxu0 %v1242
        %3468 = vmatmul.bf16.gmra.mxu0 %v3327
        %v3469 = vpop.f32.mrf.mxu0
        %v3470 = vadd.f32 0.0, %v3469
        %v3471 = vpop.f32.mrf.mxu0
        %3472 = vdwg.mxu0
        %3473 = vmatpush.bf16.msra.mxu0 %v1257
        %3474 = vmatpush.bf16.msra.mxu0 %v1255
        %3475 = vmatpush.bf16.msra.mxu0 %v1253
        %3476 = vmatpush.bf16.msra.mxu0 %v1251
        %3477 = vmatpush.bf16.msra.mxu0 %v1249
        %3478 = vmatpush.bf16.msra.mxu0 %v1247
        %3479 = vmatpush.bf16.msra.mxu0 %v1245
        %3480 = vmatpush.bf16.msra.mxu0 %v1243
        %3481 = vmatmul.bf16.gmra.mxu0 %v3327
        %v3482 = vpop.f32.mrf.mxu0
        %v3483 = vadd.f32 0.0, %v3482
        %v3484 = vpop.f32.mrf.mxu0
        %3485 = vdwg.mxu0
        %3486 = vmatpush.bf16.msra.mxu0 %v1272
        %3487 = vmatpush.bf16.msra.mxu0 %v1270
        %3488 = vmatpush.bf16.msra.mxu0 %v1268
        %3489 = vmatpush.bf16.msra.mxu0 %v1266
        %3490 = vmatpush.bf16.msra.mxu0 %v1264
        %3491 = vmatpush.bf16.msra.mxu0 %v1262
        %3492 = vmatpush.bf16.msra.mxu0 %v1260
        %3493 = vmatpush.bf16.msra.mxu0 %v1258
        %3494 = vmatmul.bf16.gmra.mxu0 %v3328
        %v3495 = vpop.f32.mrf.mxu0
        %v3496 = vadd.f32 0.0, %v3495
        %v3497 = vpop.f32.mrf.mxu0
        %3498 = vdwg.mxu0
        %3499 = vmatpush.bf16.msra.mxu0 %v1273
        %3500 = vmatpush.bf16.msra.mxu0 %v1271
        %3501 = vmatpush.bf16.msra.mxu0 %v1269
        %3502 = vmatpush.bf16.msra.mxu0 %v1267
        %3503 = vmatpush.bf16.msra.mxu0 %v1265
        %3504 = vmatpush.bf16.msra.mxu0 %v1263
        %3505 = vmatpush.bf16.msra.mxu0 %v1261
        %3506 = vmatpush.bf16.msra.mxu0 %v1259
        %3507 = vmatmul.bf16.gmra.mxu0 %v3328
        %v3508 = vpop.f32.mrf.mxu0
        %v3509 = vadd.f32 0.0, %v3508
        %v3510 = vpop.f32.mrf.mxu0
        %3511 = vdwg.mxu0
        %3512 = vmatpush.bf16.msra.mxu0 %v1288
        %3513 = vmatpush.bf16.msra.mxu0 %v1286
        %3514 = vmatpush.bf16.msra.mxu0 %v1284
        %3515 = vmatpush.bf16.msra.mxu0 %v1282
        %3516 = vmatpush.bf16.msra.mxu0 %v1280
        %3517 = vmatpush.bf16.msra.mxu0 %v1278
        %3518 = vmatpush.bf16.msra.mxu0 %v1276
        %3519 = vmatpush.bf16.msra.mxu0 %v1274
        %3520 = vmatmul.bf16.gmra.mxu0 %v3329
        %v3521 = vpop.f32.mrf.mxu0
        %v3522 = vadd.f32 0.0, %v3521
        %v3523 = vpop.f32.mrf.mxu0
        %3524 = vdwg.mxu0
        %3525 = vmatpush.bf16.msra.mxu0 %v1289
        %3526 = vmatpush.bf16.msra.mxu0 %v1287
        %3527 = vmatpush.bf16.msra.mxu0 %v1285
        %3528 = vmatpush.bf16.msra.mxu0 %v1283
        %3529 = vmatpush.bf16.msra.mxu0 %v1281
        %3530 = vmatpush.bf16.msra.mxu0 %v1279
        %3531 = vmatpush.bf16.msra.mxu0 %v1277
        %3532 = vmatpush.bf16.msra.mxu0 %v1275
        %3533 = vmatmul.bf16.gmra.mxu0 %v3329
        %v3534 = vpop.f32.mrf.mxu0
        %v3535 = vadd.f32 0.0, %v3534
        %v3536 = vpop.f32.mrf.mxu0
        %3537 = vdwg.mxu0
        %v3554 = vrot.slane %v3366, 7
        %v3555 = vsel %vm3255, %v3554, %v3340
        %v3556 = vrot.slane %v3392, 6
        %v3557 = vsel %vm3257, %v3556, %v3555
        %v3558 = vrot.slane %v3418, 5
        %v3559 = vsel %vm3259, %v3558, %v3557
        %v3560 = vrot.slane %v3444, 4
        %v3561 = vsel %vm3261, %v3560, %v3559
        %v3562 = vrot.slane %v3470, 3
        %v3563 = vsel %vm3263, %v3562, %v3561
        %v3564 = vrot.slane %v3496, 2
        %v3565 = vsel %vm3265, %v3564, %v3563
        %v3566 = vrot.slane %v3522, 1
        %v3567 = vsel %vm3267, %v3566, %v3565
        %v3568 = vrot.slane %v3379, 7
        %v3569 = vsel %vm3255, %v3568, %v3353
        %v3570 = vrot.slane %v3405, 6
        %v3571 = vsel %vm3257, %v3570, %v3569
        %v3572 = vrot.slane %v3431, 5
        %v3573 = vsel %vm3259, %v3572, %v3571
        %v3574 = vrot.slane %v3457, 4
        %v3575 = vsel %vm3261, %v3574, %v3573
        %v3576 = vrot.slane %v3483, 3
        %v3577 = vsel %vm3263, %v3576, %v3575
        %v3578 = vrot.slane %v3509, 2
        %v3579 = vsel %vm3265, %v3578, %v3577
        %v3580 = vrot.slane %v3535, 1
        %v3581 = vsel %vm3267, %v3580, %v3579
        %v3584 = vadd.f32 %v3305, %v3567
        %v3585 = vadd.f32 %v3306, %v3581
        %3586 = vst [vmem:[%s516] sm:$0xff] %v3584
        %3587 = vst [vmem:[%s516 + $0x8] sm:$0xff] %v3585
        %3588 = vst.msk [vmem:[#allocation3] sm:$0xff] %vm3296, %v3279
        %p3589 = scmp.eq.s32.totalorder %s49, 1
        // Predicated region
        $region73: #{tpu_custom_call.1} parent=43 // pred_check
          %p3590 = pneg %p3589
        $region74: #{tpu_custom_call.1} parent=43 // pred_check_branch
          %3592 = sbr.rel (%p3590) target = $region76
        $region75: #{tpu_custom_call.1} parent=43 // pred_region
          %v3593 = vld [vmem:[#allocation4] sm:$0xff]
          %v3594 = vrcp.pop %v3593
          %v3595 = vld [vmem:[%s516] sm:$0xff]
          %v3596 = vld [vmem:[%s516 + $0x8] sm:$0xff]
          %3598 = vset.pattern.permute.xlu0 0
          %3599 = vperm.xlu0 %3598, %v3594
          %v3600 = vpop.permute.xlu0 %3599
          %v3602 = vmul.f32 %v3595, %v3600
          %v3603 = vmul.f32 %v3596, %v3600
          %3604 = vst [vmem:[%s516] sm:$0xff] %v3602
          %3605 = vst [vmem:[%s516 + $0x8] sm:$0xff] %v3603
          %v3606 = vld [vmem:[%s523] sm:$0xff]
          %v3607 = vld [vmem:[%s523 + $0x8] sm:$0xff]
          %v3608 = vld [vmem:[#allocation3] sm:$0xff]
          %3610 = vset.pattern.permute.xlu0 0
          %3611 = vperm.xlu0 %3610, %v3608
          %v3612 = vpop.permute.xlu0 %3611
          %v3614 = vsub.f32 %v3606, %v3612
          %v3615 = vsub.f32 %v3607, %v3612
          %v3616 = vmul.f32 %v3614, 1.442695
          %v3617 = vpow.pop %v3616
          %v3618 = vmul.f32 %v3615, 1.442695
          %v3619 = vpow.pop %v3618
          %v3620 = vmul.f32 %v3617, %v3600
          %v3621 = vmul.f32 %v3619, %v3600
          %3622 = vst [vmem:[%s523] sm:$0xff] %v3620
          %3623 = vst [vmem:[%s523 + $0x8] sm:$0xff] %v3621
        $region76: #{tpu_custom_call.1} parent=43 // pred_fallthru
          _
        %s3624 = sand.u32 %s217, 1
        %s3625 = scalar_lea.sflag [#allocation9], %s3624
        %s3626 = sand.u32 %s217, 1
        %s3627 = smul.addr %s3626, 16
        %s3628 = scalar_lea.vmem [#allocation18], %s3627
        %s3629 = sand.u32 %s243, 1
        %s3630 = scalar_lea.sflag [#allocation20], %s3629
        %s3631 = sand.u32 %s243, 1
        %s3632 = smul.addr %s3631, 16
        %s3633 = scalar_lea.vmem [#allocation19], %s3632
        // Predicated region
        $region77: #{tpu_custom_call.1} parent=43 // pred_check
          %p3634 = pneg %p227
        $region78: #{tpu_custom_call.1} parent=43 // pred_check_branch
          %3636 = sbr.rel (%p3634) target = $region80
        $region79: #{tpu_custom_call.1} parent=43 // pred_region
          %3638 = vsyncadd %s3625, 0
          %s3639 = smul.addr %s48, 2
          %s3640 = smul.addr %s3639, 8
          %s3641 = scalar_lea.hbm %s7, %s3640
          %s3643 = sshll.u32 %s3628, 4
          %s3644 = int_to_ptr.vmem [resolvable:$true] %s3643
          %s3645 = sshll.u32 %s3641, 4
          %s3646 = int_to_ptr.hbm [resolvable:$true] %s3645
          %3648 = dma.vmem_to_hbm [thread:$0]  %s3644, 256, %s3646, %s3625
        $region80: #{tpu_custom_call.1} parent=43 // pred_fallthru
          _
        // Predicated region
        $region81: #{tpu_custom_call.1} parent=43 // pred_check
          %p3649 = pneg %p253
        $region82: #{tpu_custom_call.1} parent=43 // pred_check_branch
          %3651 = sbr.rel (%p3649) target = $region84
        $region83: #{tpu_custom_call.1} parent=43 // pred_region
          %3653 = vsyncadd %s3630, 0
          %s3654 = smul.addr %s48, 2
          %s3655 = smul.addr %s3654, 8
          %s3656 = scalar_lea.hbm %s8, %s3655
          %s3658 = sshll.u32 %s3633, 4
          %s3659 = int_to_ptr.vmem [resolvable:$true] %s3658
          %s3660 = sshll.u32 %s3656, 4
          %s3661 = int_to_ptr.hbm [resolvable:$true] %s3660
          %3663 = dma.vmem_to_hbm [thread:$0]  %s3659, 256, %s3661, %s3630
        $region84: #{tpu_custom_call.1} parent=43 // pred_fallthru
          _
      $region44: #{tpu_custom_call.1} parent=5 // pred_fallthru
        _
      %p3664 = scmp.le.s32.totalorder 2, %s39
      // Predicated region
      $region85: #{tpu_custom_call.1} parent=5 // pred_check
        %p3665 = pneg %p3664
      $region86: #{tpu_custom_call.1} parent=5 // pred_check_branch
        %3667 = sbr.rel (%p3665) target = $region88
      $region87: #{tpu_custom_call.1} parent=5 // pred_region
        %s3668 = ssub.s32 %s39, 2
        // Predicated region
        $region89: #{tpu_custom_call.1} parent=87 // pred_check
          %p3669 = pneg %p233
        $region90: #{tpu_custom_call.1} parent=87 // pred_check_branch
          %3671 = sbr.rel (%p3669) target = $region92
        $region91: #{tpu_custom_call.1} parent=87 // pred_region
          %s3672 = sand.u32 %s218, 1
          %s3673 = scalar_lea.sflag [#allocation9], %s3672
          %s3674 = sand.u32 %s218, 1
          %s3675 = smul.addr %s3674, 16
          %s3676 = scalar_lea.vmem [#allocation18], %s3675
          %3678 = dma.done %s3673, 256
        $region92: #{tpu_custom_call.1} parent=87 // pred_fallthru
          _
        // Predicated region
        $region93: #{tpu_custom_call.1} parent=87 // pred_check
          %p3679 = pneg %p259
        $region94: #{tpu_custom_call.1} parent=87 // pred_check_branch
          %3681 = sbr.rel (%p3679) target = $region96
        $region95: #{tpu_custom_call.1} parent=87 // pred_region
          %s3682 = sand.u32 %s244, 1
          %s3683 = scalar_lea.sflag [#allocation20], %s3682
          %s3684 = sand.u32 %s244, 1
          %s3685 = smul.addr %s3684, 16
          %s3686 = scalar_lea.vmem [#allocation19], %s3685
          %3688 = dma.done %s3683, 256
        $region96: #{tpu_custom_call.1} parent=87 // pred_fallthru
          _
      $region88: #{tpu_custom_call.1} parent=5 // pred_fallthru
        _
    $region6: #{tpu_custom_call.1} parent=1 // loop_footer
      %s43 = sadd.s32 1, %s39
    $region7: #{tpu_custom_call.1} parent=1 // loop_footer_branch
      %38 = sbr.rel target = $region3
    $region8: #{tpu_custom_call.1} parent=1 // loop_exit
      _
    %3689 = vsyncpa [#allocation8], 1
    %s3690 = scalar_lea.sflag [#allocation8], 1
    %3691 = vsyncpa %s3690, 1
    %3692 = vsyncpa [#allocation11], 1
    %s3693 = scalar_lea.sflag [#allocation11], 1
    %3694 = vsyncpa %s3693, 1
    %3695 = vsyncpa [#allocation14], 1
    %s3696 = scalar_lea.sflag [#allocation14], 1
    %3697 = vsyncpa %s3696, 1
    %3698 = vsyncpa [#allocation17], 1
    %s3699 = scalar_lea.sflag [#allocation17], 1
    %3700 = vsyncpa %s3699, 1
    %3701 = vsyncpa [#allocation9], 1
    %s3702 = scalar_lea.sflag [#allocation9], 1
    %3703 = vsyncpa %s3702, 1
    %3704 = vsyncpa [#allocation20], 1
    %s3705 = scalar_lea.sflag [#allocation20], 1
    %3706 = vsyncpa %s3705, 1

</llo_original>
